<compile_context>
chip_gen: v5e
topology: v5e:2x2
jax: 0.10.0
libtpu: 0.0.40
codegen_flags: <defaults>
</compile_context>

<pallas_src>
import functools

import jax
import jax.numpy as jnp
from jax.experimental import pallas as pl
from jax.experimental.pallas import tpu as pltpu


def _round_up(x, m):
    return ((x + m - 1) // m) * m


def _default_vmem_limit_bytes():
    # Re-derive the scoped-VMEM budget per generation (v5e/v6e: 128 MiB physical,
    # v7x: 64 MiB) instead of a fixed constant; tiles below use far less.
    try:
        cap = pltpu.get_tpu_info().vmem_capacity_bytes
    except Exception:
        cap = 64 * 1024 * 1024
    return int(cap * 3 // 4)


def _device_kind():
    try:
        return jax.devices()[0].device_kind.lower()
    except Exception:
        return ""


_VMEM_LIMIT = _default_vmem_limit_bytes()
_IS_V5 = "v5" in _device_kind()  # v5e: 128-wide MXU -> keep VPU/XLU degree row-sum path

# Sublane alignment for packed dtypes (int8 packs 4 rows, bf16 2 rows per 32-bit sublane).
_SUBLANE_ALIGN = {jnp.dtype(jnp.int8): 32,
                  jnp.dtype(jnp.bfloat16): 16,
                  jnp.dtype(jnp.float32): 8}


# ----------------------------------------------------------------------------
# Kernel 1: o = (A @ X) / clamp(rowsum(A), 1), tiled over (rows, contraction).
# Used for: graph aggregation (rowsum == in-degree), per-label means, per-group means.
# A may arrive int8/bf16/f32; it is upcast to f32 in-kernel so the math stays exact f32.
# ----------------------------------------------------------------------------
def _make_rowsum_kernel(fp, fold_degree):
    if fold_degree:
        # Degree folded into the MXU: X carries an extra 128-lane ones block, so
        # column `fp` of the accumulator is the exact row-sum of A (v6e/v7x path).
        def kernel(a_ref, x_ref, o_ref, acc_ref):
            k = pl.program_id(1)

            @pl.when(k == 0)
            def _():
                acc_ref[...] = jnp.zeros_like(acc_ref)

            a = a_ref[...].astype(jnp.float32)      # int8 {0,1} -> f32 (hidden under DMA)
            acc_ref[...] += jnp.dot(a, x_ref[...], preferred_element_type=jnp.float32)

            @pl.when(k == pl.num_programs(1) - 1)
            def _():
                deg = jnp.maximum(acc_ref[:, fp:fp + 1], 1.0)
                o_ref[...] = acc_ref[:, :fp] / deg   # exact divide (no approx reciprocal)

        return kernel

    def kernel(a_ref, x_ref, o_ref, acc_ref, deg_ref):
        k = pl.program_id(1)

        @pl.when(k == 0)
        def _():
            acc_ref[...] = jnp.zeros_like(acc_ref)
            deg_ref[...] = jnp.zeros_like(deg_ref)

        a = a_ref[...].astype(jnp.float32)
        acc_ref[...] += jnp.dot(a, x_ref[...], preferred_element_type=jnp.float32)
        deg_ref[...] += jnp.sum(a, axis=1, keepdims=True)   # hidden under HBM on v5e

        @pl.when(k == pl.num_programs(1) - 1)
        def _():
            o_ref[...] = acc_ref[...] / jnp.maximum(deg_ref[...], 1.0)

    return kernel


def rowsum_norm_matmul(a, x, *, out_rows=None, tm=512, tk=2048, fold_degree=None):
    """a: (M, K) any of {int8,bf16,f32}; x: (Nx<=K, Fp) with Fp multiple of 128.

    Returns (out_rows, Fp) f32 = (A @ X) / clamp(rowsum(A), 1).
    If A is already padded to multiples of the tile sizes (see prepare_adjacency),
    it is streamed with NO wrapper-side copy.
    """
    if fold_degree is None:
        fold_degree = not _IS_V5
    m, k = a.shape
    nx, fp = x.shape
    assert fp % 128 == 0 and nx <= k

    align = _SUBLANE_ALIGN.get(jnp.dtype(a.dtype), 8)
    tm = min(tm, _round_up(m, align))
    tk = min(tk, _round_up(k, 128))
    mp = _round_up(m, tm)
    kp = _round_up(k, tk)
    if (mp, kp) != (m, k):
        # Only the tiny one-hot mask matrices hit this path; the big adjacency is
        # pre-padded once at setup.
        a = jnp.zeros((mp, kp), a.dtype).at[:m, :k].set(a)

    fp_ext = fp + 128 if fold_degree else fp
    x_p = jnp.zeros((kp, fp_ext), jnp.float32).at[:nx, :fp].set(x.astype(jnp.float32))
    if fold_degree:
        x_p = x_p.at[:, fp].set(1.0)   # ones column -> row-sum via the MXU

    scratch = [pltpu.VMEM((tm, fp_ext), jnp.float32)]
    if not fold_degree:
        scratch.append(pltpu.VMEM((tm, 1), jnp.float32))

    out = pl.pallas_call(
        _make_rowsum_kernel(fp, fold_degree),
        out_shape=jax.ShapeDtypeStruct((mp, fp), jnp.float32),
        grid=(mp // tm, kp // tk),
        in_specs=[pl.BlockSpec((tm, tk), lambda i, kk: (i, kk)),
                  pl.BlockSpec((tk, fp_ext), lambda i, kk: (kk, 0))],
        out_specs=pl.BlockSpec((tm, fp), lambda i, kk: (i, 0)),
        scratch_shapes=scratch,
        compiler_params=pltpu.CompilerParams(
            dimension_semantics=("parallel", "arbitrary"),
            vmem_limit_bytes=_VMEM_LIMIT),
    )(a, x_p)
    if out_rows is None:
        out_rows = m
    return out[:out_rows]


def prepare_adjacency(adj, *, tm=512, tk=2048):
    """Pad + cast the static dense adjacency ONCE at setup.

    {0,1} is exact in int8 (1 B/elem HBM stream); padding matches the aggregation
    tile sizes so the forward pass streams it with no per-call copy.
    """
    n_dst, n_src = adj.shape
    align = _SUBLANE_ALIGN[jnp.dtype(jnp.int8)]
    tm_eff = min(tm, _round_up(n_dst, align))
    tk_eff = min(tk, _round_up(n_src, 128))
    mp = _round_up(n_dst, tm_eff)
    kp = _round_up(n_src, tk_eff)
    return jnp.zeros((mp, kp), jnp.int8).at[:n_dst, :n_src].set(adj.astype(jnp.int8))


# ----------------------------------------------------------------------------
# Kernel 2: per-label covariance with centering + label-mask fused in-kernel.
#   cov[y] = sum_u w[y,u] * (x[u]-mu[y]) (x[u]-mu[y])^T * invn[y]
# Single node-tile reduction grid: prev_x streams from HBM exactly once; all Y
# (Fp,Fp) Gram accumulators live in the resident f32 output block (no scratch).
# ----------------------------------------------------------------------------
def _make_per_label_cov_kernel(num_labels):
    def kernel(x_ref, w_ref, mu_ref, invn_ref, o_ref):
        k = pl.program_id(0)

        @pl.when(k == 0)
        def _():
            o_ref[...] = jnp.zeros_like(o_ref)

        x = x_ref[...]
        # num_labels is small static module config -> unrolled; each label is one
        # (Fp x tk)@(tk x Fp) MXU contraction over the shared x tile.
        for y in range(num_labels):
            c = (x - mu_ref[y]) * w_ref[y]          # centered + masked (tk, Fp)
            o_ref[y] += jax.lax.dot_general(
                c, c, (((0,), (0,)), ((), ())), preferred_element_type=jnp.float32)

        @pl.when(k == pl.num_programs(0) - 1)
        def _():
            o_ref[...] = o_ref[...] * invn_ref[...]

    return kernel


def per_label_cov(x, w, mu, invn, *, tk=1024):
    """x: (N, Fp); w: (Y, N) {0,1}; mu: (Y, Fp); invn: (Y,). Returns (Y, Fp, Fp) f32."""
    n, fp = x.shape
    y = w.shape[0]
    tk = min(tk, _round_up(n, 8))
    np_ = _round_up(n, tk)

    x_p = jnp.zeros((np_, fp), jnp.float32).at[:n].set(x.astype(jnp.float32))
    w_p = jnp.zeros((y, np_, 1), jnp.float32).at[:, :n, 0].set(w.astype(jnp.float32))
    mu_r = mu.reshape(y, 1, fp).astype(jnp.float32)
    invn_r = invn.reshape(y, 1, 1).astype(jnp.float32)

    return pl.pallas_call(
        _make_per_label_cov_kernel(y),
        out_shape=jax.ShapeDtypeStruct((y, fp, fp), jnp.float32),
        grid=(np_ // tk,),
        in_specs=[pl.BlockSpec((tk, fp), lambda k: (k, 0)),
                  pl.BlockSpec((y, tk, 1), lambda k: (0, k, 0)),
                  pl.BlockSpec((y, 1, fp), lambda k: (0, 0, 0)),
                  pl.BlockSpec((y, 1, 1), lambda k: (0, 0, 0))],
        out_specs=pl.BlockSpec((y, fp, fp), lambda k: (0, 0, 0)),
        compiler_params=pltpu.CompilerParams(
            # single reduction axis (resident accumulator) -> "arbitrary"
            dimension_semantics=("arbitrary",),
            vmem_limit_bytes=_VMEM_LIMIT),
    )(x_p, w_p, mu_r, invn_r)


# ----------------------------------------------------------------------------
# Kernel 3: per-(label,time)-group PNY transform on the MXU.
#   out[u] = x[u] + sum_g mask[g,u] * ( (x[u]-mu[g]) @ M[g]^T + mu[g] - x[u] )
# Masks are disjoint (one group per train node), so out == transformed for train
# nodes and == x for everything else. Grid = (row-tiles,); the (G,Fp,Fp) transforms
# and (G,Fp) means stay VMEM-resident (constant block index -> fetched from HBM once).
# ----------------------------------------------------------------------------
def _make_pny_group_apply_kernel(num_groups):
    def kernel(x_ref, mt_ref, mu_ref, mask_ref, o_ref):
        x = x_ref[...]
        acc = x
        # num_groups = split*num_label is small static module config -> unrolled.
        # TODO(synk): for F<=128 two groups' M^T could be packed side-by-side to fill
        # the 256-wide MXU on v6e/v7x; kept simple here.
        for g in range(num_groups):
            mu = mu_ref[g]                                   # (1, Fp)
            t = jnp.dot(x - mu, mt_ref[g], preferred_element_type=jnp.float32) + mu
            acc = acc + mask_ref[g] * (t - x)
        o_ref[...] = acc

    return kernel


def pny_group_apply(x, m_t, mu, mask, *, tm=512):
    """x: (N, Fp); m_t: (G, Fp, Fp) pre-transposed; mu: (G, Fp); mask: (G, N). -> (N, Fp)."""
    n, fp = x.shape
    g = m_t.shape[0]
    tm = min(tm, _round_up(n, 8))
    np_ = _round_up(n, tm)

    x_p = jnp.zeros((np_, fp), jnp.float32).at[:n].set(x.astype(jnp.float32))
    mask_p = jnp.zeros((g, np_, 1), jnp.float32).at[:, :n, 0].set(mask.astype(jnp.float32))
    mu_r = mu.reshape(g, 1, fp).astype(jnp.float32)

    out = pl.pallas_call(
        _make_pny_group_apply_kernel(g),
        out_shape=jax.ShapeDtypeStruct((np_, fp), jnp.float32),
        grid=(np_ // tm,),
        in_specs=[pl.BlockSpec((tm, fp), lambda i: (i, 0)),
                  pl.BlockSpec((g, fp, fp), lambda i: (0, 0, 0)),   # resident transforms
                  pl.BlockSpec((g, 1, fp), lambda i: (0, 0, 0)),    # resident means
                  pl.BlockSpec((g, tm, 1), lambda i: (0, i, 0))],
        out_specs=pl.BlockSpec((tm, fp), lambda i: (i, 0)),
        compiler_params=pltpu.CompilerParams(
            dimension_semantics=("parallel",),
            vmem_limit_bytes=_VMEM_LIMIT),
    )(x_p, m_t.astype(jnp.float32), mu_r, mask_p)
    return out[:n]


# ----------------------------------------------------------------------------
# Kernel 4: linear layer, tiled over rows; W and bias stay resident in VMEM.
# Kept in f32 (tiny vs the aggregation) to match the f32 torch reference exactly.
# ----------------------------------------------------------------------------
def _linear_kernel(x_ref, w_ref, b_ref, o_ref):
    o_ref[...] = jnp.dot(x_ref[...], w_ref[...],
                         preferred_element_type=jnp.float32) + b_ref[...]


def linear(x, w, b, *, tm=512):
    """x: (N, Fp_in); w: (Fp_in, Fp_out); b: (Fp_out,). All lane-padded. Returns (N, Fp_out)."""
    n, f_in = x.shape
    f_in2, f_out = w.shape
    assert f_in == f_in2 and f_in % 128 == 0 and f_out % 128 == 0
    tm = min(tm, _round_up(n, 8))
    np_ = _round_up(n, tm)

    x_p = jnp.zeros((np_, f_in), jnp.float32).at[:n].set(x.astype(jnp.float32))
    b2 = b.reshape(1, f_out).astype(jnp.float32)

    out = pl.pallas_call(
        _linear_kernel,
        out_shape=jax.ShapeDtypeStruct((np_, f_out), jnp.float32),
        grid=(np_ // tm,),
        in_specs=[pl.BlockSpec((tm, f_in), lambda i: (i, 0)),
                  pl.BlockSpec((f_in, f_out), lambda i: (0, 0)),
                  pl.BlockSpec((1, f_out), lambda i: (0, 0))],
        out_specs=pl.BlockSpec((tm, f_out), lambda i: (i, 0)),
        compiler_params=pltpu.CompilerParams(
            dimension_semantics=("parallel",),
            vmem_limit_bytes=_VMEM_LIMIT),
    )(x_p, w.astype(jnp.float32), b2)
    return out[:n]


# ----------------------------------------------------------------------------
# PNY normalization (hot matmuls in Pallas; eigh + small coefficient algebra in XLA)
# ----------------------------------------------------------------------------
def pny_norm(prev_x, x, labels, times, num_time, num_label, split, P, f_true):
    n, fp = x.shape
    y_, t_ = num_label, num_time

    # --- per-label covariance of prev_x (torch.cov, correction=1), two-pass centered ---
    lab_onehot = (labels[None, :] == jnp.arange(y_)[:, None]).astype(jnp.float32)   # (Y, N)
    n_y = jnp.sum(lab_onehot, axis=1)                                               # (Y,)
    mean_y = rowsum_norm_matmul(lab_onehot, prev_x)                                 # (Y, Fp)
    invn = 1.0 / jnp.maximum(n_y - 1.0, 1.0)                                        # guard n_y<=1
    prev_cov = per_label_cov(prev_x, lab_onehot, mean_y, invn)[:, :f_true, :f_true] # (Y, F, F)

    # --- current_cov: P-weighted combination of per-label covariances (vectorized) ---
    t1 = jnp.arange(t_)[:, None]
    t2 = jnp.arange(t_)[None, :]
    far = jnp.abs(t2 - t1) > jnp.minimum(t_ - 1 - t1, t1)
    f2 = jnp.where(far, 2.0, 1.0)
    f4 = jnp.where(far, 4.0, 1.0)
    Pf = P.astype(jnp.float32)
    denom = jnp.einsum('atbs,ts->at', Pf, f2) ** 2                                  # (Y, T)
    temp = jnp.einsum('atbs,ts->atb', Pf, f4)                                       # (Y, T, Y)
    coef = temp / denom[:, :, None]
    current_cov = jnp.einsum('atb,bij->atij', coef, prev_cov)                       # (Y, T, F, F)

    # --- cov transform matrices via one batched eigendecomposition ---
    # TODO(synk): torch.linalg.eigh has no Pallas equivalent; batched jnp.linalg.eigh (XLA).
    eps = 1e-6
    L_all, Q_all = jnp.linalg.eigh(current_cov)                                     # (Y,T,F),(Y,T,F,F)
    L_max = L_all[:, t_ - 1]                                                        # (Y, F)
    Q_max = Q_all[:, t_ - 1]                                                        # (Y, F, F)
    a_max = Q_max * jnp.sqrt(jnp.maximum(L_max, 0.0))[:, None, :]                   # Qmax diag(sqrt Lmax)
    b_all = Q_all * (1.0 / jnp.sqrt(jnp.maximum(L_all, eps)))[:, :, None, :]        # Q diag(1/sqrt L)
    m_all = jnp.einsum('yif,ytjf->ytij', a_max, b_all)                              # (Y, T, F, F)

    # --- per-(time<split, label) group means of x and group masks ---
    g = split * y_
    t_idx = jnp.arange(g) // y_
    y_idx = jnp.arange(g) % y_
    grp_onehot = ((times[None, :] == t_idx[:, None]) &
                  (labels[None, :] == y_idx[:, None])).astype(jnp.float32)          # (G, N)
    mu_g = rowsum_norm_matmul(grp_onehot, x)                                        # (G, Fp)

    # --- per-group transforms (transposed for row-vector form), lane-padded ---
    m_g = m_all[y_idx, t_idx]                                                       # (G, F, F)
    m_g_t = jnp.swapaxes(m_g, 1, 2)
    m_g_t_p = jnp.zeros((g, fp, fp), jnp.float32).at[:, :f_true, :f_true].set(m_g_t)

    # out[u] = M[y,t] @ (x[u]-mu) + mu for train nodes of group (y,t); x[u] otherwise
    return pny_group_apply(x, m_g_t_p, mu_g, grp_onehot)


# ----------------------------------------------------------------------------
# GraphConv_PNY forward (norm='right', weight=True, bias=True, activation=None)
# ----------------------------------------------------------------------------
@functools.partial(jax.jit, static_argnames=("num_time", "num_label", "split"))
def graphconv_pny_forward(adj_prepared, feat, labels, times, *, num_time, num_label,
                          split, P, weight, bias):
    n, f_in = feat.shape
    f_out = weight.shape[1]
    fp_in = _round_up(f_in, 128)
    fp_out = _round_up(f_out, 128)

    # Adjacency should be prepared once at setup (see prepare_adjacency); fall back
    # to preparing here if a raw float adjacency was passed.
    if adj_prepared.dtype != jnp.int8:
        adj_prepared = prepare_adjacency(adj_prepared)

    # lane-pad features once; padded lanes stay zero through the whole pipeline
    feat_p = jnp.zeros((n, fp_in), jnp.float32).at[:, :f_in].set(feat.astype(jnp.float32))
    prev_x = feat_p

    # aggregation: copy_u + sum, right-normalized by clamped in-degree (exact f32 math,
    # A streamed as int8 and upcast in-kernel).
    rst = rowsum_norm_matmul(adj_prepared, feat_p, out_rows=n)

    # PNY covariance normalization
    rst = pny_norm(prev_x, rst, labels, times, num_time, num_label, split, P, f_in)

    # rst @ W + b (weights lane-padded with zeros; padded columns stripped at the end)
    w_p = jnp.zeros((fp_in, fp_out), jnp.float32).at[:f_in, :f_out].set(weight.astype(jnp.float32))
    b_p = jnp.zeros((fp_out,), jnp.float32).at[:f_out].set(bias.astype(jnp.float32))
    out = linear(rst, w_p, b_p)
    return out[:, :f_out]


if __name__ == "__main__":
    key = jax.random.PRNGKey(0)
    N, F_IN, F_OUT = 32, 8, 16
    Y, T, SPLIT = 2, 4, 2

    k_feat, k_adj, k_p, k_w = jax.random.split(key, 4)

    feat = jax.random.normal(k_feat, (N, F_IN), dtype=jnp.float32)

    # dense adjacency A[dst, src]; self-loops so there are no 0-in-degree nodes
    adj = (jax.random.uniform(k_adj, (N, N)) < 0.25).astype(jnp.float32)
    adj = jnp.maximum(adj, jnp.eye(N, dtype=jnp.float32))
    assert bool(jnp.all(jnp.sum(adj, axis=1) > 0))   # DGL would raise otherwise

    # module config (set at __init__): labels, times, relative connectivity P
    labels = jnp.arange(N, dtype=jnp.int32) % Y
    times = (jnp.arange(N, dtype=jnp.int32) // Y) % T
    P = jax.random.uniform(k_p, (Y, T, Y, T), minval=0.1, maxval=1.0, dtype=jnp.float32)

    # parameters: xavier_uniform weight (in_feats, out_feats), zero bias
    bound = (6.0 / (F_IN + F_OUT)) ** 0.5
    W = jax.random.uniform(k_w, (F_IN, F_OUT), minval=-bound, maxval=bound,
                           dtype=jnp.float32)
    b = jnp.zeros((F_OUT,), dtype=jnp.float32)

    # setup-time adjacency preparation (done once; static across forward calls)
    adj_prep = prepare_adjacency(adj)

    out = graphconv_pny_forward(adj_prep, feat, labels, times,
                                num_time=T, num_label=Y, split=SPLIT,
                                P=P, weight=W, bias=b)
    out = jax.block_until_ready(out)

    assert out.shape == (N, F_OUT)
    assert bool(jnp.all(jnp.isfinite(out)))
    print("KERNEL_OK")
</pallas_src>

<mosaic_0001>
module attributes {stable_mosaic.version = 11 : i64} {
  func.func @kernel(%arg0: i32, %arg1: i32, %arg2: memref<8x128xf32, #tpu.memory_space<vmem>>, %arg3: memref<128x256xf32, #tpu.memory_space<vmem>>, %arg4: memref<8x128xf32, #tpu.memory_space<vmem>>, %arg5: memref<8x256xf32, #tpu.memory_space<vmem>>) attributes {dimension_semantics = [#tpu.dimension_semantics<parallel>, #tpu.dimension_semantics<arbitrary>], iteration_bounds = array<i64: 1, 1>, scalar_prefetch = 0 : i64, scratch_operands = 1 : i64, tpu.core_type = #tpu.core_type<tc>, window_params = [{transform_indices = @transform_0, window_bounds = array<i64: 8, 128>}, {transform_indices = @transform_1, window_bounds = array<i64: 128, 256>}, {transform_indices = @transform_2, window_bounds = array<i64: 8, 128>}]} {
    %c0_i32 = arith.constant 0 : i32
    %0 = arith.cmpi eq, %arg1, %c0_i32 : i32
    %1 = arith.extui %0 : i1 to i32
    %c0_i32_0 = arith.constant 0 : i32
    %2 = arith.cmpi ne, %1, %c0_i32_0 : i32
    scf.if %2 {
      %cst_10 = arith.constant 0.000000e+00 : f32
      %12 = vector.broadcast %cst_10 : f32 to vector<8x256xf32>
      %c0_11 = arith.constant 0 : index
      %c0_12 = arith.constant 0 : index
      %13 = vector.load %arg5[%c0_11, %c0_12] : memref<8x256xf32, #tpu.memory_space<vmem>>, vector<8x256xf32>
      tpu.vector_store %arg5[%c0_11, %c0_12], %12 {strides = array<i32>} : memref<8x256xf32, #tpu.memory_space<vmem>>, vector<8x256xf32>,
    } else {
    }
    %c0 = arith.constant 0 : index
    %c0_1 = arith.constant 0 : index
    %3 = vector.load %arg2[%c0, %c0_1] : memref<8x128xf32, #tpu.memory_space<vmem>>, vector<8x128xf32>
    %c0_2 = arith.constant 0 : index
    %c0_3 = arith.constant 0 : index
    %4 = vector.load %arg5[%c0_2, %c0_3] : memref<8x256xf32, #tpu.memory_space<vmem>>, vector<8x256xf32>
    %c0_4 = arith.constant 0 : index
    %c0_5 = arith.constant 0 : index
    %5 = vector.load %arg3[%c0_4, %c0_5] : memref<128x256xf32, #tpu.memory_space<vmem>>, vector<128x256xf32>
    %cst = arith.constant dense<0.000000e+00> : vector<8x256xf32>
    %6 = tpu.matmul %3, %5, %cst {dimension_numbers = #tpu.dot_dimension_numbers<[1], [0], [0], [1], [0, 0, 1, 1], [], []>} : vector<8x128xf32>, vector<128x256xf32>, vector<8x256xf32> -> vector<8x256xf32>
    %7 = arith.addf %4, %6 : vector<8x256xf32>
    %c0_6 = arith.constant 0 : index
    %c0_7 = arith.constant 0 : index
    %8 = vector.load %arg5[%c0_6, %c0_7] : memref<8x256xf32, #tpu.memory_space<vmem>>, vector<8x256xf32>
    tpu.vector_store %arg5[%c0_6, %c0_7], %7 {strides = array<i32>} : memref<8x256xf32, #tpu.memory_space<vmem>>, vector<8x256xf32>,
    %c0_i32_8 = arith.constant 0 : i32
    %9 = arith.cmpi eq, %arg1, %c0_i32_8 : i32
    %10 = arith.extui %9 : i1 to i32
    %c0_i32_9 = arith.constant 0 : i32
    %11 = arith.cmpi ne, %10, %c0_i32_9 : i32
    scf.if %11 {
      %c0_10 = arith.constant 0 : index
      %c128 = arith.constant 128 : index
      %12 = vector.load %arg5[%c0_10, %c128] : memref<8x256xf32, #tpu.memory_space<vmem>>, vector<8x1xf32>
      %cst_11 = arith.constant 1.000000e+00 : f32
      %13 = vector.broadcast %cst_11 : f32 to vector<8x1xf32>
      %14 = arith.maximumf %12, %13 : vector<8x1xf32>
      %c0_12 = arith.constant 0 : index
      %c0_13 = arith.constant 0 : index
      %15 = vector.load %arg5[%c0_12, %c0_13] : memref<8x256xf32, #tpu.memory_space<vmem>>, vector<8x128xf32>
      %16 = vector.broadcast %14 : vector<8x1xf32> to vector<8x128xf32>
      %17 = arith.divf %15, %16 : vector<8x128xf32>
      %c0_14 = arith.constant 0 : index
      %c0_15 = arith.constant 0 : index
      %18 = vector.load %arg4[%c0_14, %c0_15] : memref<8x128xf32, #tpu.memory_space<vmem>>, vector<8x128xf32>
      tpu.vector_store %arg4[%c0_14, %c0_15], %17 {strides = array<i32>} : memref<8x128xf32, #tpu.memory_space<vmem>>, vector<8x128xf32>,
    } else {
    }
    return
  }
  func.func @transform_0(%arg0: i32, %arg1: i32) -> (i32, i32) {
    %c0_i32 = arith.constant 0 : i32
    return %arg0, %arg1 : i32, i32
  }
  func.func @transform_1(%arg0: i32, %arg1: i32) -> (i32, i32) {
    %c0_i32 = arith.constant 0 : i32
    %c0_i32_0 = arith.constant 0 : i32
    return %arg1, %c0_i32 : i32, i32
  }
  func.func @transform_2(%arg0: i32, %arg1: i32) -> (i32, i32) {
    %c0_i32 = arith.constant 0 : i32
    %c0_i32_0 = arith.constant 0 : i32
    return %arg0, %c0_i32 : i32, i32
  }
}

module attributes {stable_mosaic.version = 11 : i64} {
  func.func @kernel(%arg0: i32, %arg1: i32, %arg2: memref<32x128xi8, #tpu.memory_space<vmem>>, %arg3: memref<128x256xf32, #tpu.memory_space<vmem>>, %arg4: memref<32x128xf32, #tpu.memory_space<vmem>>, %arg5: memref<32x256xf32, #tpu.memory_space<vmem>>) attributes {dimension_semantics = [#tpu.dimension_semantics<parallel>, #tpu.dimension_semantics<arbitrary>], iteration_bounds = array<i64: 1, 1>, scalar_prefetch = 0 : i64, scratch_operands = 1 : i64, tpu.core_type = #tpu.core_type<tc>, window_params = [{transform_indices = @transform_0, window_bounds = array<i64: 32, 128>}, {transform_indices = @transform_1, window_bounds = array<i64: 128, 256>}, {transform_indices = @transform_2, window_bounds = array<i64: 32, 128>}]} {
    %c0_i32 = arith.constant 0 : i32
    %0 = arith.cmpi eq, %arg1, %c0_i32 : i32
    %1 = arith.extui %0 : i1 to i32
    %c0_i32_0 = arith.constant 0 : i32
    %2 = arith.cmpi ne, %1, %c0_i32_0 : i32
    scf.if %2 {
      %cst_10 = arith.constant 0.000000e+00 : f32
      %13 = vector.broadcast %cst_10 : f32 to vector<32x256xf32>
      %c0_11 = arith.constant 0 : index
      %c0_12 = arith.constant 0 : index
      %14 = vector.load %arg5[%c0_11, %c0_12] : memref<32x256xf32, #tpu.memory_space<vmem>>, vector<32x256xf32>
      tpu.vector_store %arg5[%c0_11, %c0_12], %13 {strides = array<i32>} : memref<32x256xf32, #tpu.memory_space<vmem>>, vector<32x256xf32>,
    } else {
    }
    %c0 = arith.constant 0 : index
    %c0_1 = arith.constant 0 : index
    %3 = vector.load %arg2[%c0, %c0_1] : memref<32x128xi8, #tpu.memory_space<vmem>>, vector<32x128xi8>
    %4 = arith.sitofp %3 : vector<32x128xi8> to vector<32x128xf32>
    %c0_2 = arith.constant 0 : index
    %c0_3 = arith.constant 0 : index
    %5 = vector.load %arg5[%c0_2, %c0_3] : memref<32x256xf32, #tpu.memory_space<vmem>>, vector<32x256xf32>
    %c0_4 = arith.constant 0 : index
    %c0_5 = arith.constant 0 : index
    %6 = vector.load %arg3[%c0_4, %c0_5] : memref<128x256xf32, #tpu.memory_space<vmem>>, vector<128x256xf32>
    %cst = arith.constant dense<0.000000e+00> : vector<32x256xf32>
    %7 = tpu.matmul %4, %6, %cst {dimension_numbers = #tpu.dot_dimension_numbers<[1], [0], [0], [1], [0, 0, 1, 1], [], []>} : vector<32x128xf32>, vector<128x256xf32>, vector<32x256xf32> -> vector<32x256xf32>
    %8 = arith.addf %5, %7 : vector<32x256xf32>
    %c0_6 = arith.constant 0 : index
    %c0_7 = arith.constant 0 : index
    %9 = vector.load %arg5[%c0_6, %c0_7] : memref<32x256xf32, #tpu.memory_space<vmem>>, vector<32x256xf32>
    tpu.vector_store %arg5[%c0_6, %c0_7], %8 {strides = array<i32>} : memref<32x256xf32, #tpu.memory_space<vmem>>, vector<32x256xf32>,
    %c0_i32_8 = arith.constant 0 : i32
    %10 = arith.cmpi eq, %arg1, %c0_i32_8 : i32
    %11 = arith.extui %10 : i1 to i32
    %c0_i32_9 = arith.constant 0 : i32
    %12 = arith.cmpi ne, %11, %c0_i32_9 : i32
    scf.if %12 {
      %c0_10 = arith.constant 0 : index
      %c128 = arith.constant 128 : index
      %13 = vector.load %arg5[%c0_10, %c128] : memref<32x256xf32, #tpu.memory_space<vmem>>, vector<32x1xf32>
      %cst_11 = arith.constant 1.000000e+00 : f32
      %14 = vector.broadcast %cst_11 : f32 to vector<32x1xf32>
      %15 = arith.maximumf %13, %14 : vector<32x1xf32>
      %c0_12 = arith.constant 0 : index
      %c0_13 = arith.constant 0 : index
      %16 = vector.load %arg5[%c0_12, %c0_13] : memref<32x256xf32, #tpu.memory_space<vmem>>, vector<32x128xf32>
      %17 = vector.broadcast %15 : vector<32x1xf32> to vector<32x128xf32>
      %18 = arith.divf %16, %17 : vector<32x128xf32>
      %c0_14 = arith.constant 0 : index
      %c0_15 = arith.constant 0 : index
      %19 = vector.load %arg4[%c0_14, %c0_15] : memref<32x128xf32, #tpu.memory_space<vmem>>, vector<32x128xf32>
      tpu.vector_store %arg4[%c0_14, %c0_15], %18 {strides = array<i32>} : memref<32x128xf32, #tpu.memory_space<vmem>>, vector<32x128xf32>,
    } else {
    }
    return
  }
  func.func @transform_0(%arg0: i32, %arg1: i32) -> (i32, i32) {
    %c0_i32 = arith.constant 0 : i32
    return %arg0, %arg1 : i32, i32
  }
  func.func @transform_1(%arg0: i32, %arg1: i32) -> (i32, i32) {
    %c0_i32 = arith.constant 0 : i32
    %c0_i32_0 = arith.constant 0 : i32
    return %arg1, %c0_i32 : i32, i32
  }
  func.func @transform_2(%arg0: i32, %arg1: i32) -> (i32, i32) {
    %c0_i32 = arith.constant 0 : i32
    %c0_i32_0 = arith.constant 0 : i32
    return %arg0, %c0_i32 : i32, i32
  }
}

module attributes {stable_mosaic.version = 11 : i64} {
  func.func @kernel(%arg0: i32, %arg1: memref<32x128xf32, #tpu.memory_space<vmem>>, %arg2: memref<2x32x1xf32, #tpu.memory_space<vmem>>, %arg3: memref<2x1x128xf32, #tpu.memory_space<vmem>>, %arg4: memref<2x1x1xf32, #tpu.memory_space<vmem>>, %arg5: memref<2x128x128xf32, #tpu.memory_space<vmem>>) attributes {dimension_semantics = [#tpu.dimension_semantics<arbitrary>], iteration_bounds = array<i64: 1>, scalar_prefetch = 0 : i64, scratch_operands = 0 : i64, tpu.core_type = #tpu.core_type<tc>, window_params = [{transform_indices = @transform_0, window_bounds = array<i64: 32, 128>}, {transform_indices = @transform_1, window_bounds = array<i64: 2, 32, 1>}, {pipeline_mode = #tpu.pipeline_mode<synchronous>, transform_indices = @transform_2, window_bounds = array<i64: 2, 1, 128>}, {pipeline_mode = #tpu.pipeline_mode<synchronous>, transform_indices = @transform_3, window_bounds = array<i64: 2, 1, 1>}, {pipeline_mode = #tpu.pipeline_mode<synchronous>, transform_indices = @transform_4, window_bounds = array<i64: 2, 128, 128>}]} {
    %c0_i32 = arith.constant 0 : i32
    %0 = arith.cmpi eq, %arg0, %c0_i32 : i32
    %1 = arith.extui %0 : i1 to i32
    %c0_i32_0 = arith.constant 0 : i32
    %2 = arith.cmpi ne, %1, %c0_i32_0 : i32
    scf.if %2 {
      %cst_28 = arith.constant 0.000000e+00 : f32
      %37 = vector.broadcast %cst_28 : f32 to vector<2x128x128xf32>
      %c0_29 = arith.constant 0 : index
      %c0_30 = arith.constant 0 : index
      %c0_31 = arith.constant 0 : index
      %38 = vector.load %arg5[%c0_29, %c0_30, %c0_31] : memref<2x128x128xf32, #tpu.memory_space<vmem>>, vector<2x128x128xf32>
      tpu.vector_store %arg5[%c0_29, %c0_30, %c0_31], %37 {strides = array<i32>} : memref<2x128x128xf32, #tpu.memory_space<vmem>>, vector<2x128x128xf32>,
    } else {
    }
    %c0 = arith.constant 0 : index
    %c0_1 = arith.constant 0 : index
    %3 = vector.load %arg1[%c0, %c0_1] : memref<32x128xf32, #tpu.memory_space<vmem>>, vector<32x128xf32>
    %c0_2 = arith.constant 0 : index
    %c0_3 = arith.constant 0 : index
    %c0_4 = arith.constant 0 : index
    %4 = vector.load %arg3[%c0_2, %c0_3, %c0_4] : memref<2x1x128xf32, #tpu.memory_space<vmem>>, vector<1x1x128xf32>
    %5 = vector.shape_cast %4 : vector<1x1x128xf32> to vector<1x128xf32>
    %6 = vector.broadcast %5 : vector<1x128xf32> to vector<32x128xf32>
    %7 = arith.subf %3, %6 : vector<32x128xf32>
    %c0_5 = arith.constant 0 : index
    %c0_6 = arith.constant 0 : index
    %c0_7 = arith.constant 0 : index
    %8 = vector.load %arg2[%c0_5, %c0_6, %c0_7] : memref<2x32x1xf32, #tpu.memory_space<vmem>>, vector<1x32x1xf32>
    %9 = vector.shape_cast %8 : vector<1x32x1xf32> to vector<32x1xf32>
    %10 = vector.broadcast %9 : vector<32x1xf32> to vector<32x128xf32>
    %11 = arith.mulf %7, %10 : vector<32x128xf32>
    %c0_8 = arith.constant 0 : index
    %c0_9 = arith.constant 0 : index
    %c0_10 = arith.constant 0 : index
    %12 = vector.load %arg5[%c0_8, %c0_9, %c0_10] : memref<2x128x128xf32, #tpu.memory_space<vmem>>, vector<1x128x128xf32>
    %13 = vector.shape_cast %12 : vector<1x128x128xf32> to vector<128x128xf32>
    %cst = arith.constant dense<0.000000e+00> : vector<128x128xf32>
    %14 = tpu.matmul %11, %11, %cst {dimension_numbers = #tpu.dot_dimension_numbers<[0], [0], [1], [1], [0, 1, 1, 1], [], []>} : vector<32x128xf32>, vector<32x128xf32>, vector<128x128xf32> -> vector<128x128xf32>
    %15 = arith.addf %13, %14 : vector<128x128xf32>
    %c0_11 = arith.constant 0 : index
    %c0_12 = arith.constant 0 : index
    %c0_13 = arith.constant 0 : index
    %16 = vector.load %arg5[%c0_11, %c0_12, %c0_13] : memref<2x128x128xf32, #tpu.memory_space<vmem>>, vector<1x128x128xf32>
    %17 = vector.shape_cast %16 : vector<1x128x128xf32> to vector<128x128xf32>
    %18 = vector.shape_cast %15 : vector<128x128xf32> to vector<1x128x128xf32>
    tpu.vector_store %arg5[%c0_11, %c0_12, %c0_13], %18 {strides = array<i32>} : memref<2x128x128xf32, #tpu.memory_space<vmem>>, vector<1x128x128xf32>,
    %c1 = arith.constant 1 : index
    %c0_14 = arith.constant 0 : index
    %c0_15 = arith.constant 0 : index
    %19 = vector.load %arg3[%c1, %c0_14, %c0_15] : memref<2x1x128xf32, #tpu.memory_space<vmem>>, vector<1x1x128xf32>
    %20 = vector.shape_cast %19 : vector<1x1x128xf32> to vector<1x128xf32>
    %21 = vector.broadcast %20 : vector<1x128xf32> to vector<32x128xf32>
    %22 = arith.subf %3, %21 : vector<32x128xf32>
    %c1_16 = arith.constant 1 : index
    %c0_17 = arith.constant 0 : index
    %c0_18 = arith.constant 0 : index
    %23 = vector.load %arg2[%c1_16, %c0_17, %c0_18] : memref<2x32x1xf32, #tpu.memory_space<vmem>>, vector<1x32x1xf32>
    %24 = vector.shape_cast %23 : vector<1x32x1xf32> to vector<32x1xf32>
    %25 = vector.broadcast %24 : vector<32x1xf32> to vector<32x128xf32>
    %26 = arith.mulf %22, %25 : vector<32x128xf32>
    %c1_19 = arith.constant 1 : index
    %c0_20 = arith.constant 0 : index
    %c0_21 = arith.constant 0 : index
    %27 = vector.load %arg5[%c1_19, %c0_20, %c0_21] : memref<2x128x128xf32, #tpu.memory_space<vmem>>, vector<1x128x128xf32>
    %28 = vector.shape_cast %27 : vector<1x128x128xf32> to vector<128x128xf32>
    %cst_22 = arith.constant dense<0.000000e+00> : vector<128x128xf32>
    %29 = tpu.matmul %26, %26, %cst_22 {dimension_numbers = #tpu.dot_dimension_numbers<[0], [0], [1], [1], [0, 1, 1, 1], [], []>} : vector<32x128xf32>, vector<32x128xf32>, vector<128x128xf32> -> vector<128x128xf32>
    %30 = arith.addf %28, %29 : vector<128x128xf32>
    %c1_23 = arith.constant 1 : index
    %c0_24 = arith.constant 0 : index
    %c0_25 = arith.constant 0 : index
    %31 = vector.load %arg5[%c1_23, %c0_24, %c0_25] : memref<2x128x128xf32, #tpu.memory_space<vmem>>, vector<1x128x128xf32>
    %32 = vector.shape_cast %31 : vector<1x128x128xf32> to vector<128x128xf32>
    %33 = vector.shape_cast %30 : vector<128x128xf32> to vector<1x128x128xf32>
    tpu.vector_store %arg5[%c1_23, %c0_24, %c0_25], %33 {strides = array<i32>} : memref<2x128x128xf32, #tpu.memory_space<vmem>>, vector<1x128x128xf32>,
    %c0_i32_26 = arith.constant 0 : i32
    %34 = arith.cmpi eq, %arg0, %c0_i32_26 : i32
    %35 = arith.extui %34 : i1 to i32
    %c0_i32_27 = arith.constant 0 : i32
    %36 = arith.cmpi ne, %35, %c0_i32_27 : i32
    scf.if %36 {
      %c0_28 = arith.constant 0 : index
      %c0_29 = arith.constant 0 : index
      %c0_30 = arith.constant 0 : index
      %37 = vector.load %arg5[%c0_28, %c0_29, %c0_30] : memref<2x128x128xf32, #tpu.memory_space<vmem>>, vector<2x128x128xf32>
      %c0_31 = arith.constant 0 : index
      %c0_32 = arith.constant 0 : index
      %c0_33 = arith.constant 0 : index
      %38 = vector.load %arg4[%c0_31, %c0_32, %c0_33] : memref<2x1x1xf32, #tpu.memory_space<vmem>>, vector<2x1x1xf32>
      %39 = vector.broadcast %38 : vector<2x1x1xf32> to vector<2x128x128xf32>
      %40 = arith.mulf %37, %39 : vector<2x128x128xf32>
      %c0_34 = arith.constant 0 : index
      %c0_35 = arith.constant 0 : index
      %c0_36 = arith.constant 0 : index
      %41 = vector.load %arg5[%c0_34, %c0_35, %c0_36] : memref<2x128x128xf32, #tpu.memory_space<vmem>>, vector<2x128x128xf32>
      tpu.vector_store %arg5[%c0_34, %c0_35, %c0_36], %40 {strides = array<i32>} : memref<2x128x128xf32, #tpu.memory_space<vmem>>, vector<2x128x128xf32>,
    } else {
    }
    return
  }
  func.func @transform_0(%arg0: i32) -> (i32, i32) {
    %c0_i32 = arith.constant 0 : i32
    %c0_i32_0 = arith.constant 0 : i32
    return %arg0, %c0_i32 : i32, i32
  }
  func.func @transform_1(%arg0: i32) -> (i32, i32, i32) {
    %c0_i32 = arith.constant 0 : i32
    %c0_i32_0 = arith.constant 0 : i32
    %c0_i32_1 = arith.constant 0 : i32
    return %c0_i32, %arg0, %c0_i32_0 : i32, i32, i32
  }
  func.func @transform_2(%arg0: i32) -> (i32, i32, i32) {
    %c0_i32 = arith.constant 0 : i32
    %c0_i32_0 = arith.constant 0 : i32
    %c0_i32_1 = arith.constant 0 : i32
    %c0_i32_2 = arith.constant 0 : i32
    return %c0_i32, %c0_i32_0, %c0_i32_1 : i32, i32, i32
  }
  func.func @transform_3(%arg0: i32) -> (i32, i32, i32) {
    %c0_i32 = arith.constant 0 : i32
    %c0_i32_0 = arith.constant 0 : i32
    %c0_i32_1 = arith.constant 0 : i32
    %c0_i32_2 = arith.constant 0 : i32
    return %c0_i32, %c0_i32_0, %c0_i32_1 : i32, i32, i32
  }
  func.func @transform_4(%arg0: i32) -> (i32, i32, i32) {
    %c0_i32 = arith.constant 0 : i32
    %c0_i32_0 = arith.constant 0 : i32
    %c0_i32_1 = arith.constant 0 : i32
    %c0_i32_2 = arith.constant 0 : i32
    return %c0_i32, %c0_i32_0, %c0_i32_1 : i32, i32, i32
  }
}

module attributes {stable_mosaic.version = 11 : i64} {
  func.func @_linear_kernel(%arg0: i32, %arg1: memref<32x128xf32, #tpu.memory_space<vmem>>, %arg2: memref<128x128xf32, #tpu.memory_space<vmem>>, %arg3: memref<1x128xf32, #tpu.memory_space<vmem>>, %arg4: memref<32x128xf32, #tpu.memory_space<vmem>>) attributes {dimension_semantics = [#tpu.dimension_semantics<parallel>], iteration_bounds = array<i64: 1>, scalar_prefetch = 0 : i64, scratch_operands = 0 : i64, tpu.core_type = #tpu.core_type<tc>, window_params = [{transform_indices = @transform_0, window_bounds = array<i64: 32, 128>}, {pipeline_mode = #tpu.pipeline_mode<synchronous>, transform_indices = @transform_1, window_bounds = array<i64: 128, 128>}, {pipeline_mode = #tpu.pipeline_mode<synchronous>, transform_indices = @transform_2, window_bounds = array<i64: 1, 128>}, {transform_indices = @transform_3, window_bounds = array<i64: 32, 128>}]} {
    %c0 = arith.constant 0 : index
    %c0_0 = arith.constant 0 : index
    %0 = vector.load %arg1[%c0, %c0_0] : memref<32x128xf32, #tpu.memory_space<vmem>>, vector<32x128xf32>
    %c0_1 = arith.constant 0 : index
    %c0_2 = arith.constant 0 : index
    %1 = vector.load %arg2[%c0_1, %c0_2] : memref<128x128xf32, #tpu.memory_space<vmem>>, vector<128x128xf32>
    %cst = arith.constant dense<0.000000e+00> : vector<32x128xf32>
    %2 = tpu.matmul %0, %1, %cst {dimension_numbers = #tpu.dot_dimension_numbers<[1], [0], [0], [1], [0, 0, 1, 1], [], []>} : vector<32x128xf32>, vector<128x128xf32>, vector<32x128xf32> -> vector<32x128xf32>
    %c0_3 = arith.constant 0 : index
    %c0_4 = arith.constant 0 : index
    %3 = vector.load %arg3[%c0_3, %c0_4] : memref<1x128xf32, #tpu.memory_space<vmem>>, vector<1x128xf32>
    %4 = vector.broadcast %3 : vector<1x128xf32> to vector<32x128xf32>
    %5 = arith.addf %2, %4 : vector<32x128xf32>
    %c0_5 = arith.constant 0 : index
    %c0_6 = arith.constant 0 : index
    %6 = vector.load %arg4[%c0_5, %c0_6] : memref<32x128xf32, #tpu.memory_space<vmem>>, vector<32x128xf32>
    tpu.vector_store %arg4[%c0_5, %c0_6], %5 {strides = array<i32>} : memref<32x128xf32, #tpu.memory_space<vmem>>, vector<32x128xf32>,
    return
  }
  func.func @transform_0(%arg0: i32) -> (i32, i32) {
    %c0_i32 = arith.constant 0 : i32
    %c0_i32_0 = arith.constant 0 : i32
    return %arg0, %c0_i32 : i32, i32
  }
  func.func @transform_1(%arg0: i32) -> (i32, i32) {
    %c0_i32 = arith.constant 0 : i32
    %c0_i32_0 = arith.constant 0 : i32
    %c0_i32_1 = arith.constant 0 : i32
    return %c0_i32, %c0_i32_0 : i32, i32
  }
  func.func @transform_2(%arg0: i32) -> (i32, i32) {
    %c0_i32 = arith.constant 0 : i32
    %c0_i32_0 = arith.constant 0 : i32
    %c0_i32_1 = arith.constant 0 : i32
    return %c0_i32, %c0_i32_0 : i32, i32
  }
  func.func @transform_3(%arg0: i32) -> (i32, i32) {
    %c0_i32 = arith.constant 0 : i32
    %c0_i32_0 = arith.constant 0 : i32
    return %arg0, %c0_i32 : i32, i32
  }
}

module attributes {stable_mosaic.version = 11 : i64} {
  func.func @kernel(%arg0: i32, %arg1: memref<32x128xf32, #tpu.memory_space<vmem>>, %arg2: memref<4x128x128xf32, #tpu.memory_space<vmem>>, %arg3: memref<4x1x128xf32, #tpu.memory_space<vmem>>, %arg4: memref<4x32x1xf32, #tpu.memory_space<vmem>>, %arg5: memref<32x128xf32, #tpu.memory_space<vmem>>) attributes {dimension_semantics = [#tpu.dimension_semantics<parallel>], iteration_bounds = array<i64: 1>, scalar_prefetch = 0 : i64, scratch_operands = 0 : i64, tpu.core_type = #tpu.core_type<tc>, window_params = [{transform_indices = @transform_0, window_bounds = array<i64: 32, 128>}, {pipeline_mode = #tpu.pipeline_mode<synchronous>, transform_indices = @transform_1, window_bounds = array<i64: 4, 128, 128>}, {pipeline_mode = #tpu.pipeline_mode<synchronous>, transform_indices = @transform_2, window_bounds = array<i64: 4, 1, 128>}, {transform_indices = @transform_3, window_bounds = array<i64: 4, 32, 1>}, {transform_indices = @transform_4, window_bounds = array<i64: 32, 128>}]} {
    %c0 = arith.constant 0 : index
    %c0_0 = arith.constant 0 : index
    %0 = vector.load %arg1[%c0, %c0_0] : memref<32x128xf32, #tpu.memory_space<vmem>>, vector<32x128xf32>
    %c0_1 = arith.constant 0 : index
    %c0_2 = arith.constant 0 : index
    %c0_3 = arith.constant 0 : index
    %1 = vector.load %arg3[%c0_1, %c0_2, %c0_3] : memref<4x1x128xf32, #tpu.memory_space<vmem>>, vector<1x1x128xf32>
    %2 = vector.shape_cast %1 : vector<1x1x128xf32> to vector<1x128xf32>
    %3 = vector.broadcast %2 : vector<1x128xf32> to vector<32x128xf32>
    %4 = arith.subf %0, %3 : vector<32x128xf32>
    %c0_4 = arith.constant 0 : index
    %c0_5 = arith.constant 0 : index
    %c0_6 = arith.constant 0 : index
    %5 = vector.load %arg2[%c0_4, %c0_5, %c0_6] : memref<4x128x128xf32, #tpu.memory_space<vmem>>, vector<1x128x128xf32>
    %6 = vector.shape_cast %5 : vector<1x128x128xf32> to vector<128x128xf32>
    %cst = arith.constant dense<0.000000e+00> : vector<32x128xf32>
    %7 = tpu.matmul %4, %6, %cst {dimension_numbers = #tpu.dot_dimension_numbers<[1], [0], [0], [1], [0, 0, 1, 1], [], []>} : vector<32x128xf32>, vector<128x128xf32>, vector<32x128xf32> -> vector<32x128xf32>
    %8 = vector.broadcast %2 : vector<1x128xf32> to vector<32x128xf32>
    %9 = arith.addf %7, %8 : vector<32x128xf32>
    %c0_7 = arith.constant 0 : index
    %c0_8 = arith.constant 0 : index
    %c0_9 = arith.constant 0 : index
    %10 = vector.load %arg4[%c0_7, %c0_8, %c0_9] : memref<4x32x1xf32, #tpu.memory_space<vmem>>, vector<1x32x1xf32>
    %11 = vector.shape_cast %10 : vector<1x32x1xf32> to vector<32x1xf32>
    %12 = arith.subf %9, %0 : vector<32x128xf32>
    %13 = vector.broadcast %11 : vector<32x1xf32> to vector<32x128xf32>
    %14 = arith.mulf %13, %12 : vector<32x128xf32>
    %15 = arith.addf %0, %14 : vector<32x128xf32>
    %c1 = arith.constant 1 : index
    %c0_10 = arith.constant 0 : index
    %c0_11 = arith.constant 0 : index
    %16 = vector.load %arg3[%c1, %c0_10, %c0_11] : memref<4x1x128xf32, #tpu.memory_space<vmem>>, vector<1x1x128xf32>
    %17 = vector.shape_cast %16 : vector<1x1x128xf32> to vector<1x128xf32>
    %18 = vector.broadcast %17 : vector<1x128xf32> to vector<32x128xf32>
    %19 = arith.subf %0, %18 : vector<32x128xf32>
    %c1_12 = arith.constant 1 : index
    %c0_13 = arith.constant 0 : index
    %c0_14 = arith.constant 0 : index
    %20 = vector.load %arg2[%c1_12, %c0_13, %c0_14] : memref<4x128x128xf32, #tpu.memory_space<vmem>>, vector<1x128x128xf32>
    %21 = vector.shape_cast %20 : vector<1x128x128xf32> to vector<128x128xf32>
    %cst_15 = arith.constant dense<0.000000e+00> : vector<32x128xf32>
    %22 = tpu.matmul %19, %21, %cst_15 {dimension_numbers = #tpu.dot_dimension_numbers<[1], [0], [0], [1], [0, 0, 1, 1], [], []>} : vector<32x128xf32>, vector<128x128xf32>, vector<32x128xf32> -> vector<32x128xf32>
    %23 = vector.broadcast %17 : vector<1x128xf32> to vector<32x128xf32>
    %24 = arith.addf %22, %23 : vector<32x128xf32>
    %c1_16 = arith.constant 1 : index
    %c0_17 = arith.constant 0 : index
    %c0_18 = arith.constant 0 : index
    %25 = vector.load %arg4[%c1_16, %c0_17, %c0_18] : memref<4x32x1xf32, #tpu.memory_space<vmem>>, vector<1x32x1xf32>
    %26 = vector.shape_cast %25 : vector<1x32x1xf32> to vector<32x1xf32>
    %27 = arith.subf %24, %0 : vector<32x128xf32>
    %28 = vector.broadcast %26 : vector<32x1xf32> to vector<32x128xf32>
    %29 = arith.mulf %28, %27 : vector<32x128xf32>
    %30 = arith.addf %15, %29 : vector<32x128xf32>
    %c2 = arith.constant 2 : index
    %c0_19 = arith.constant 0 : index
    %c0_20 = arith.constant 0 : index
    %31 = vector.load %arg3[%c2, %c0_19, %c0_20] : memref<4x1x128xf32, #tpu.memory_space<vmem>>, vector<1x1x128xf32>
    %32 = vector.shape_cast %31 : vector<1x1x128xf32> to vector<1x128xf32>
    %33 = vector.broadcast %32 : vector<1x128xf32> to vector<32x128xf32>
    %34 = arith.subf %0, %33 : vector<32x128xf32>
    %c2_21 = arith.constant 2 : index
    %c0_22 = arith.constant 0 : index
    %c0_23 = arith.constant 0 : index
    %35 = vector.load %arg2[%c2_21, %c0_22, %c0_23] : memref<4x128x128xf32, #tpu.memory_space<vmem>>, vector<1x128x128xf32>
    %36 = vector.shape_cast %35 : vector<1x128x128xf32> to vector<128x128xf32>
    %cst_24 = arith.constant dense<0.000000e+00> : vector<32x128xf32>
    %37 = tpu.matmul %34, %36, %cst_24 {dimension_numbers = #tpu.dot_dimension_numbers<[1], [0], [0], [1], [0, 0, 1, 1], [], []>} : vector<32x128xf32>, vector<128x128xf32>, vector<32x128xf32> -> vector<32x128xf32>
    %38 = vector.broadcast %32 : vector<1x128xf32> to vector<32x128xf32>
    %39 = arith.addf %37, %38 : vector<32x128xf32>
    %c2_25 = arith.constant 2 : index
    %c0_26 = arith.constant 0 : index
    %c0_27 = arith.constant 0 : index
    %40 = vector.load %arg4[%c2_25, %c0_26, %c0_27] : memref<4x32x1xf32, #tpu.memory_space<vmem>>, vector<1x32x1xf32>
    %41 = vector.shape_cast %40 : vector<1x32x1xf32> to vector<32x1xf32>
    %42 = arith.subf %39, %0 : vector<32x128xf32>
    %43 = vector.broadcast %41 : vector<32x1xf32> to vector<32x128xf32>
    %44 = arith.mulf %43, %42 : vector<32x128xf32>
    %45 = arith.addf %30, %44 : vector<32x128xf32>
    %c3 = arith.constant 3 : index
    %c0_28 = arith.constant 0 : index
    %c0_29 = arith.constant 0 : index
    %46 = vector.load %arg3[%c3, %c0_28, %c0_29] : memref<4x1x128xf32, #tpu.memory_space<vmem>>, vector<1x1x128xf32>
    %47 = vector.shape_cast %46 : vector<1x1x128xf32> to vector<1x128xf32>
    %48 = vector.broadcast %47 : vector<1x128xf32> to vector<32x128xf32>
    %49 = arith.subf %0, %48 : vector<32x128xf32>
    %c3_30 = arith.constant 3 : index
    %c0_31 = arith.constant 0 : index
    %c0_32 = arith.constant 0 : index
    %50 = vector.load %arg2[%c3_30, %c0_31, %c0_32] : memref<4x128x128xf32, #tpu.memory_space<vmem>>, vector<1x128x128xf32>
    %51 = vector.shape_cast %50 : vector<1x128x128xf32> to vector<128x128xf32>
    %cst_33 = arith.constant dense<0.000000e+00> : vector<32x128xf32>
    %52 = tpu.matmul %49, %51, %cst_33 {dimension_numbers = #tpu.dot_dimension_numbers<[1], [0], [0], [1], [0, 0, 1, 1], [], []>} : vector<32x128xf32>, vector<128x128xf32>, vector<32x128xf32> -> vector<32x128xf32>
    %53 = vector.broadcast %47 : vector<1x128xf32> to vector<32x128xf32>
    %54 = arith.addf %52, %53 : vector<32x128xf32>
    %c3_34 = arith.constant 3 : index
    %c0_35 = arith.constant 0 : index
    %c0_36 = arith.constant 0 : index
    %55 = vector.load %arg4[%c3_34, %c0_35, %c0_36] : memref<4x32x1xf32, #tpu.memory_space<vmem>>, vector<1x32x1xf32>
    %56 = vector.shape_cast %55 : vector<1x32x1xf32> to vector<32x1xf32>
    %57 = arith.subf %54, %0 : vector<32x128xf32>
    %58 = vector.broadcast %56 : vector<32x1xf32> to vector<32x128xf32>
    %59 = arith.mulf %58, %57 : vector<32x128xf32>
    %60 = arith.addf %45, %59 : vector<32x128xf32>
    %c0_37 = arith.constant 0 : index
    %c0_38 = arith.constant 0 : index
    %61 = vector.load %arg5[%c0_37, %c0_38] : memref<32x128xf32, #tpu.memory_space<vmem>>, vector<32x128xf32>
    tpu.vector_store %arg5[%c0_37, %c0_38], %60 {strides = array<i32>} : memref<32x128xf32, #tpu.memory_space<vmem>>, vector<32x128xf32>,
    return
  }
  func.func @transform_0(%arg0: i32) -> (i32, i32) {
    %c0_i32 = arith.constant 0 : i32
    %c0_i32_0 = arith.constant 0 : i32
    return %arg0, %c0_i32 : i32, i32
  }
  func.func @transform_1(%arg0: i32) -> (i32, i32, i32) {
    %c0_i32 = arith.constant 0 : i32
    %c0_i32_0 = arith.constant 0 : i32
    %c0_i32_1 = arith.constant 0 : i32
    %c0_i32_2 = arith.constant 0 : i32
    return %c0_i32, %c0_i32_0, %c0_i32_1 : i32, i32, i32
  }
  func.func @transform_2(%arg0: i32) -> (i32, i32, i32) {
    %c0_i32 = arith.constant 0 : i32
    %c0_i32_0 = arith.constant 0 : i32
    %c0_i32_1 = arith.constant 0 : i32
    %c0_i32_2 = arith.constant 0 : i32
    return %c0_i32, %c0_i32_0, %c0_i32_1 : i32, i32, i32
  }
  func.func @transform_3(%arg0: i32) -> (i32, i32, i32) {
    %c0_i32 = arith.constant 0 : i32
    %c0_i32_0 = arith.constant 0 : i32
    %c0_i32_1 = arith.constant 0 : i32
    return %c0_i32, %arg0, %c0_i32_0 : i32, i32, i32
  }
  func.func @transform_4(%arg0: i32) -> (i32, i32) {
    %c0_i32 = arith.constant 0 : i32
    %c0_i32_0 = arith.constant 0 : i32
    return %arg0, %c0_i32 : i32, i32
  }
}

</mosaic_0001>

<llo_original>
// kernel: integer_pow.2
$region0: #{integer_pow.2}
  #allocation0 [shape = 's32[1]{0}', space=sflag, size = 0x4, scoped, tag = 'scoped memory for integer_pow.2']
  %s0 = inlined_call_operand.vmem [shape: f32[2,4], index: 0, kind: input, shape index: {}, may-alias: {0,1}]
  %s1 = inlined_call_operand.vmem [shape: f32[2,4], index: 1, kind: input, shape index: {}, may-alias: {0,1}]
  %s2 = inlined_call_operand.vmem [shape: f32[2,4], index: 2, kind: output, shape index: {}]
  %v3 = vld [vmem:[%s0] sm:$0x3]
  %v4 = vld [vmem:[%s1] sm:$0x3]
  %5 = xla_tuple %v3, %v4
  %6 = xla_tuple %5
  %v7 = vmul.f32 %v3, %v4
  %8 = xla_tuple %v7
  %9 = vst [vmem:[%s2] sm:$0x3] %v7

// kernel: graphconv_pny_forward.7
$region0: #{graphconv_pny_forward.7}
  #allocation0 [shape = 'u32[]', space=smem, size = 0x4, offset = 0x4, fixed_abs, tag = 'smem constant byte address 0x4 - core index']
  #allocation1 [shape = 'u32[72,128]{1,0:T(1,128)}', space=vmem, size = 0x9000, scoped, tag = 'internal scratch']
  #allocation2 [shape = 'f32[8,256]{1,0:T(8,128)}', space=vmem, size = 0x2000, scoped, tag = 'scratch operand']
  %s0 = inlined_call_operand.vmem [shape: f32[8,128], index: 0, kind: input, shape index: {}]
  %s1 = inlined_call_operand.vmem [shape: f32[128,256], index: 1, kind: input, shape index: {}]
  %s2 = inlined_call_operand.vmem [shape: f32[8,128], index: 2, kind: output, shape index: {}]
  %s3 = sld [smem:[#allocation0]]
  $region26: #{graphconv_pny_forward.7} parent=0
    _
  %s5 = ssub.s32 1, %s3
  %s6 = scalar_select 0, %s5, %s3
  // Predicated region
  $region2: #{graphconv_pny_forward.7} parent=0 // pred_check
    _
  $region3: #{graphconv_pny_forward.7} parent=0 // pred_check_branch
    %8 = sbr.rel (0) target = $region5
  $region4: #{graphconv_pny_forward.7} parent=0 // pred_region
    _
  $region5: #{graphconv_pny_forward.7} parent=0 // pred_fallthru
    _
  // Predicated region
  $region6: #{graphconv_pny_forward.7} parent=0 // pred_check
    _
  $region7: #{graphconv_pny_forward.7} parent=0 // pred_check_branch
    %10 = sbr.rel (0) target = $region9
  $region8: #{graphconv_pny_forward.7} parent=0 // pred_region
    _
  $region9: #{graphconv_pny_forward.7} parent=0 // pred_fallthru
    _
  %p11 = scmp.eq.s32.totalorder 0, 0
  // Predicated region
  $region10: #{graphconv_pny_forward.7} parent=0 // pred_check
    %p12 = pneg %p11
  $region11: #{graphconv_pny_forward.7} parent=0 // pred_check_branch
    %14 = sbr.rel (%p12) target = $region13
  $region12: #{graphconv_pny_forward.7} parent=0 // pred_region
    %15 = vst [vmem:[#allocation2] sm:$0xff] 0.0
    %16 = vst [vmem:[#allocation2 + $0x8] sm:$0xff] 0.0
  $region13: #{graphconv_pny_forward.7} parent=0 // pred_fallthru
    _
  %v17 = vld [vmem:[%s0] sm:$0xff]
  %v18 = vld [vmem:[#allocation2] sm:$0xff]
  %v19 = vld [vmem:[#allocation2 + $0x8] sm:$0xff]
  %v20 = vld [vmem:[%s1] sm:$0xff]
  %v21 = vld [vmem:[%s1 + $0x8] sm:$0xff]
  %v22 = vld [vmem:[%s1 + $0x10] sm:$0xff]
  %v23 = vld [vmem:[%s1 + $0x18] sm:$0xff]
  %v24 = vld [vmem:[%s1 + $0x20] sm:$0xff]
  %v25 = vld [vmem:[%s1 + $0x28] sm:$0xff]
  %v26 = vld [vmem:[%s1 + $0x30] sm:$0xff]
  %v27 = vld [vmem:[%s1 + $0x38] sm:$0xff]
  %v28 = vld [vmem:[%s1 + $0x40] sm:$0xff]
  %v29 = vld [vmem:[%s1 + $0x48] sm:$0xff]
  %v30 = vld [vmem:[%s1 + $0x50] sm:$0xff]
  %v31 = vld [vmem:[%s1 + $0x58] sm:$0xff]
  %v32 = vld [vmem:[%s1 + $0x60] sm:$0xff]
  %v33 = vld [vmem:[%s1 + $0x68] sm:$0xff]
  %v34 = vld [vmem:[%s1 + $0x70] sm:$0xff]
  %v35 = vld [vmem:[%s1 + $0x78] sm:$0xff]
  %v36 = vld [vmem:[%s1 + $0x80] sm:$0xff]
  %v37 = vld [vmem:[%s1 + $0x88] sm:$0xff]
  %v38 = vld [vmem:[%s1 + $0x90] sm:$0xff]
  %v39 = vld [vmem:[%s1 + $0x98] sm:$0xff]
  %v40 = vld [vmem:[%s1 + $0xa0] sm:$0xff]
  %v41 = vld [vmem:[%s1 + $0xa8] sm:$0xff]
  %v42 = vld [vmem:[%s1 + $0xb0] sm:$0xff]
  %v43 = vld [vmem:[%s1 + $0xb8] sm:$0xff]
  %v44 = vld [vmem:[%s1 + $0xc0] sm:$0xff]
  %v45 = vld [vmem:[%s1 + $0xc8] sm:$0xff]
  %v46 = vld [vmem:[%s1 + $0xd0] sm:$0xff]
  %v47 = vld [vmem:[%s1 + $0xd8] sm:$0xff]
  %v48 = vld [vmem:[%s1 + $0xe0] sm:$0xff]
  %v49 = vld [vmem:[%s1 + $0xe8] sm:$0xff]
  %v50 = vld [vmem:[%s1 + $0xf0] sm:$0xff]
  %v51 = vld [vmem:[%s1 + $0xf8] sm:$0xff]
  %52 = vmatpush.msra.mxu0 %v50
  %53 = vmatpush.msra.mxu0 %v48
  %54 = vmatpush.msra.mxu0 %v46
  %55 = vmatpush.msra.mxu0 %v44
  %56 = vmatpush.msra.mxu0 %v42
  %57 = vmatpush.msra.mxu0 %v40
  %58 = vmatpush.msra.mxu0 %v38
  %59 = vmatpush.msra.mxu0 %v36
  %60 = vmatpush.msra.mxu0 %v34
  %61 = vmatpush.msra.mxu0 %v32
  %62 = vmatpush.msra.mxu0 %v30
  %63 = vmatpush.msra.mxu0 %v28
  %64 = vmatpush.msra.mxu0 %v26
  %65 = vmatpush.msra.mxu0 %v24
  %66 = vmatpush.msra.mxu0 %v22
  %67 = vmatpush.msra.mxu0 %v20
  %68 = vmatmul.f32.gmra.mxu0 %v17
  %v69 = vpop.f32.mrf.mxu0
  %v70 = vadd.f32 0.0, %v69
  %71 = vdwg.mxu0
  %72 = vmatpush.msra.mxu0 %v51
  %73 = vmatpush.msra.mxu0 %v49
  %74 = vmatpush.msra.mxu0 %v47
  %75 = vmatpush.msra.mxu0 %v45
  %76 = vmatpush.msra.mxu0 %v43
  %77 = vmatpush.msra.mxu0 %v41
  %78 = vmatpush.msra.mxu0 %v39
  %79 = vmatpush.msra.mxu0 %v37
  %80 = vmatpush.msra.mxu0 %v35
  %81 = vmatpush.msra.mxu0 %v33
  %82 = vmatpush.msra.mxu0 %v31
  %83 = vmatpush.msra.mxu0 %v29
  %84 = vmatpush.msra.mxu0 %v27
  %85 = vmatpush.msra.mxu0 %v25
  %86 = vmatpush.msra.mxu0 %v23
  %87 = vmatpush.msra.mxu0 %v21
  %88 = vmatmul.f32.gmra.mxu0 %v17
  %v89 = vpop.f32.mrf.mxu0
  %v90 = vadd.f32 0.0, %v89
  %91 = vdwg.mxu0
  %v92 = vadd.f32 %v18, %v70
  %v93 = vadd.f32 %v19, %v90
  %94 = vst [vmem:[#allocation2] sm:$0xff] %v92
  %95 = vst [vmem:[#allocation2 + $0x8] sm:$0xff] %v93
  // Predicated region
  $region14: #{graphconv_pny_forward.7} parent=0 // pred_check
    %p96 = pneg %p11
  $region15: #{graphconv_pny_forward.7} parent=0 // pred_check_branch
    %98 = sbr.rel (%p96) target = $region17
  $region16: #{graphconv_pny_forward.7} parent=0 // pred_region
    %v99 = vld [vmem:[#allocation2 + $0x8] sm:$0xff]
    %v100 = vmax.f32 %v99, 1.0
    %v101 = vld [vmem:[#allocation2] sm:$0xff]
    %103 = vset.pattern.permute.xlu0 0
    %104 = vperm.xlu0 %103, %v100
    %v105 = vpop.permute.xlu0 %104
    %v107 = vrcp.pop %v105
    %v108 = vmul.f32 %v105, %v107
    %v109 = vsub.f32 1.0, %v108
    %v110 = vmul.f32 %v107, %v109
    %v111 = vadd.f32 %v107, %v110
    %vm112 = vweird.f32 %v105
    %vm113 = vweird.f32 %v107
    %vm114 = vmor %vm112, %vm113
    %v115 = vsel %vm114, %v107, %v111
    %v116 = vand.u32 2147483647, %v105
    %vm117 = vcmp.eq.f32.partialorder %v116, 8.507059e+37
    %v118 = vand.u32 %v105, 2147483648
    %v119 = vor.u32 1.1754944e-38, %v118
    %v120 = vsel %vm117, %v119, %v115
    %v121 = vmul.f32 %v101, %v120
    %122 = vst [vmem:[%s2] sm:$0xff] %v121
  $region17: #{graphconv_pny_forward.7} parent=0 // pred_fallthru
    _
  // Predicated region
  $region18: #{graphconv_pny_forward.7} parent=0 // pred_check
    _
  $region19: #{graphconv_pny_forward.7} parent=0 // pred_check_branch
    %124 = sbr.rel (0) target = $region21
  $region20: #{graphconv_pny_forward.7} parent=0 // pred_region
    _
  $region21: #{graphconv_pny_forward.7} parent=0 // pred_fallthru
    _
  // Predicated region
  $region22: #{graphconv_pny_forward.7} parent=0 // pred_check
    _
  $region23: #{graphconv_pny_forward.7} parent=0 // pred_check_branch
    %126 = sbr.rel (0) target = $region25
  $region24: #{graphconv_pny_forward.7} parent=0 // pred_region
    _
  $region25: #{graphconv_pny_forward.7} parent=0 // pred_fallthru
    _

// kernel: graphconv_pny_forward.6
$region0: #{graphconv_pny_forward.6}
  #allocation0 [shape = 'u32[]', space=smem, size = 0x4, offset = 0x4, fixed_abs, tag = 'smem constant byte address 0x4 - core index']
  #allocation1 [shape = 'u32[72,128]{1,0:T(1,128)}', space=vmem, size = 0x9000, scoped, tag = 'internal scratch']
  #allocation2 [shape = 'f32[32,256]{1,0:T(8,128)}', space=vmem, size = 0x8000, scoped, tag = 'scratch operand']
  %s0 = inlined_call_operand.vmem [shape: s8[32,128], index: 0, kind: input, shape index: {}]
  %s1 = inlined_call_operand.vmem [shape: f32[128,256], index: 1, kind: input, shape index: {}]
  %s2 = inlined_call_operand.vmem [shape: f32[32,128], index: 2, kind: output, shape index: {}]
  %s3 = sld [smem:[#allocation0]]
  $region26: #{graphconv_pny_forward.6} parent=0
    _
  %s5 = ssub.s32 1, %s3
  %s6 = scalar_select 0, %s5, %s3
  // Predicated region
  $region2: #{graphconv_pny_forward.6} parent=0 // pred_check
    _
  $region3: #{graphconv_pny_forward.6} parent=0 // pred_check_branch
    %8 = sbr.rel (0) target = $region5
  $region4: #{graphconv_pny_forward.6} parent=0 // pred_region
    _
  $region5: #{graphconv_pny_forward.6} parent=0 // pred_fallthru
    _
  // Predicated region
  $region6: #{graphconv_pny_forward.6} parent=0 // pred_check
    _
  $region7: #{graphconv_pny_forward.6} parent=0 // pred_check_branch
    %10 = sbr.rel (0) target = $region9
  $region8: #{graphconv_pny_forward.6} parent=0 // pred_region
    _
  $region9: #{graphconv_pny_forward.6} parent=0 // pred_fallthru
    _
  %p11 = scmp.eq.s32.totalorder 0, 0
  // Predicated region
  $region10: #{graphconv_pny_forward.6} parent=0 // pred_check
    %p12 = pneg %p11
  $region11: #{graphconv_pny_forward.6} parent=0 // pred_check_branch
    %14 = sbr.rel (%p12) target = $region13
  $region12: #{graphconv_pny_forward.6} parent=0 // pred_region
    %15 = vst [vmem:[#allocation2] sm:$0xff] 0.0
    %16 = vst [vmem:[#allocation2 + $0x8] sm:$0xff] 0.0
    %17 = vst [vmem:[#allocation2 + $0x10] sm:$0xff] 0.0
    %18 = vst [vmem:[#allocation2 + $0x18] sm:$0xff] 0.0
    %19 = vst [vmem:[#allocation2 + $0x20] sm:$0xff] 0.0
    %20 = vst [vmem:[#allocation2 + $0x28] sm:$0xff] 0.0
    %21 = vst [vmem:[#allocation2 + $0x30] sm:$0xff] 0.0
    %22 = vst [vmem:[#allocation2 + $0x38] sm:$0xff] 0.0
  $region13: #{graphconv_pny_forward.6} parent=0 // pred_fallthru
    _
  %v23 = vld [vmem:[%s0] sm:$0xff]
  %v24 = vunpack.c.0.s8 %v23
  %v25 = vunpack.c.1.s8 %v23
  %v26 = vunpack.c.2.s8 %v23
  %v27 = vunpack.c.3.s8 %v23
  %v28 = vcvt.s32.f32 %v24
  %v29 = vcvt.s32.f32 %v25
  %v30 = vcvt.s32.f32 %v26
  %v31 = vcvt.s32.f32 %v27
  %v32 = vld [vmem:[#allocation2] sm:$0xff]
  %v33 = vld [vmem:[#allocation2 + $0x8] sm:$0xff]
  %v34 = vld [vmem:[#allocation2 + $0x10] sm:$0xff]
  %v35 = vld [vmem:[#allocation2 + $0x18] sm:$0xff]
  %v36 = vld [vmem:[#allocation2 + $0x20] sm:$0xff]
  %v37 = vld [vmem:[#allocation2 + $0x28] sm:$0xff]
  %v38 = vld [vmem:[#allocation2 + $0x30] sm:$0xff]
  %v39 = vld [vmem:[#allocation2 + $0x38] sm:$0xff]
  %v40 = vld [vmem:[%s1] sm:$0xff]
  %v41 = vld [vmem:[%s1 + $0x8] sm:$0xff]
  %v42 = vld [vmem:[%s1 + $0x10] sm:$0xff]
  %v43 = vld [vmem:[%s1 + $0x18] sm:$0xff]
  %v44 = vld [vmem:[%s1 + $0x20] sm:$0xff]
  %v45 = vld [vmem:[%s1 + $0x28] sm:$0xff]
  %v46 = vld [vmem:[%s1 + $0x30] sm:$0xff]
  %v47 = vld [vmem:[%s1 + $0x38] sm:$0xff]
  %v48 = vld [vmem:[%s1 + $0x40] sm:$0xff]
  %v49 = vld [vmem:[%s1 + $0x48] sm:$0xff]
  %v50 = vld [vmem:[%s1 + $0x50] sm:$0xff]
  %v51 = vld [vmem:[%s1 + $0x58] sm:$0xff]
  %v52 = vld [vmem:[%s1 + $0x60] sm:$0xff]
  %v53 = vld [vmem:[%s1 + $0x68] sm:$0xff]
  %v54 = vld [vmem:[%s1 + $0x70] sm:$0xff]
  %v55 = vld [vmem:[%s1 + $0x78] sm:$0xff]
  %v56 = vld [vmem:[%s1 + $0x80] sm:$0xff]
  %v57 = vld [vmem:[%s1 + $0x88] sm:$0xff]
  %v58 = vld [vmem:[%s1 + $0x90] sm:$0xff]
  %v59 = vld [vmem:[%s1 + $0x98] sm:$0xff]
  %v60 = vld [vmem:[%s1 + $0xa0] sm:$0xff]
  %v61 = vld [vmem:[%s1 + $0xa8] sm:$0xff]
  %v62 = vld [vmem:[%s1 + $0xb0] sm:$0xff]
  %v63 = vld [vmem:[%s1 + $0xb8] sm:$0xff]
  %v64 = vld [vmem:[%s1 + $0xc0] sm:$0xff]
  %v65 = vld [vmem:[%s1 + $0xc8] sm:$0xff]
  %v66 = vld [vmem:[%s1 + $0xd0] sm:$0xff]
  %v67 = vld [vmem:[%s1 + $0xd8] sm:$0xff]
  %v68 = vld [vmem:[%s1 + $0xe0] sm:$0xff]
  %v69 = vld [vmem:[%s1 + $0xe8] sm:$0xff]
  %v70 = vld [vmem:[%s1 + $0xf0] sm:$0xff]
  %v71 = vld [vmem:[%s1 + $0xf8] sm:$0xff]
  %72 = vmatpush.msra.mxu0 %v70
  %73 = vmatpush.msra.mxu0 %v68
  %74 = vmatpush.msra.mxu0 %v66
  %75 = vmatpush.msra.mxu0 %v64
  %76 = vmatpush.msra.mxu0 %v62
  %77 = vmatpush.msra.mxu0 %v60
  %78 = vmatpush.msra.mxu0 %v58
  %79 = vmatpush.msra.mxu0 %v56
  %80 = vmatpush.msra.mxu0 %v54
  %81 = vmatpush.msra.mxu0 %v52
  %82 = vmatpush.msra.mxu0 %v50
  %83 = vmatpush.msra.mxu0 %v48
  %84 = vmatpush.msra.mxu0 %v46
  %85 = vmatpush.msra.mxu0 %v44
  %86 = vmatpush.msra.mxu0 %v42
  %87 = vmatpush.msra.mxu0 %v40
  %88 = vmatmul.f32.gmra.mxu0 %v28
  %v89 = vpop.f32.mrf.mxu0
  %v90 = vadd.f32 0.0, %v89
  %91 = vmatmul.f32.gmra.mxu0 %v29
  %v92 = vpop.f32.mrf.mxu0
  %v93 = vadd.f32 0.0, %v92
  %94 = vmatmul.f32.gmra.mxu0 %v30
  %v95 = vpop.f32.mrf.mxu0
  %v96 = vadd.f32 0.0, %v95
  %97 = vmatmul.f32.gmra.mxu0 %v31
  %v98 = vpop.f32.mrf.mxu0
  %v99 = vadd.f32 0.0, %v98
  %100 = vdwg.mxu0
  %101 = vmatpush.msra.mxu0 %v71
  %102 = vmatpush.msra.mxu0 %v69
  %103 = vmatpush.msra.mxu0 %v67
  %104 = vmatpush.msra.mxu0 %v65
  %105 = vmatpush.msra.mxu0 %v63
  %106 = vmatpush.msra.mxu0 %v61
  %107 = vmatpush.msra.mxu0 %v59
  %108 = vmatpush.msra.mxu0 %v57
  %109 = vmatpush.msra.mxu0 %v55
  %110 = vmatpush.msra.mxu0 %v53
  %111 = vmatpush.msra.mxu0 %v51
  %112 = vmatpush.msra.mxu0 %v49
  %113 = vmatpush.msra.mxu0 %v47
  %114 = vmatpush.msra.mxu0 %v45
  %115 = vmatpush.msra.mxu0 %v43
  %116 = vmatpush.msra.mxu0 %v41
  %117 = vmatmul.f32.gmra.mxu0 %v28
  %v118 = vpop.f32.mrf.mxu0
  %v119 = vadd.f32 0.0, %v118
  %120 = vmatmul.f32.gmra.mxu0 %v29
  %v121 = vpop.f32.mrf.mxu0
  %v122 = vadd.f32 0.0, %v121
  %123 = vmatmul.f32.gmra.mxu0 %v30
  %v124 = vpop.f32.mrf.mxu0
  %v125 = vadd.f32 0.0, %v124
  %126 = vmatmul.f32.gmra.mxu0 %v31
  %v127 = vpop.f32.mrf.mxu0
  %v128 = vadd.f32 0.0, %v127
  %129 = vdwg.mxu0
  %v130 = vadd.f32 %v32, %v90
  %v131 = vadd.f32 %v33, %v119
  %v132 = vadd.f32 %v34, %v93
  %v133 = vadd.f32 %v35, %v122
  %v134 = vadd.f32 %v36, %v96
  %v135 = vadd.f32 %v37, %v125
  %v136 = vadd.f32 %v38, %v99
  %v137 = vadd.f32 %v39, %v128
  %138 = vst [vmem:[#allocation2] sm:$0xff] %v130
  %139 = vst [vmem:[#allocation2 + $0x8] sm:$0xff] %v131
  %140 = vst [vmem:[#allocation2 + $0x10] sm:$0xff] %v132
  %141 = vst [vmem:[#allocation2 + $0x18] sm:$0xff] %v133
  %142 = vst [vmem:[#allocation2 + $0x20] sm:$0xff] %v134
  %143 = vst [vmem:[#allocation2 + $0x28] sm:$0xff] %v135
  %144 = vst [vmem:[#allocation2 + $0x30] sm:$0xff] %v136
  %145 = vst [vmem:[#allocation2 + $0x38] sm:$0xff] %v137
  // Predicated region
  $region14: #{graphconv_pny_forward.6} parent=0 // pred_check
    %p146 = pneg %p11
  $region15: #{graphconv_pny_forward.6} parent=0 // pred_check_branch
    %148 = sbr.rel (%p146) target = $region17
  $region16: #{graphconv_pny_forward.6} parent=0 // pred_region
    %v149 = vld [vmem:[#allocation2 + $0x8] sm:$0xff]
    %v150 = vld [vmem:[#allocation2 + $0x18] sm:$0xff]
    %v151 = vld [vmem:[#allocation2 + $0x28] sm:$0xff]
    %v152 = vld [vmem:[#allocation2 + $0x38] sm:$0xff]
    %v153 = vmax.f32 %v149, 1.0
    %v154 = vmax.f32 %v150, 1.0
    %v155 = vmax.f32 %v151, 1.0
    %v156 = vmax.f32 %v152, 1.0
    %v157 = vld [vmem:[#allocation2] sm:$0xff]
    %v158 = vld [vmem:[#allocation2 + $0x10] sm:$0xff]
    %v159 = vld [vmem:[#allocation2 + $0x20] sm:$0xff]
    %v160 = vld [vmem:[#allocation2 + $0x30] sm:$0xff]
    %162 = vset.pattern.permute.xlu0 0
    %163 = vperm.xlu0 %162, %v153
    %v164 = vpop.permute.xlu0 %163
    %167 = vset.pattern.permute.xlu0 0
    %168 = vperm.xlu0 %167, %v154
    %v169 = vpop.permute.xlu0 %168
    %172 = vset.pattern.permute.xlu0 0
    %173 = vperm.xlu0 %172, %v155
    %v174 = vpop.permute.xlu0 %173
    %177 = vset.pattern.permute.xlu0 0
    %178 = vperm.xlu0 %177, %v156
    %v179 = vpop.permute.xlu0 %178
    %v181 = vrcp.pop %v164
    %v182 = vmul.f32 %v164, %v181
    %v183 = vsub.f32 1.0, %v182
    %v184 = vmul.f32 %v181, %v183
    %v185 = vadd.f32 %v181, %v184
    %vm186 = vweird.f32 %v164
    %vm187 = vweird.f32 %v181
    %vm188 = vmor %vm186, %vm187
    %v189 = vsel %vm188, %v181, %v185
    %v190 = vand.u32 2147483647, %v164
    %vm191 = vcmp.eq.f32.partialorder %v190, 8.507059e+37
    %v192 = vand.u32 %v164, 2147483648
    %v193 = vor.u32 1.1754944e-38, %v192
    %v194 = vsel %vm191, %v193, %v189
    %v195 = vmul.f32 %v157, %v194
    %v196 = vrcp.pop %v169
    %v197 = vmul.f32 %v169, %v196
    %v198 = vsub.f32 1.0, %v197
    %v199 = vmul.f32 %v196, %v198
    %v200 = vadd.f32 %v196, %v199
    %vm201 = vweird.f32 %v169
    %vm202 = vweird.f32 %v196
    %vm203 = vmor %vm201, %vm202
    %v204 = vsel %vm203, %v196, %v200
    %v205 = vand.u32 2147483647, %v169
    %vm206 = vcmp.eq.f32.partialorder %v205, 8.507059e+37
    %v207 = vand.u32 %v169, 2147483648
    %v208 = vor.u32 1.1754944e-38, %v207
    %v209 = vsel %vm206, %v208, %v204
    %v210 = vmul.f32 %v158, %v209
    %v211 = vrcp.pop %v174
    %v212 = vmul.f32 %v174, %v211
    %v213 = vsub.f32 1.0, %v212
    %v214 = vmul.f32 %v211, %v213
    %v215 = vadd.f32 %v211, %v214
    %vm216 = vweird.f32 %v174
    %vm217 = vweird.f32 %v211
    %vm218 = vmor %vm216, %vm217
    %v219 = vsel %vm218, %v211, %v215
    %v220 = vand.u32 2147483647, %v174
    %vm221 = vcmp.eq.f32.partialorder %v220, 8.507059e+37
    %v222 = vand.u32 %v174, 2147483648
    %v223 = vor.u32 1.1754944e-38, %v222
    %v224 = vsel %vm221, %v223, %v219
    %v225 = vmul.f32 %v159, %v224
    %v226 = vrcp.pop %v179
    %v227 = vmul.f32 %v179, %v226
    %v228 = vsub.f32 1.0, %v227
    %v229 = vmul.f32 %v226, %v228
    %v230 = vadd.f32 %v226, %v229
    %vm231 = vweird.f32 %v179
    %vm232 = vweird.f32 %v226
    %vm233 = vmor %vm231, %vm232
    %v234 = vsel %vm233, %v226, %v230
    %v235 = vand.u32 2147483647, %v179
    %vm236 = vcmp.eq.f32.partialorder %v235, 8.507059e+37
    %v237 = vand.u32 %v179, 2147483648
    %v238 = vor.u32 1.1754944e-38, %v237
    %v239 = vsel %vm236, %v238, %v234
    %v240 = vmul.f32 %v160, %v239
    %241 = vst [vmem:[%s2] sm:$0xff] %v195
    %242 = vst [vmem:[%s2 + $0x8] sm:$0xff] %v210
    %243 = vst [vmem:[%s2 + $0x10] sm:$0xff] %v225
    %244 = vst [vmem:[%s2 + $0x18] sm:$0xff] %v240
  $region17: #{graphconv_pny_forward.6} parent=0 // pred_fallthru
    _
  // Predicated region
  $region18: #{graphconv_pny_forward.6} parent=0 // pred_check
    _
  $region19: #{graphconv_pny_forward.6} parent=0 // pred_check_branch
    %246 = sbr.rel (0) target = $region21
  $region20: #{graphconv_pny_forward.6} parent=0 // pred_region
    _
  $region21: #{graphconv_pny_forward.6} parent=0 // pred_fallthru
    _
  // Predicated region
  $region22: #{graphconv_pny_forward.6} parent=0 // pred_check
    _
  $region23: #{graphconv_pny_forward.6} parent=0 // pred_check_branch
    %248 = sbr.rel (0) target = $region25
  $region24: #{graphconv_pny_forward.6} parent=0 // pred_region
    _
  $region25: #{graphconv_pny_forward.6} parent=0 // pred_fallthru
    _

// kernel: graphconv_pny_forward.8
$region0: #{graphconv_pny_forward.8}
  #allocation0 [shape = 'u32[]', space=smem, size = 0x4, offset = 0x4, fixed_abs, tag = 'smem constant byte address 0x4 - core index']
  #allocation1 [shape = 'u32[72,128]{1,0:T(1,128)}', space=vmem, size = 0x9000, scoped, tag = 'internal scratch']
  %s0 = inlined_call_operand.vmem [shape: f32[32,128], index: 0, kind: input, shape index: {}]
  %s1 = inlined_call_operand.vmem [shape: f32[2,32,1], index: 1, kind: input, shape index: {}]
  %s2 = inlined_call_operand.vmem [shape: f32[2,1,128], index: 2, kind: input, shape index: {}]
  %s3 = inlined_call_operand.vmem [shape: f32[2,1,1], index: 3, kind: input, shape index: {}]
  %s4 = inlined_call_operand.vmem [shape: f32[2,128,128], index: 4, kind: output, shape index: {}]
  %s5 = sld [smem:[#allocation0]]
  $region34: #{graphconv_pny_forward.8} parent=0
    _
  %s7 = ssub.s32 1, %s5
  %s8 = scalar_select 0, %s7, %s5
  // Predicated region
  $region2: #{graphconv_pny_forward.8} parent=0 // pred_check
    _
  $region3: #{graphconv_pny_forward.8} parent=0 // pred_check_branch
    %10 = sbr.rel (0) target = $region5
  $region4: #{graphconv_pny_forward.8} parent=0 // pred_region
    _
  $region5: #{graphconv_pny_forward.8} parent=0 // pred_fallthru
    _
  // Predicated region
  $region6: #{graphconv_pny_forward.8} parent=0 // pred_check
    _
  $region7: #{graphconv_pny_forward.8} parent=0 // pred_check_branch
    %12 = sbr.rel (0) target = $region9
  $region8: #{graphconv_pny_forward.8} parent=0 // pred_region
    _
  $region9: #{graphconv_pny_forward.8} parent=0 // pred_fallthru
    _
  // Predicated region
  $region10: #{graphconv_pny_forward.8} parent=0 // pred_check
    _
  $region11: #{graphconv_pny_forward.8} parent=0 // pred_check_branch
    %14 = sbr.rel (0) target = $region13
  $region12: #{graphconv_pny_forward.8} parent=0 // pred_region
    _
  $region13: #{graphconv_pny_forward.8} parent=0 // pred_fallthru
    _
  // Predicated region
  $region14: #{graphconv_pny_forward.8} parent=0 // pred_check
    _
  $region15: #{graphconv_pny_forward.8} parent=0 // pred_check_branch
    %16 = sbr.rel (0) target = $region17
  $region16: #{graphconv_pny_forward.8} parent=0 // pred_region
    _
  $region17: #{graphconv_pny_forward.8} parent=0 // pred_fallthru
    _
  %p17 = scmp.eq.s32.totalorder 0, 0
  // Predicated region
  $region18: #{graphconv_pny_forward.8} parent=0 // pred_check
    %p18 = pneg %p17
  $region19: #{graphconv_pny_forward.8} parent=0 // pred_check_branch
    %20 = sbr.rel (%p18) target = $region21
  $region20: #{graphconv_pny_forward.8} parent=0 // pred_region
    %21 = vst [vmem:[%s4] sm:$0xff] 0.0
    %22 = vst [vmem:[%s4 + $0x8] sm:$0xff] 0.0
    %23 = vst [vmem:[%s4 + $0x10] sm:$0xff] 0.0
    %24 = vst [vmem:[%s4 + $0x18] sm:$0xff] 0.0
    %25 = vst [vmem:[%s4 + $0x20] sm:$0xff] 0.0
    %26 = vst [vmem:[%s4 + $0x28] sm:$0xff] 0.0
    %27 = vst [vmem:[%s4 + $0x30] sm:$0xff] 0.0
    %28 = vst [vmem:[%s4 + $0x38] sm:$0xff] 0.0
    %29 = vst [vmem:[%s4 + $0x40] sm:$0xff] 0.0
    %30 = vst [vmem:[%s4 + $0x48] sm:$0xff] 0.0
    %31 = vst [vmem:[%s4 + $0x50] sm:$0xff] 0.0
    %32 = vst [vmem:[%s4 + $0x58] sm:$0xff] 0.0
    %33 = vst [vmem:[%s4 + $0x60] sm:$0xff] 0.0
    %34 = vst [vmem:[%s4 + $0x68] sm:$0xff] 0.0
    %35 = vst [vmem:[%s4 + $0x70] sm:$0xff] 0.0
    %36 = vst [vmem:[%s4 + $0x78] sm:$0xff] 0.0
    %37 = vst [vmem:[%s4 + $0x80] sm:$0xff] 0.0
    %38 = vst [vmem:[%s4 + $0x88] sm:$0xff] 0.0
    %39 = vst [vmem:[%s4 + $0x90] sm:$0xff] 0.0
    %40 = vst [vmem:[%s4 + $0x98] sm:$0xff] 0.0
    %41 = vst [vmem:[%s4 + $0xa0] sm:$0xff] 0.0
    %42 = vst [vmem:[%s4 + $0xa8] sm:$0xff] 0.0
    %43 = vst [vmem:[%s4 + $0xb0] sm:$0xff] 0.0
    %44 = vst [vmem:[%s4 + $0xb8] sm:$0xff] 0.0
    %45 = vst [vmem:[%s4 + $0xc0] sm:$0xff] 0.0
    %46 = vst [vmem:[%s4 + $0xc8] sm:$0xff] 0.0
    %47 = vst [vmem:[%s4 + $0xd0] sm:$0xff] 0.0
    %48 = vst [vmem:[%s4 + $0xd8] sm:$0xff] 0.0
    %49 = vst [vmem:[%s4 + $0xe0] sm:$0xff] 0.0
    %50 = vst [vmem:[%s4 + $0xe8] sm:$0xff] 0.0
    %51 = vst [vmem:[%s4 + $0xf0] sm:$0xff] 0.0
    %52 = vst [vmem:[%s4 + $0xf8] sm:$0xff] 0.0
  $region21: #{graphconv_pny_forward.8} parent=0 // pred_fallthru
    _
  %v53 = vld [vmem:[%s0] sm:$0xff]
  %v54 = vld [vmem:[%s0 + $0x8] sm:$0xff]
  %v55 = vld [vmem:[%s0 + $0x10] sm:$0xff]
  %v56 = vld [vmem:[%s0 + $0x18] sm:$0xff]
  %v57 = vld [vmem:[%s2] sm:$0x1]
  %v59 = vperm.slane %v57, 0
  %v61 = vsub.f32 %v53, %v59
  %v62 = vsub.f32 %v54, %v59
  %v63 = vsub.f32 %v55, %v59
  %v64 = vsub.f32 %v56, %v59
  %v65 = vld [vmem:[%s1] sm:$0xff]
  %v66 = vld [vmem:[%s1 + $0x8] sm:$0xff]
  %v67 = vld [vmem:[%s1 + $0x10] sm:$0xff]
  %v68 = vld [vmem:[%s1 + $0x18] sm:$0xff]
  %70 = vset.pattern.permute.xlu0 0
  %71 = vperm.xlu0 %70, %v65
  %v72 = vpop.permute.xlu0 %71
  %75 = vset.pattern.permute.xlu0 0
  %76 = vperm.xlu0 %75, %v66
  %v77 = vpop.permute.xlu0 %76
  %80 = vset.pattern.permute.xlu0 0
  %81 = vperm.xlu0 %80, %v67
  %v82 = vpop.permute.xlu0 %81
  %85 = vset.pattern.permute.xlu0 0
  %86 = vperm.xlu0 %85, %v68
  %v87 = vpop.permute.xlu0 %86
  %v89 = vmul.f32 %v61, %v72
  %v90 = vmul.f32 %v62, %v77
  %v91 = vmul.f32 %v63, %v82
  %v92 = vmul.f32 %v64, %v87
  %v93 = vld [vmem:[%s4] sm:$0xff]
  %v94 = vld [vmem:[%s4 + $0x8] sm:$0xff]
  %v95 = vld [vmem:[%s4 + $0x10] sm:$0xff]
  %v96 = vld [vmem:[%s4 + $0x18] sm:$0xff]
  %v97 = vld [vmem:[%s4 + $0x20] sm:$0xff]
  %v98 = vld [vmem:[%s4 + $0x28] sm:$0xff]
  %v99 = vld [vmem:[%s4 + $0x30] sm:$0xff]
  %v100 = vld [vmem:[%s4 + $0x38] sm:$0xff]
  %v101 = vld [vmem:[%s4 + $0x40] sm:$0xff]
  %v102 = vld [vmem:[%s4 + $0x48] sm:$0xff]
  %v103 = vld [vmem:[%s4 + $0x50] sm:$0xff]
  %v104 = vld [vmem:[%s4 + $0x58] sm:$0xff]
  %v105 = vld [vmem:[%s4 + $0x60] sm:$0xff]
  %v106 = vld [vmem:[%s4 + $0x68] sm:$0xff]
  %v107 = vld [vmem:[%s4 + $0x70] sm:$0xff]
  %v108 = vld [vmem:[%s4 + $0x78] sm:$0xff]
  %109 = vxpose.xlu0.b32.start [1/16] %v89, 128
  %110 = vxpose.xlu0.b32.cont [2/16] %v90, 128
  %111 = vxpose.xlu0.b32.cont [3/16] %v91, 128
  %112 = vxpose.xlu0.b32.cont [4/16] %v92, 128
  %113 = vxpose.xlu0.b32.cont [5/16] 0.0, 128
  %114 = vxpose.xlu0.b32.cont [6/16] 0.0, 128
  %115 = vxpose.xlu0.b32.cont [7/16] 0.0, 128
  %116 = vxpose.xlu0.b32.cont [8/16] 0.0, 128
  %117 = vxpose.xlu0.b32.cont [9/16] 0.0, 128
  %118 = vxpose.xlu0.b32.cont [10/16] 0.0, 128
  %119 = vxpose.xlu0.b32.cont [11/16] 0.0, 128
  %120 = vxpose.xlu0.b32.cont [12/16] 0.0, 128
  %121 = vxpose.xlu0.b32.cont [13/16] 0.0, 128
  %122 = vxpose.xlu0.b32.cont [14/16] 0.0, 128
  %123 = vxpose.xlu0.b32.cont [15/16] 0.0, 128
  %124 = vxpose.xlu0.b32.end [16/16] 0.0, 128
  %v125 = vpop.trf.xlu0
  %v126 = vpop.trf.xlu0
  %v127 = vpop.trf.xlu0
  %v128 = vpop.trf.xlu0
  %v129 = vpop.trf.xlu0
  %v130 = vpop.trf.xlu0
  %v131 = vpop.trf.xlu0
  %v132 = vpop.trf.xlu0
  %v133 = vpop.trf.xlu0
  %v134 = vpop.trf.xlu0
  %v135 = vpop.trf.xlu0
  %v136 = vpop.trf.xlu0
  %v137 = vpop.trf.xlu0
  %v138 = vpop.trf.xlu0
  %v139 = vpop.trf.xlu0
  %v140 = vpop.trf.xlu0
  %vm141 = vcmask 261120
  %v143 = vsel %vm141, %v125, 0
  %v146 = vsel %vm141, %v126, 0
  %v149 = vsel %vm141, %v127, 0
  %v152 = vsel %vm141, %v128, 0
  %v155 = vsel %vm141, %v129, 0
  %v158 = vsel %vm141, %v130, 0
  %v161 = vsel %vm141, %v131, 0
  %v164 = vsel %vm141, %v132, 0
  %v167 = vsel %vm141, %v133, 0
  %v170 = vsel %vm141, %v134, 0
  %v173 = vsel %vm141, %v135, 0
  %v176 = vsel %vm141, %v136, 0
  %v179 = vsel %vm141, %v137, 0
  %v182 = vsel %vm141, %v138, 0
  %v185 = vsel %vm141, %v139, 0
  %v188 = vsel %vm141, %v140, 0
  %190 = vmatpush.msra.mxu0 0.0
  %191 = vmatpush.msra.mxu0 0.0
  %192 = vmatpush.msra.mxu0 0.0
  %193 = vmatpush.msra.mxu0 0.0
  %194 = vmatpush.msra.mxu0 0.0
  %195 = vmatpush.msra.mxu0 0.0
  %196 = vmatpush.msra.mxu0 0.0
  %197 = vmatpush.msra.mxu0 0.0
  %198 = vmatpush.msra.mxu0 0.0
  %199 = vmatpush.msra.mxu0 0.0
  %200 = vmatpush.msra.mxu0 0.0
  %201 = vmatpush.msra.mxu0 0.0
  %202 = vmatpush.msra.mxu0 %v92
  %203 = vmatpush.msra.mxu0 %v91
  %204 = vmatpush.msra.mxu0 %v90
  %205 = vmatpush.msra.mxu0 %v89
  %206 = vmatmul.f32.gmra.mxu0 %v143
  %v207 = vpop.f32.mrf.mxu0
  %v208 = vadd.f32 0.0, %v207
  %209 = vmatmul.f32.gmra.mxu0 %v146
  %v210 = vpop.f32.mrf.mxu0
  %v211 = vadd.f32 0.0, %v210
  %212 = vmatmul.f32.gmra.mxu0 %v149
  %v213 = vpop.f32.mrf.mxu0
  %v214 = vadd.f32 0.0, %v213
  %215 = vmatmul.f32.gmra.mxu0 %v152
  %v216 = vpop.f32.mrf.mxu0
  %v217 = vadd.f32 0.0, %v216
  %218 = vmatmul.f32.gmra.mxu0 %v155
  %v219 = vpop.f32.mrf.mxu0
  %v220 = vadd.f32 0.0, %v219
  %221 = vmatmul.f32.gmra.mxu0 %v158
  %v222 = vpop.f32.mrf.mxu0
  %v223 = vadd.f32 0.0, %v222
  %224 = vmatmul.f32.gmra.mxu0 %v161
  %v225 = vpop.f32.mrf.mxu0
  %v226 = vadd.f32 0.0, %v225
  %227 = vmatmul.f32.gmra.mxu0 %v164
  %v228 = vpop.f32.mrf.mxu0
  %v229 = vadd.f32 0.0, %v228
  %230 = vmatmul.f32.gmra.mxu0 %v167
  %v231 = vpop.f32.mrf.mxu0
  %v232 = vadd.f32 0.0, %v231
  %233 = vmatmul.f32.gmra.mxu0 %v170
  %v234 = vpop.f32.mrf.mxu0
  %v235 = vadd.f32 0.0, %v234
  %236 = vmatmul.f32.gmra.mxu0 %v173
  %v237 = vpop.f32.mrf.mxu0
  %v238 = vadd.f32 0.0, %v237
  %239 = vmatmul.f32.gmra.mxu0 %v176
  %v240 = vpop.f32.mrf.mxu0
  %v241 = vadd.f32 0.0, %v240
  %242 = vmatmul.f32.gmra.mxu0 %v179
  %v243 = vpop.f32.mrf.mxu0
  %v244 = vadd.f32 0.0, %v243
  %245 = vmatmul.f32.gmra.mxu0 %v182
  %v246 = vpop.f32.mrf.mxu0
  %v247 = vadd.f32 0.0, %v246
  %248 = vmatmul.f32.gmra.mxu0 %v185
  %v249 = vpop.f32.mrf.mxu0
  %v250 = vadd.f32 0.0, %v249
  %251 = vmatmul.f32.gmra.mxu0 %v188
  %v252 = vpop.f32.mrf.mxu0
  %v253 = vadd.f32 0.0, %v252
  %254 = vdwg.mxu0
  %v255 = vadd.f32 %v93, %v208
  %v256 = vadd.f32 %v94, %v211
  %v257 = vadd.f32 %v95, %v214
  %v258 = vadd.f32 %v96, %v217
  %v259 = vadd.f32 %v97, %v220
  %v260 = vadd.f32 %v98, %v223
  %v261 = vadd.f32 %v99, %v226
  %v262 = vadd.f32 %v100, %v229
  %v263 = vadd.f32 %v101, %v232
  %v264 = vadd.f32 %v102, %v235
  %v265 = vadd.f32 %v103, %v238
  %v266 = vadd.f32 %v104, %v241
  %v267 = vadd.f32 %v105, %v244
  %v268 = vadd.f32 %v106, %v247
  %v269 = vadd.f32 %v107, %v250
  %v270 = vadd.f32 %v108, %v253
  %271 = vst [vmem:[%s4] sm:$0xff] %v255
  %272 = vst [vmem:[%s4 + $0x8] sm:$0xff] %v256
  %273 = vst [vmem:[%s4 + $0x10] sm:$0xff] %v257
  %274 = vst [vmem:[%s4 + $0x18] sm:$0xff] %v258
  %275 = vst [vmem:[%s4 + $0x20] sm:$0xff] %v259
  %276 = vst [vmem:[%s4 + $0x28] sm:$0xff] %v260
  %277 = vst [vmem:[%s4 + $0x30] sm:$0xff] %v261
  %278 = vst [vmem:[%s4 + $0x38] sm:$0xff] %v262
  %279 = vst [vmem:[%s4 + $0x40] sm:$0xff] %v263
  %280 = vst [vmem:[%s4 + $0x48] sm:$0xff] %v264
  %281 = vst [vmem:[%s4 + $0x50] sm:$0xff] %v265
  %282 = vst [vmem:[%s4 + $0x58] sm:$0xff] %v266
  %283 = vst [vmem:[%s4 + $0x60] sm:$0xff] %v267
  %284 = vst [vmem:[%s4 + $0x68] sm:$0xff] %v268
  %285 = vst [vmem:[%s4 + $0x70] sm:$0xff] %v269
  %286 = vst [vmem:[%s4 + $0x78] sm:$0xff] %v270
  %s287 = scalar_lea.vmem %s2, 1
  %v288 = vld [vmem:[%s287] sm:$0x1]
  %v290 = vperm.slane %v288, 0
  %v292 = vsub.f32 %v53, %v290
  %v293 = vsub.f32 %v54, %v290
  %v294 = vsub.f32 %v55, %v290
  %v295 = vsub.f32 %v56, %v290
  %s296 = scalar_lea.vmem %s1, 32
  %v297 = vld [vmem:[%s296] sm:$0xff]
  %v298 = vld [vmem:[%s296 + $0x8] sm:$0xff]
  %v299 = vld [vmem:[%s296 + $0x10] sm:$0xff]
  %v300 = vld [vmem:[%s296 + $0x18] sm:$0xff]
  %302 = vset.pattern.permute.xlu0 0
  %303 = vperm.xlu0 %302, %v297
  %v304 = vpop.permute.xlu0 %303
  %307 = vset.pattern.permute.xlu0 0
  %308 = vperm.xlu0 %307, %v298
  %v309 = vpop.permute.xlu0 %308
  %312 = vset.pattern.permute.xlu0 0
  %313 = vperm.xlu0 %312, %v299
  %v314 = vpop.permute.xlu0 %313
  %317 = vset.pattern.permute.xlu0 0
  %318 = vperm.xlu0 %317, %v300
  %v319 = vpop.permute.xlu0 %318
  %v321 = vmul.f32 %v292, %v304
  %v322 = vmul.f32 %v293, %v309
  %v323 = vmul.f32 %v294, %v314
  %v324 = vmul.f32 %v295, %v319
  %s325 = scalar_lea.vmem %s4, 128
  %v326 = vld [vmem:[%s325] sm:$0xff]
  %v327 = vld [vmem:[%s325 + $0x8] sm:$0xff]
  %v328 = vld [vmem:[%s325 + $0x10] sm:$0xff]
  %v329 = vld [vmem:[%s325 + $0x18] sm:$0xff]
  %v330 = vld [vmem:[%s325 + $0x20] sm:$0xff]
  %v331 = vld [vmem:[%s325 + $0x28] sm:$0xff]
  %v332 = vld [vmem:[%s325 + $0x30] sm:$0xff]
  %v333 = vld [vmem:[%s325 + $0x38] sm:$0xff]
  %v334 = vld [vmem:[%s325 + $0x40] sm:$0xff]
  %v335 = vld [vmem:[%s325 + $0x48] sm:$0xff]
  %v336 = vld [vmem:[%s325 + $0x50] sm:$0xff]
  %v337 = vld [vmem:[%s325 + $0x58] sm:$0xff]
  %v338 = vld [vmem:[%s325 + $0x60] sm:$0xff]
  %v339 = vld [vmem:[%s325 + $0x68] sm:$0xff]
  %v340 = vld [vmem:[%s325 + $0x70] sm:$0xff]
  %v341 = vld [vmem:[%s325 + $0x78] sm:$0xff]
  %342 = vxpose.xlu0.b32.start [1/16] %v321, 128
  %343 = vxpose.xlu0.b32.cont [2/16] %v322, 128
  %344 = vxpose.xlu0.b32.cont [3/16] %v323, 128
  %345 = vxpose.xlu0.b32.cont [4/16] %v324, 128
  %346 = vxpose.xlu0.b32.cont [5/16] 0.0, 128
  %347 = vxpose.xlu0.b32.cont [6/16] 0.0, 128
  %348 = vxpose.xlu0.b32.cont [7/16] 0.0, 128
  %349 = vxpose.xlu0.b32.cont [8/16] 0.0, 128
  %350 = vxpose.xlu0.b32.cont [9/16] 0.0, 128
  %351 = vxpose.xlu0.b32.cont [10/16] 0.0, 128
  %352 = vxpose.xlu0.b32.cont [11/16] 0.0, 128
  %353 = vxpose.xlu0.b32.cont [12/16] 0.0, 128
  %354 = vxpose.xlu0.b32.cont [13/16] 0.0, 128
  %355 = vxpose.xlu0.b32.cont [14/16] 0.0, 128
  %356 = vxpose.xlu0.b32.cont [15/16] 0.0, 128
  %357 = vxpose.xlu0.b32.end [16/16] 0.0, 128
  %v358 = vpop.trf.xlu0
  %v359 = vpop.trf.xlu0
  %v360 = vpop.trf.xlu0
  %v361 = vpop.trf.xlu0
  %v362 = vpop.trf.xlu0
  %v363 = vpop.trf.xlu0
  %v364 = vpop.trf.xlu0
  %v365 = vpop.trf.xlu0
  %v366 = vpop.trf.xlu0
  %v367 = vpop.trf.xlu0
  %v368 = vpop.trf.xlu0
  %v369 = vpop.trf.xlu0
  %v370 = vpop.trf.xlu0
  %v371 = vpop.trf.xlu0
  %v372 = vpop.trf.xlu0
  %v373 = vpop.trf.xlu0
  %v375 = vsel %vm141, %v358, 0
  %v378 = vsel %vm141, %v359, 0
  %v381 = vsel %vm141, %v360, 0
  %v384 = vsel %vm141, %v361, 0
  %v387 = vsel %vm141, %v362, 0
  %v390 = vsel %vm141, %v363, 0
  %v393 = vsel %vm141, %v364, 0
  %v396 = vsel %vm141, %v365, 0
  %v399 = vsel %vm141, %v366, 0
  %v402 = vsel %vm141, %v367, 0
  %v405 = vsel %vm141, %v368, 0
  %v408 = vsel %vm141, %v369, 0
  %v411 = vsel %vm141, %v370, 0
  %v414 = vsel %vm141, %v371, 0
  %v417 = vsel %vm141, %v372, 0
  %v420 = vsel %vm141, %v373, 0
  %422 = vmatpush.msra.mxu0 0.0
  %423 = vmatpush.msra.mxu0 0.0
  %424 = vmatpush.msra.mxu0 0.0
  %425 = vmatpush.msra.mxu0 0.0
  %426 = vmatpush.msra.mxu0 0.0
  %427 = vmatpush.msra.mxu0 0.0
  %428 = vmatpush.msra.mxu0 0.0
  %429 = vmatpush.msra.mxu0 0.0
  %430 = vmatpush.msra.mxu0 0.0
  %431 = vmatpush.msra.mxu0 0.0
  %432 = vmatpush.msra.mxu0 0.0
  %433 = vmatpush.msra.mxu0 0.0
  %434 = vmatpush.msra.mxu0 %v324
  %435 = vmatpush.msra.mxu0 %v323
  %436 = vmatpush.msra.mxu0 %v322
  %437 = vmatpush.msra.mxu0 %v321
  %438 = vmatmul.f32.gmra.mxu0 %v375
  %v439 = vpop.f32.mrf.mxu0
  %v440 = vadd.f32 0.0, %v439
  %441 = vmatmul.f32.gmra.mxu0 %v378
  %v442 = vpop.f32.mrf.mxu0
  %v443 = vadd.f32 0.0, %v442
  %444 = vmatmul.f32.gmra.mxu0 %v381
  %v445 = vpop.f32.mrf.mxu0
  %v446 = vadd.f32 0.0, %v445
  %447 = vmatmul.f32.gmra.mxu0 %v384
  %v448 = vpop.f32.mrf.mxu0
  %v449 = vadd.f32 0.0, %v448
  %450 = vmatmul.f32.gmra.mxu0 %v387
  %v451 = vpop.f32.mrf.mxu0
  %v452 = vadd.f32 0.0, %v451
  %453 = vmatmul.f32.gmra.mxu0 %v390
  %v454 = vpop.f32.mrf.mxu0
  %v455 = vadd.f32 0.0, %v454
  %456 = vmatmul.f32.gmra.mxu0 %v393
  %v457 = vpop.f32.mrf.mxu0
  %v458 = vadd.f32 0.0, %v457
  %459 = vmatmul.f32.gmra.mxu0 %v396
  %v460 = vpop.f32.mrf.mxu0
  %v461 = vadd.f32 0.0, %v460
  %462 = vmatmul.f32.gmra.mxu0 %v399
  %v463 = vpop.f32.mrf.mxu0
  %v464 = vadd.f32 0.0, %v463
  %465 = vmatmul.f32.gmra.mxu0 %v402
  %v466 = vpop.f32.mrf.mxu0
  %v467 = vadd.f32 0.0, %v466
  %468 = vmatmul.f32.gmra.mxu0 %v405
  %v469 = vpop.f32.mrf.mxu0
  %v470 = vadd.f32 0.0, %v469
  %471 = vmatmul.f32.gmra.mxu0 %v408
  %v472 = vpop.f32.mrf.mxu0
  %v473 = vadd.f32 0.0, %v472
  %474 = vmatmul.f32.gmra.mxu0 %v411
  %v475 = vpop.f32.mrf.mxu0
  %v476 = vadd.f32 0.0, %v475
  %477 = vmatmul.f32.gmra.mxu0 %v414
  %v478 = vpop.f32.mrf.mxu0
  %v479 = vadd.f32 0.0, %v478
  %480 = vmatmul.f32.gmra.mxu0 %v417
  %v481 = vpop.f32.mrf.mxu0
  %v482 = vadd.f32 0.0, %v481
  %483 = vmatmul.f32.gmra.mxu0 %v420
  %v484 = vpop.f32.mrf.mxu0
  %v485 = vadd.f32 0.0, %v484
  %486 = vdwg.mxu0
  %v487 = vadd.f32 %v326, %v440
  %v488 = vadd.f32 %v327, %v443
  %v489 = vadd.f32 %v328, %v446
  %v490 = vadd.f32 %v329, %v449
  %v491 = vadd.f32 %v330, %v452
  %v492 = vadd.f32 %v331, %v455
  %v493 = vadd.f32 %v332, %v458
  %v494 = vadd.f32 %v333, %v461
  %v495 = vadd.f32 %v334, %v464
  %v496 = vadd.f32 %v335, %v467
  %v497 = vadd.f32 %v336, %v470
  %v498 = vadd.f32 %v337, %v473
  %v499 = vadd.f32 %v338, %v476
  %v500 = vadd.f32 %v339, %v479
  %v501 = vadd.f32 %v340, %v482
  %v502 = vadd.f32 %v341, %v485
  %503 = vst [vmem:[%s325] sm:$0xff] %v487
  %504 = vst [vmem:[%s325 + $0x8] sm:$0xff] %v488
  %505 = vst [vmem:[%s325 + $0x10] sm:$0xff] %v489
  %506 = vst [vmem:[%s325 + $0x18] sm:$0xff] %v490
  %507 = vst [vmem:[%s325 + $0x20] sm:$0xff] %v491
  %508 = vst [vmem:[%s325 + $0x28] sm:$0xff] %v492
  %509 = vst [vmem:[%s325 + $0x30] sm:$0xff] %v493
  %510 = vst [vmem:[%s325 + $0x38] sm:$0xff] %v494
  %511 = vst [vmem:[%s325 + $0x40] sm:$0xff] %v495
  %512 = vst [vmem:[%s325 + $0x48] sm:$0xff] %v496
  %513 = vst [vmem:[%s325 + $0x50] sm:$0xff] %v497
  %514 = vst [vmem:[%s325 + $0x58] sm:$0xff] %v498
  %515 = vst [vmem:[%s325 + $0x60] sm:$0xff] %v499
  %516 = vst [vmem:[%s325 + $0x68] sm:$0xff] %v500
  %517 = vst [vmem:[%s325 + $0x70] sm:$0xff] %v501
  %518 = vst [vmem:[%s325 + $0x78] sm:$0xff] %v502
  // Predicated region
  $region22: #{graphconv_pny_forward.8} parent=0 // pred_check
    %p519 = pneg %p17
  $region23: #{graphconv_pny_forward.8} parent=0 // pred_check_branch
    %521 = sbr.rel (%p519) target = $region25
  $region24: #{graphconv_pny_forward.8} parent=0 // pred_region
    %v522 = vld [vmem:[%s4] sm:$0xff]
    %v523 = vld [vmem:[%s4 + $0x8] sm:$0xff]
    %v524 = vld [vmem:[%s4 + $0x10] sm:$0xff]
    %v525 = vld [vmem:[%s4 + $0x18] sm:$0xff]
    %v526 = vld [vmem:[%s4 + $0x20] sm:$0xff]
    %v527 = vld [vmem:[%s4 + $0x28] sm:$0xff]
    %v528 = vld [vmem:[%s4 + $0x30] sm:$0xff]
    %v529 = vld [vmem:[%s4 + $0x38] sm:$0xff]
    %v530 = vld [vmem:[%s4 + $0x40] sm:$0xff]
    %v531 = vld [vmem:[%s4 + $0x48] sm:$0xff]
    %v532 = vld [vmem:[%s4 + $0x50] sm:$0xff]
    %v533 = vld [vmem:[%s4 + $0x58] sm:$0xff]
    %v534 = vld [vmem:[%s4 + $0x60] sm:$0xff]
    %v535 = vld [vmem:[%s4 + $0x68] sm:$0xff]
    %v536 = vld [vmem:[%s4 + $0x70] sm:$0xff]
    %v537 = vld [vmem:[%s4 + $0x78] sm:$0xff]
    %v538 = vld [vmem:[%s4 + $0x80] sm:$0xff]
    %v539 = vld [vmem:[%s4 + $0x88] sm:$0xff]
    %v540 = vld [vmem:[%s4 + $0x90] sm:$0xff]
    %v541 = vld [vmem:[%s4 + $0x98] sm:$0xff]
    %v542 = vld [vmem:[%s4 + $0xa0] sm:$0xff]
    %v543 = vld [vmem:[%s4 + $0xa8] sm:$0xff]
    %v544 = vld [vmem:[%s4 + $0xb0] sm:$0xff]
    %v545 = vld [vmem:[%s4 + $0xb8] sm:$0xff]
    %v546 = vld [vmem:[%s4 + $0xc0] sm:$0xff]
    %v547 = vld [vmem:[%s4 + $0xc8] sm:$0xff]
    %v548 = vld [vmem:[%s4 + $0xd0] sm:$0xff]
    %v549 = vld [vmem:[%s4 + $0xd8] sm:$0xff]
    %v550 = vld [vmem:[%s4 + $0xe0] sm:$0xff]
    %v551 = vld [vmem:[%s4 + $0xe8] sm:$0xff]
    %v552 = vld [vmem:[%s4 + $0xf0] sm:$0xff]
    %v553 = vld [vmem:[%s4 + $0xf8] sm:$0xff]
    %v554 = vld [vmem:[%s3] sm:$0x1]
    %v555 = vld [vmem:[%s3 + $0x1] sm:$0x1]
    %v558 = vperm.slane %v554, 0
    %v559 = vperm.slane %v555, 0
    %560 = vset.pattern.permute.xlu0 0
    %561 = vperm.xlu0 %560, %v558
    %v562 = vpop.permute.xlu0 %561
    %564 = vset.pattern.permute.xlu0 0
    %565 = vperm.xlu0 %564, %v559
    %v566 = vpop.permute.xlu0 %565
    %v568 = vmul.f32 %v522, %v562
    %v569 = vmul.f32 %v523, %v562
    %v570 = vmul.f32 %v524, %v562
    %v571 = vmul.f32 %v525, %v562
    %v572 = vmul.f32 %v526, %v562
    %v573 = vmul.f32 %v527, %v562
    %v574 = vmul.f32 %v528, %v562
    %v575 = vmul.f32 %v529, %v562
    %v576 = vmul.f32 %v530, %v562
    %v577 = vmul.f32 %v531, %v562
    %v578 = vmul.f32 %v532, %v562
    %v579 = vmul.f32 %v533, %v562
    %v580 = vmul.f32 %v534, %v562
    %v581 = vmul.f32 %v535, %v562
    %v582 = vmul.f32 %v536, %v562
    %v583 = vmul.f32 %v537, %v562
    %v584 = vmul.f32 %v538, %v566
    %v585 = vmul.f32 %v539, %v566
    %v586 = vmul.f32 %v540, %v566
    %v587 = vmul.f32 %v541, %v566
    %v588 = vmul.f32 %v542, %v566
    %v589 = vmul.f32 %v543, %v566
    %v590 = vmul.f32 %v544, %v566
    %v591 = vmul.f32 %v545, %v566
    %v592 = vmul.f32 %v546, %v566
    %v593 = vmul.f32 %v547, %v566
    %v594 = vmul.f32 %v548, %v566
    %v595 = vmul.f32 %v549, %v566
    %v596 = vmul.f32 %v550, %v566
    %v597 = vmul.f32 %v551, %v566
    %v598 = vmul.f32 %v552, %v566
    %v599 = vmul.f32 %v553, %v566
    %600 = vst [vmem:[%s4] sm:$0xff] %v568
    %601 = vst [vmem:[%s4 + $0x8] sm:$0xff] %v569
    %602 = vst [vmem:[%s4 + $0x10] sm:$0xff] %v570
    %603 = vst [vmem:[%s4 + $0x18] sm:$0xff] %v571
    %604 = vst [vmem:[%s4 + $0x20] sm:$0xff] %v572
    %605 = vst [vmem:[%s4 + $0x28] sm:$0xff] %v573
    %606 = vst [vmem:[%s4 + $0x30] sm:$0xff] %v574
    %607 = vst [vmem:[%s4 + $0x38] sm:$0xff] %v575
    %608 = vst [vmem:[%s4 + $0x40] sm:$0xff] %v576
    %609 = vst [vmem:[%s4 + $0x48] sm:$0xff] %v577
    %610 = vst [vmem:[%s4 + $0x50] sm:$0xff] %v578
    %611 = vst [vmem:[%s4 + $0x58] sm:$0xff] %v579
    %612 = vst [vmem:[%s4 + $0x60] sm:$0xff] %v580
    %613 = vst [vmem:[%s4 + $0x68] sm:$0xff] %v581
    %614 = vst [vmem:[%s4 + $0x70] sm:$0xff] %v582
    %615 = vst [vmem:[%s4 + $0x78] sm:$0xff] %v583
    %616 = vst [vmem:[%s4 + $0x80] sm:$0xff] %v584
    %617 = vst [vmem:[%s4 + $0x88] sm:$0xff] %v585
    %618 = vst [vmem:[%s4 + $0x90] sm:$0xff] %v586
    %619 = vst [vmem:[%s4 + $0x98] sm:$0xff] %v587
    %620 = vst [vmem:[%s4 + $0xa0] sm:$0xff] %v588
    %621 = vst [vmem:[%s4 + $0xa8] sm:$0xff] %v589
    %622 = vst [vmem:[%s4 + $0xb0] sm:$0xff] %v590
    %623 = vst [vmem:[%s4 + $0xb8] sm:$0xff] %v591
    %624 = vst [vmem:[%s4 + $0xc0] sm:$0xff] %v592
    %625 = vst [vmem:[%s4 + $0xc8] sm:$0xff] %v593
    %626 = vst [vmem:[%s4 + $0xd0] sm:$0xff] %v594
    %627 = vst [vmem:[%s4 + $0xd8] sm:$0xff] %v595
    %628 = vst [vmem:[%s4 + $0xe0] sm:$0xff] %v596
    %629 = vst [vmem:[%s4 + $0xe8] sm:$0xff] %v597
    %630 = vst [vmem:[%s4 + $0xf0] sm:$0xff] %v598
    %631 = vst [vmem:[%s4 + $0xf8] sm:$0xff] %v599
  $region25: #{graphconv_pny_forward.8} parent=0 // pred_fallthru
    _
  // Predicated region
  $region26: #{graphconv_pny_forward.8} parent=0 // pred_check
    _
  $region27: #{graphconv_pny_forward.8} parent=0 // pred_check_branch
    %633 = sbr.rel (0) target = $region29
  $region28: #{graphconv_pny_forward.8} parent=0 // pred_region
    _
  $region29: #{graphconv_pny_forward.8} parent=0 // pred_fallthru
    _
  // Predicated region
  $region30: #{graphconv_pny_forward.8} parent=0 // pred_check
    _
  $region31: #{graphconv_pny_forward.8} parent=0 // pred_check_branch
    %635 = sbr.rel (0) target = $region33
  $region32: #{graphconv_pny_forward.8} parent=0 // pred_region
    _
  $region33: #{graphconv_pny_forward.8} parent=0 // pred_fallthru
    _

// kernel: custom-call.2
$region0: #{custom-call.2}
  %s0 = inlined_call_operand.vmem [shape: f32[2,4,4,4], index: 0, kind: input, shape index: {}]
  %s1 = inlined_call_operand.vmem [shape: f32[2,4,4,4], index: 1, kind: input, shape index: {}]
  %s2 = inlined_call_operand.vmem [shape: f32[2,4,4,4], index: 2, kind: input, shape index: {}]
  %s3 = inlined_call_operand.vmem [shape: f32[2,4,4,4], index: 3, kind: input, shape index: {}]
  %s4 = inlined_call_operand.vmem [shape: f32[2,4,4], index: 4, kind: output, shape index: {0}]
  %s5 = inlined_call_operand.vmem [shape: f32[2,4,4], index: 5, kind: output, shape index: {1}]
  %s6 = inlined_call_operand.vmem [shape: f32[2,4,4,4], index: 6, kind: output, shape index: {2}]
  %s7 = inlined_call_operand.vmem [shape: f32[2,4,4,4], index: 7, kind: output, shape index: {3}]
  %s8 = inlined_call_operand.vmem [shape: f32[2,4,4,4], index: 8, kind: output, shape index: {4}]
  %s9 = inlined_call_operand.vmem [shape: f32[2,4,4,4], index: 9, kind: output, shape index: {5}]
  %10 = xla_tuple %s4, %s5, %s6, %s7, %s8, %s9
  $region1: #{custom-call.2} parent=0
    #allocation0 [shape = 'u8[4096]{0}', space=vmem, size = 0x1000, scoped, tag = 'operand span for operand 0']
    #allocation1 [shape = 'u8[4096]{0}', space=vmem, size = 0x1000, scoped, tag = 'packed  for operand 0']
    #allocation2 [shape = 'u8[4096]{0}', space=vmem, size = 0x1000, scoped, tag = 'operand span for operand 1']
    #allocation3 [shape = 'u8[4096]{0}', space=vmem, size = 0x1000, scoped, tag = 'packed  for operand 1']
    #allocation4 [shape = 'u8[4096]{0}', space=vmem, size = 0x1000, scoped, tag = 'operand span for operand 2']
    #allocation5 [shape = 'u8[4096]{0}', space=vmem, size = 0x1000, scoped, tag = 'packed  for operand 2']
    #allocation6 [shape = 'u8[4096]{0}', space=vmem, size = 0x1000, scoped, tag = 'operand span for operand 3']
    #allocation7 [shape = 'u8[4096]{0}', space=vmem, size = 0x1000, scoped, tag = 'packed  for operand 3']
    #allocation8 [shape = 'u8[4096]{0}', space=vmem, size = 0x1000, scoped, tag = 'operand span for operand 4']
    #allocation9 [shape = 'u8[4096]{0}', space=vmem, size = 0x1000, scoped, tag = 'packed  for operand 4']
    #allocation10 [shape = 'u8[4096]{0}', space=vmem, size = 0x1000, scoped, tag = 'operand span for operand 5']
    #allocation11 [shape = 'u8[4096]{0}', space=vmem, size = 0x1000, scoped, tag = 'packed  for operand 5']
    #allocation12 [shape = 'u8[4096]{0}', space=vmem, size = 0x1000, scoped, tag = 'operand span for operand 6']
    #allocation13 [shape = 'u8[4096]{0}', space=vmem, size = 0x1000, scoped, tag = 'packed  for operand 6']
    #allocation14 [shape = 'u8[4096]{0}', space=vmem, size = 0x1000, scoped, tag = 'operand span for operand 7']
    #allocation15 [shape = 'u8[4096]{0}', space=vmem, size = 0x1000, scoped, tag = 'packed  for operand 7']
    #allocation16 [shape = 'u8[4096]{0}', space=vmem, size = 0x1000, scoped, tag = 'operand span for operand 8']
    #allocation17 [shape = 'u8[4096]{0}', space=vmem, size = 0x1000, scoped, tag = 'packed  for operand 8']
    #allocation18 [shape = 'u8[4096]{0}', space=vmem, size = 0x1000, scoped, tag = 'operand span for operand 9']
    #allocation19 [shape = 'u8[4096]{0}', space=vmem, size = 0x1000, scoped, tag = 'packed  for operand 9']
    loop: start=0, step=1, limit=10
    $region2: #{custom-call.2} parent=1 // loop_pre_header
      _
    $region3: #{custom-call.2} parent=1 // loop_header
      %s12 = sphi 0, %s16
      %p13 = scmp.ge.s32.totalorder %s12, 10
      %s19 = sphi 0, %s31
      %s20 = sphi 0, %s27
      %s21 = sphi 0, %s19
      %s22 = sphi 0, %s20
      %s23 = sphi 0, %s21
      %s24 = sphi 0, %s22
      %s38 = sphi 0, %s40
      %s41 = sphi 0, %s38
      %s42 = sphi 0, %s41
      %s58 = sphi 0, %s42
      %s68 = sphi 0, %s70
      %s71 = sphi 0, %s68
      %s72 = sphi 0, %s71
      %s88 = sphi 0, %s72
    $region4: #{custom-call.2} parent=1 // loop_header_branch
      %15 = sbr.rel (%p13) target = $region8
    $region5: #{custom-call.2} parent=1 // loop_body
      %s17 = ssub.s32 %s12, 1
      %s18 = ssub.s32 %s12, 2
      %s25 = sadd.s32 1, %s20
      %p26 = scmp.ge.s32.totalorder %s25, 4
      %s27 = scalar_select %p26, 0, %s25
      %s28 = sadd.s32 1, %s19
      %s29 = scalar_select %p26, %s28, %s19
      %p30 = scmp.ge.s32.totalorder %s29, 2
      %s31 = scalar_select %p30, 0, %s29
      %s32 = sshrl.u32 %s20, 3
      %s33 = sshrl.u32 %s27, 3
      %s34 = ssub.s32 %s19, %s31
      %s35 = ssub.s32 %s32, %s33
      %s36 = sor.u32 %s34, %s35
      %p37 = scmp.eq.s32.totalorder %s36, 0
      %s39 = sadd.s32 %s38, 1
      %s40 = scalar_select %p37, %s38, %s39
      %p43 = pneg %p37
      %p44 = scmp.eq.s32.totalorder %s12, 7
      %p45 = por %p43, %p44
      %p46 = scmp.ne.s32.totalorder %s38, %s41
      %p47 = scmp.eq.s32.totalorder %s12, 0
      %p48 = por %p46, %p47
      %p49 = scmp.ne.s32.totalorder %s38, %s41
      %p50 = scmp.eq.s32.totalorder %s17, 7
      %p51 = por %p49, %p50
      %p52 = scmp.ne.s32.totalorder %s41, %s42
      %p53 = scmp.eq.s32.totalorder %s17, 0
      %p54 = por %p52, %p53
      %p55 = scmp.ne.s32.totalorder %s41, %s42
      %p56 = scmp.eq.s32.totalorder %s18, 7
      %p57 = por %p55, %p56
      %p59 = scmp.ne.s32.totalorder %s42, %s58
      %p60 = scmp.eq.s32.totalorder %s18, 0
      %p61 = por %p59, %p60
      %s62 = sshrl.u32 %s20, 3
      %s63 = sshrl.u32 %s27, 3
      %s64 = ssub.s32 %s19, %s31
      %s65 = ssub.s32 %s62, %s63
      %s66 = sor.u32 %s64, %s65
      %p67 = scmp.eq.s32.totalorder %s66, 0
      %s69 = sadd.s32 %s68, 1
      %s70 = scalar_select %p67, %s68, %s69
      %p73 = pneg %p67
      %p74 = scmp.eq.s32.totalorder %s12, 7
      %p75 = por %p73, %p74
      %p76 = scmp.ne.s32.totalorder %s68, %s71
      %p77 = scmp.eq.s32.totalorder %s12, 0
      %p78 = por %p76, %p77
      %p79 = scmp.ne.s32.totalorder %s68, %s71
      %p80 = scmp.eq.s32.totalorder %s17, 7
      %p81 = por %p79, %p80
      %p82 = scmp.ne.s32.totalorder %s71, %s72
      %p83 = scmp.eq.s32.totalorder %s17, 0
      %p84 = por %p82, %p83
      %p85 = scmp.ne.s32.totalorder %s71, %s72
      %p86 = scmp.eq.s32.totalorder %s18, 7
      %p87 = por %p85, %p86
      %p89 = scmp.ne.s32.totalorder %s72, %s88
      %p90 = scmp.eq.s32.totalorder %s18, 0
      %p91 = por %p89, %p90
      %p92 = scmp.le.s32.totalorder 1, %s12
      %p93 = scmp.lt.s32.totalorder %s12, 9
      %p94 = pnand %p92, %p93
      %p95 = pneg %p94
      // Predicated region
      $region9: #{custom-call.2} parent=5 // pred_check
        _
      $region10: #{custom-call.2} parent=5 // pred_check_branch
        %97 = sbr.rel (%p94) target = $region12
      $region11: #{custom-call.2} parent=5 // pred_region
        %s98 = ssub.s32 %s12, 1
      $region12: #{custom-call.2} parent=5 // pred_fallthru
        _
      %p99 = scmp.lt.s32.totalorder %s12, 8
      // Predicated region
      $region13: #{custom-call.2} parent=5 // pred_check
        %p100 = pneg %p99
      $region14: #{custom-call.2} parent=5 // pred_check_branch
        %102 = sbr.rel (%p100) target = $region16
      $region15: #{custom-call.2} parent=5 // pred_region
        %s103 = sand.u32 %s12, 1
        %s104 = sand.u32 %s12, 1
        %s105 = smul.addr %s104, 4
        %s106 = scalar_lea.vmem [#allocation1], %s105
        %s107 = smul.addr %s19, 4
        %s108 = sadd.s32 %s20, %s107
        %s109 = smul.addr %s108, 4
        %s110 = scalar_lea.vmem %s0, %s109
        // Predicated region
        $region17: #{custom-call.2} parent=15 // pred_check
          _
        $region18: #{custom-call.2} parent=15 // pred_check_branch
          %112 = sbr.rel (0) target = $region20
        $region19: #{custom-call.2} parent=15 // pred_region
          // Predicated region
          $region21: #{custom-call.2} parent=19 // pred_check
            _
          $region22: #{custom-call.2} parent=19 // pred_check_branch
            %114 = sbr.rel target = $region24
          $region23: #{custom-call.2} parent=19 // pred_region
            // Predicated region
            $region36: #{custom-call.2} parent=23 // pred_check
              _
            $region37: #{custom-call.2} parent=23 // pred_check_branch
              %130 = sbr.rel (0) target = $region39
            $region38: #{custom-call.2} parent=23 // pred_region
              %s132 = ssub.s32 16, 1
              loop: start=0, step=1, limit=1
              $region40: #{custom-call.2} parent=38 // loop_pre_header
                _
              $region41: #{custom-call.2} parent=38 // loop_header
                %s134 = sphi 0, %s138
                %p135 = scmp.ge.s32.totalorder %s134, 1
                %s139 = sphi %s110, %s110
                %s140 = sphi %s106, %s106
              $region42: #{custom-call.2} parent=38 // loop_header_branch
                %137 = sbr.rel (%p135) target = $region46
              $region43: #{custom-call.2} parent=38 // loop_body
                %v141 = vld [vmem:[%s139] sm:%s132]
                %142 = vst [vmem:[%s140] sm:%s132] %v141
              $region44: #{custom-call.2} parent=38 // loop_footer
                %s138 = sadd.s32 1, %s134
              $region45: #{custom-call.2} parent=38 // loop_footer_branch
                %133 = sbr.rel target = $region41
              $region46: #{custom-call.2} parent=38 // loop_exit
                _
            $region39: #{custom-call.2} parent=23 // pred_fallthru
              _
          $region24: #{custom-call.2} parent=19 // pred_fallthru
            _
          // Predicated region
          $region25: #{custom-call.2} parent=19 // pred_check
            _
          $region26: #{custom-call.2} parent=19 // pred_check_branch
            %116 = sbr.rel (0) target = $region28
          $region27: #{custom-call.2} parent=19 // pred_region
            %s118 = ssub.s32 16, 1
            loop: start=0, step=1, limit=1
            $region29: #{custom-call.2} parent=27 // loop_pre_header
              _
            $region30: #{custom-call.2} parent=27 // loop_header
              %s120 = sphi 0, %s124
              %p121 = scmp.ge.s32.totalorder %s120, 1
              %s125 = sphi %s110, %s110
              %s126 = sphi %s106, %s106
            $region31: #{custom-call.2} parent=27 // loop_header_branch
              %123 = sbr.rel (%p121) target = $region35
            $region32: #{custom-call.2} parent=27 // loop_body
              %v127 = vld [vmem:[%s125] sm:%s118]
              %128 = vst [vmem:[%s126] sm:%s118] %v127
            $region33: #{custom-call.2} parent=27 // loop_footer
              %s124 = sadd.s32 1, %s120
            $region34: #{custom-call.2} parent=27 // loop_footer_branch
              %119 = sbr.rel target = $region30
            $region35: #{custom-call.2} parent=27 // loop_exit
              _
          $region28: #{custom-call.2} parent=19 // pred_fallthru
            _
        $region20: #{custom-call.2} parent=15 // pred_fallthru
          _
        %143 = vnop
        %s144 = sand.u32 %s12, 1
        %s145 = sand.u32 %s12, 1
        %s146 = smul.addr %s145, 4
        %s147 = scalar_lea.vmem [#allocation3], %s146
        %s148 = smul.addr %s19, 4
        %s149 = sadd.s32 %s20, %s148
        %s150 = smul.addr %s149, 4
        %s151 = scalar_lea.vmem %s1, %s150
        // Predicated region
        $region47: #{custom-call.2} parent=15 // pred_check
          _
        $region48: #{custom-call.2} parent=15 // pred_check_branch
          %153 = sbr.rel (0) target = $region50
        $region49: #{custom-call.2} parent=15 // pred_region
          // Predicated region
          $region51: #{custom-call.2} parent=49 // pred_check
            _
          $region52: #{custom-call.2} parent=49 // pred_check_branch
            %155 = sbr.rel target = $region54
          $region53: #{custom-call.2} parent=49 // pred_region
            // Predicated region
            $region66: #{custom-call.2} parent=53 // pred_check
              _
            $region67: #{custom-call.2} parent=53 // pred_check_branch
              %171 = sbr.rel (0) target = $region69
            $region68: #{custom-call.2} parent=53 // pred_region
              %s173 = ssub.s32 16, 1
              loop: start=0, step=1, limit=1
              $region70: #{custom-call.2} parent=68 // loop_pre_header
                _
              $region71: #{custom-call.2} parent=68 // loop_header
                %s175 = sphi 0, %s179
                %p176 = scmp.ge.s32.totalorder %s175, 1
                %s180 = sphi %s151, %s151
                %s181 = sphi %s147, %s147
              $region72: #{custom-call.2} parent=68 // loop_header_branch
                %178 = sbr.rel (%p176) target = $region76
              $region73: #{custom-call.2} parent=68 // loop_body
                %v182 = vld [vmem:[%s180] sm:%s173]
                %183 = vst [vmem:[%s181] sm:%s173] %v182
              $region74: #{custom-call.2} parent=68 // loop_footer
                %s179 = sadd.s32 1, %s175
              $region75: #{custom-call.2} parent=68 // loop_footer_branch
                %174 = sbr.rel target = $region71
              $region76: #{custom-call.2} parent=68 // loop_exit
                _
            $region69: #{custom-call.2} parent=53 // pred_fallthru
              _
          $region54: #{custom-call.2} parent=49 // pred_fallthru
            _
          // Predicated region
          $region55: #{custom-call.2} parent=49 // pred_check
            _
          $region56: #{custom-call.2} parent=49 // pred_check_branch
            %157 = sbr.rel (0) target = $region58
          $region57: #{custom-call.2} parent=49 // pred_region
            %s159 = ssub.s32 16, 1
            loop: start=0, step=1, limit=1
            $region59: #{custom-call.2} parent=57 // loop_pre_header
              _
            $region60: #{custom-call.2} parent=57 // loop_header
              %s161 = sphi 0, %s165
              %p162 = scmp.ge.s32.totalorder %s161, 1
              %s166 = sphi %s151, %s151
              %s167 = sphi %s147, %s147
            $region61: #{custom-call.2} parent=57 // loop_header_branch
              %164 = sbr.rel (%p162) target = $region65
            $region62: #{custom-call.2} parent=57 // loop_body
              %v168 = vld [vmem:[%s166] sm:%s159]
              %169 = vst [vmem:[%s167] sm:%s159] %v168
            $region63: #{custom-call.2} parent=57 // loop_footer
              %s165 = sadd.s32 1, %s161
            $region64: #{custom-call.2} parent=57 // loop_footer_branch
              %160 = sbr.rel target = $region60
            $region65: #{custom-call.2} parent=57 // loop_exit
              _
          $region58: #{custom-call.2} parent=49 // pred_fallthru
            _
        $region50: #{custom-call.2} parent=15 // pred_fallthru
          _
        %184 = vnop
        %s185 = sand.u32 %s12, 1
        %s186 = sand.u32 %s12, 1
        %s187 = smul.addr %s186, 4
        %s188 = scalar_lea.vmem [#allocation5], %s187
        %s189 = smul.addr %s19, 4
        %s190 = sadd.s32 %s20, %s189
        %s191 = smul.addr %s190, 4
        %s192 = scalar_lea.vmem %s2, %s191
        // Predicated region
        $region77: #{custom-call.2} parent=15 // pred_check
          _
        $region78: #{custom-call.2} parent=15 // pred_check_branch
          %194 = sbr.rel (0) target = $region80
        $region79: #{custom-call.2} parent=15 // pred_region
          // Predicated region
          $region81: #{custom-call.2} parent=79 // pred_check
            _
          $region82: #{custom-call.2} parent=79 // pred_check_branch
            %196 = sbr.rel target = $region84
          $region83: #{custom-call.2} parent=79 // pred_region
            // Predicated region
            $region96: #{custom-call.2} parent=83 // pred_check
              _
            $region97: #{custom-call.2} parent=83 // pred_check_branch
              %212 = sbr.rel (0) target = $region99
            $region98: #{custom-call.2} parent=83 // pred_region
              %s214 = ssub.s32 16, 1
              loop: start=0, step=1, limit=1
              $region100: #{custom-call.2} parent=98 // loop_pre_header
                _
              $region101: #{custom-call.2} parent=98 // loop_header
                %s216 = sphi 0, %s220
                %p217 = scmp.ge.s32.totalorder %s216, 1
                %s221 = sphi %s192, %s192
                %s222 = sphi %s188, %s188
              $region102: #{custom-call.2} parent=98 // loop_header_branch
                %219 = sbr.rel (%p217) target = $region106
              $region103: #{custom-call.2} parent=98 // loop_body
                %v223 = vld [vmem:[%s221] sm:%s214]
                %224 = vst [vmem:[%s222] sm:%s214] %v223
              $region104: #{custom-call.2} parent=98 // loop_footer
                %s220 = sadd.s32 1, %s216
              $region105: #{custom-call.2} parent=98 // loop_footer_branch
                %215 = sbr.rel target = $region101
              $region106: #{custom-call.2} parent=98 // loop_exit
                _
            $region99: #{custom-call.2} parent=83 // pred_fallthru
              _
          $region84: #{custom-call.2} parent=79 // pred_fallthru
            _
          // Predicated region
          $region85: #{custom-call.2} parent=79 // pred_check
            _
          $region86: #{custom-call.2} parent=79 // pred_check_branch
            %198 = sbr.rel (0) target = $region88
          $region87: #{custom-call.2} parent=79 // pred_region
            %s200 = ssub.s32 16, 1
            loop: start=0, step=1, limit=1
            $region89: #{custom-call.2} parent=87 // loop_pre_header
              _
            $region90: #{custom-call.2} parent=87 // loop_header
              %s202 = sphi 0, %s206
              %p203 = scmp.ge.s32.totalorder %s202, 1
              %s207 = sphi %s192, %s192
              %s208 = sphi %s188, %s188
            $region91: #{custom-call.2} parent=87 // loop_header_branch
              %205 = sbr.rel (%p203) target = $region95
            $region92: #{custom-call.2} parent=87 // loop_body
              %v209 = vld [vmem:[%s207] sm:%s200]
              %210 = vst [vmem:[%s208] sm:%s200] %v209
            $region93: #{custom-call.2} parent=87 // loop_footer
              %s206 = sadd.s32 1, %s202
            $region94: #{custom-call.2} parent=87 // loop_footer_branch
              %201 = sbr.rel target = $region90
            $region95: #{custom-call.2} parent=87 // loop_exit
              _
          $region88: #{custom-call.2} parent=79 // pred_fallthru
            _
        $region80: #{custom-call.2} parent=15 // pred_fallthru
          _
        %225 = vnop
        %s226 = sand.u32 %s12, 1
        %s227 = sand.u32 %s12, 1
        %s228 = smul.addr %s227, 4
        %s229 = scalar_lea.vmem [#allocation7], %s228
        %s230 = smul.addr %s19, 4
        %s231 = sadd.s32 %s20, %s230
        %s232 = smul.addr %s231, 4
        %s233 = scalar_lea.vmem %s3, %s232
        // Predicated region
        $region107: #{custom-call.2} parent=15 // pred_check
          _
        $region108: #{custom-call.2} parent=15 // pred_check_branch
          %235 = sbr.rel (0) target = $region110
        $region109: #{custom-call.2} parent=15 // pred_region
          // Predicated region
          $region111: #{custom-call.2} parent=109 // pred_check
            _
          $region112: #{custom-call.2} parent=109 // pred_check_branch
            %237 = sbr.rel target = $region114
          $region113: #{custom-call.2} parent=109 // pred_region
            // Predicated region
            $region126: #{custom-call.2} parent=113 // pred_check
              _
            $region127: #{custom-call.2} parent=113 // pred_check_branch
              %253 = sbr.rel (0) target = $region129
            $region128: #{custom-call.2} parent=113 // pred_region
              %s255 = ssub.s32 16, 1
              loop: start=0, step=1, limit=1
              $region130: #{custom-call.2} parent=128 // loop_pre_header
                _
              $region131: #{custom-call.2} parent=128 // loop_header
                %s257 = sphi 0, %s261
                %p258 = scmp.ge.s32.totalorder %s257, 1
                %s262 = sphi %s233, %s233
                %s263 = sphi %s229, %s229
              $region132: #{custom-call.2} parent=128 // loop_header_branch
                %260 = sbr.rel (%p258) target = $region136
              $region133: #{custom-call.2} parent=128 // loop_body
                %v264 = vld [vmem:[%s262] sm:%s255]
                %265 = vst [vmem:[%s263] sm:%s255] %v264
              $region134: #{custom-call.2} parent=128 // loop_footer
                %s261 = sadd.s32 1, %s257
              $region135: #{custom-call.2} parent=128 // loop_footer_branch
                %256 = sbr.rel target = $region131
              $region136: #{custom-call.2} parent=128 // loop_exit
                _
            $region129: #{custom-call.2} parent=113 // pred_fallthru
              _
          $region114: #{custom-call.2} parent=109 // pred_fallthru
            _
          // Predicated region
          $region115: #{custom-call.2} parent=109 // pred_check
            _
          $region116: #{custom-call.2} parent=109 // pred_check_branch
            %239 = sbr.rel (0) target = $region118
          $region117: #{custom-call.2} parent=109 // pred_region
            %s241 = ssub.s32 16, 1
            loop: start=0, step=1, limit=1
            $region119: #{custom-call.2} parent=117 // loop_pre_header
              _
            $region120: #{custom-call.2} parent=117 // loop_header
              %s243 = sphi 0, %s247
              %p244 = scmp.ge.s32.totalorder %s243, 1
              %s248 = sphi %s233, %s233
              %s249 = sphi %s229, %s229
            $region121: #{custom-call.2} parent=117 // loop_header_branch
              %246 = sbr.rel (%p244) target = $region125
            $region122: #{custom-call.2} parent=117 // loop_body
              %v250 = vld [vmem:[%s248] sm:%s241]
              %251 = vst [vmem:[%s249] sm:%s241] %v250
            $region123: #{custom-call.2} parent=117 // loop_footer
              %s247 = sadd.s32 1, %s243
            $region124: #{custom-call.2} parent=117 // loop_footer_branch
              %242 = sbr.rel target = $region120
            $region125: #{custom-call.2} parent=117 // loop_exit
              _
          $region118: #{custom-call.2} parent=109 // pred_fallthru
            _
        $region110: #{custom-call.2} parent=15 // pred_fallthru
          _
        %266 = vnop
      $region16: #{custom-call.2} parent=5 // pred_fallthru
        _
      %p267 = scmp.le.s32.totalorder 1, %s12
      %p268 = scmp.lt.s32.totalorder %s12, 9
      %p269 = pnand %p267, %p268
      %p270 = pneg %p269
      // Predicated region
      $region137: #{custom-call.2} parent=5 // pred_check
        _
      $region138: #{custom-call.2} parent=5 // pred_check_branch
        %272 = sbr.rel (%p269) target = $region140
      $region139: #{custom-call.2} parent=5 // pred_region
        #allocation20 [shape = 'f32[4,4]{1,0}', space=vmem, size = 0x1000, scoped, tag = 'a top-left matrix']
        #allocation21 [shape = 'f32[4,4]{1,0}', space=vmem, size = 0x1000, scoped, tag = 'a top-right matrix']
        #allocation22 [shape = 'f32[4,4]{1,0}', space=vmem, size = 0x1000, scoped, tag = 'a bottom-left matrix']
        #allocation23 [shape = 'f32[4,4]{1,0}', space=vmem, size = 0x1000, scoped, tag = 'a bottom-right matrix']
        %s273 = ssub.s32 %s12, 1
        %s274 = sand.u32 %s17, 1
        %s275 = sand.u32 %s17, 1
        %s276 = smul.addr %s275, 4
        %s277 = scalar_lea.vmem [#allocation1], %s276
        %s278 = sand.u32 %s17, 1
        %s279 = sand.u32 %s17, 1
        %s280 = smul.addr %s279, 4
        %s281 = scalar_lea.vmem [#allocation3], %s280
        %s282 = sand.u32 %s17, 1
        %s283 = sand.u32 %s17, 1
        %s284 = smul.addr %s283, 4
        %s285 = scalar_lea.vmem [#allocation5], %s284
        %s286 = sand.u32 %s17, 1
        %s287 = sand.u32 %s17, 1
        %s288 = smul.addr %s287, 4
        %s289 = scalar_lea.vmem [#allocation7], %s288
        %s290 = sand.u32 %s17, 1
        %s291 = sand.u32 %s17, 1
        %s292 = smul.addr %s291, 4
        %s293 = scalar_lea.vmem [#allocation1], %s292
        %s294 = sand.u32 %s17, 1
        %s295 = sand.u32 %s17, 1
        %s296 = smul.addr %s295, 4
        %s297 = scalar_lea.vmem [#allocation3], %s296
        %s298 = sand.u32 %s17, 1
        %s299 = sand.u32 %s17, 1
        %s300 = smul.addr %s299, 4
        %s301 = scalar_lea.vmem [#allocation5], %s300
        %s302 = sand.u32 %s17, 1
        %s303 = sand.u32 %s17, 1
        %s304 = smul.addr %s303, 4
        %s305 = scalar_lea.vmem [#allocation7], %s304
        %p306 = pneg %p54
        %p307 = pneg %p51
        %s308 = sand.u32 %s41, 1
        %s309 = sand.u32 %s41, 1
        %s310 = smul.addr %s309, 4
        %s311 = scalar_lea.vmem [#allocation9], %s310
        %p312 = pneg %p84
        %p313 = pneg %p81
        %s314 = sand.u32 %s71, 1
        %s315 = sand.u32 %s71, 1
        %s316 = smul.addr %s315, 4
        %s317 = scalar_lea.vmem [#allocation11], %s316
        %s318 = sand.u32 %s17, 1
        %s319 = sand.u32 %s17, 1
        %s320 = smul.addr %s319, 4
        %s321 = scalar_lea.vmem [#allocation13], %s320
        %s322 = sand.u32 %s17, 1
        %s323 = sand.u32 %s17, 1
        %s324 = smul.addr %s323, 4
        %s325 = scalar_lea.vmem [#allocation15], %s324
        %s326 = sand.u32 %s17, 1
        %s327 = sand.u32 %s17, 1
        %s328 = smul.addr %s327, 4
        %s329 = scalar_lea.vmem [#allocation17], %s328
        %s330 = sand.u32 %s17, 1
        %s331 = sand.u32 %s17, 1
        %s332 = smul.addr %s331, 4
        %s333 = scalar_lea.vmem [#allocation19], %s332
        %s335 = ssub.s32 16, 1
        %v336 = vld [vmem:[%s293] sm:%s335]
        %337 = vst [vmem:[#allocation0] sm:%s335] %v336
        %s339 = ssub.s32 16, 1
        %v340 = vld [vmem:[%s297] sm:%s339]
        %341 = vst [vmem:[#allocation2] sm:%s339] %v340
        %s343 = ssub.s32 16, 1
        %v344 = vld [vmem:[%s301] sm:%s343]
        %345 = vst [vmem:[#allocation4] sm:%s343] %v344
        %s347 = ssub.s32 16, 1
        %v348 = vld [vmem:[%s305] sm:%s347]
        %349 = vst [vmem:[#allocation6] sm:%s347] %v348
        %s350 = sshrl.u32 %s22, 3
        %s351 = sshrl.u32 %s22, 3
        %s352 = smov [#allocation20]
        %v353 = vld [vmem:[#allocation0] sm:$0xff]
        %354 = vst [vmem:[%s352] sm:$0xff] %v353
        %s355 = smov [#allocation21]
        %v356 = vld [vmem:[#allocation2] sm:$0xff]
        %357 = vst [vmem:[%s355] sm:$0xff] %v356
        %s358 = smov [#allocation22]
        %v359 = vld [vmem:[#allocation4] sm:$0xff]
        %360 = vst [vmem:[%s358] sm:$0xff] %v359
        %s361 = smov [#allocation23]
        %v362 = vld [vmem:[#allocation6] sm:$0xff]
        %363 = vst [vmem:[%s361] sm:$0xff] %v362
        %364 = vst [vmem:[#allocation12] sm:$0xff] 0.0
        %365 = vst [vmem:[#allocation14] sm:$0xff] 0.0
        %366 = vst [vmem:[#allocation16] sm:$0xff] 0.0
        %367 = vst [vmem:[#allocation18] sm:$0xff] 0.0
        %s368 = smov [#allocation12]
        %v369 = vlaneseq
        %v370 = vand.u32 %v369, 127
        %v371 = vmov %v370
        %v372 = vlaneseq
        %v373 = vshrl.u32 %v372, 7
        %v374 = vmov %v373
        %v375 = vld [vmem:[%s368] sm:$0xf]
        %vm378 = vcmp.eq.s32.totalorder %v374, %v371
        %v379 = vsel %vm378, 1.0, %v375
        %380 = vst [vmem:[%s368] sm:$0xf] %v379
        %s381 = smov [#allocation18]
        %v382 = vlaneseq
        %v383 = vand.u32 %v382, 127
        %v384 = vmov %v383
        %v385 = vlaneseq
        %v386 = vshrl.u32 %v385, 7
        %v387 = vmov %v386
        %v388 = vld [vmem:[%s381] sm:$0xf]
        %vm391 = vcmp.eq.s32.totalorder %v387, %v384
        %v392 = vsel %vm391, 1.0, %v388
        %393 = vst [vmem:[%s381] sm:$0xf] %v392
        // While loop
        $region141: #{custom-call.2} parent=139 // loop_pre_header
          _
        $region142: #{custom-call.2} parent=139 // loop_header
          %s395 = sphi 0, %s977
          %v396 = vlaneseq
          %v397 = vand.u32 %v396, 127
          %v398 = vmov %v397
          %v399 = vlaneseq
          %v400 = vshrl.u32 %v399, 7
          %v401 = vmov %v400
          %s402 = smov [#allocation20]
          %v403 = vlaneseq
          %v404 = vand.u32 %v403, 127
          %vm405 = vcmp.ge.s32.totalorder %v404, 0
          %vm406 = vcmp.lt.s32.totalorder %v404, 4
          %vm407 = vmand %vm405, %vm406
          %v408 = vld [vmem:[%s402] sm:$0xf]
          %v409 = vsel %vm407, %v408, 0.0
          %v410 = vmul.f32 %v409, %v409
          %vm413 = vcmp.eq.s32.totalorder %v401, %v398
          %v414 = vsel %vm413, 0.0, %v410
          %v415 = vlaneseq
          %v416 = vand.u32 %v415, 127
          %v417 = vmov %v416
          %v418 = vlaneseq
          %v419 = vshrl.u32 %v418, 7
          %v420 = vmov %v419
          %s421 = smov [#allocation21]
          %v422 = vlaneseq
          %v423 = vand.u32 %v422, 127
          %vm424 = vcmp.ge.s32.totalorder %v423, 0
          %vm425 = vcmp.lt.s32.totalorder %v423, 4
          %vm426 = vmand %vm424, %vm425
          %v427 = vld [vmem:[%s421] sm:$0xf]
          %v428 = vsel %vm426, %v427, 0.0
          %v429 = vmul.f32 %v428, %v428
          %v430 = vadd.f32 %v414, %v429
          %v431 = vadd.f32 %v410, %v429
          %v432 = vlaneseq
          %v433 = vand.u32 %v432, 127
          %v434 = vmov %v433
          %v435 = vlaneseq
          %v436 = vshrl.u32 %v435, 7
          %v437 = vmov %v436
          %s438 = smov [#allocation22]
          %v439 = vlaneseq
          %v440 = vand.u32 %v439, 127
          %vm441 = vcmp.ge.s32.totalorder %v440, 0
          %vm442 = vcmp.lt.s32.totalorder %v440, 4
          %vm443 = vmand %vm441, %vm442
          %v444 = vld [vmem:[%s438] sm:$0xf]
          %v445 = vsel %vm443, %v444, 0.0
          %v446 = vmul.f32 %v445, %v445
          %v447 = vadd.f32 %v430, %v446
          %v448 = vadd.f32 %v431, %v446
          %v449 = vlaneseq
          %v450 = vand.u32 %v449, 127
          %v451 = vmov %v450
          %v452 = vlaneseq
          %v453 = vshrl.u32 %v452, 7
          %v454 = vmov %v453
          %s455 = smov [#allocation23]
          %v456 = vlaneseq
          %v457 = vand.u32 %v456, 127
          %vm458 = vcmp.ge.s32.totalorder %v457, 0
          %vm459 = vcmp.lt.s32.totalorder %v457, 4
          %vm460 = vmand %vm458, %vm459
          %v461 = vld [vmem:[%s455] sm:$0xf]
          %v462 = vsel %vm460, %v461, 0.0
          %v463 = vmul.f32 %v462, %v462
          %vm466 = vcmp.eq.s32.totalorder %v454, %v451
          %v467 = vsel %vm466, 0.0, %v463
          %v468 = vadd.f32 %v447, %v467
          %v469 = vadd.f32 %v448, %v463
          %470 = vadd.xlane.f32.xlu0 %v469
          %v471 = vpop.xlane.xlu0 %470
          %v472 = vrot.slane %v471, 4
          %v473 = vadd.f32 %v471, %v472
          %v474 = vrot.slane %v473, 2
          %v475 = vadd.f32 %v473, %v474
          %v476 = vrot.slane %v475, 1
          %v477 = vadd.f32 %v475, %v476
          %478 = vadd.xlane.f32.xlu0 %v468
          %v479 = vpop.xlane.xlu0 %478
          %v480 = vrot.slane %v479, 4
          %v481 = vadd.f32 %v479, %v480
          %v482 = vrot.slane %v481, 2
          %v483 = vadd.f32 %v481, %v482
          %v484 = vrot.slane %v483, 1
          %v485 = vadd.f32 %v483, %v484
          %s486 = vtos %v485
          %s487 = vtos %v477
          %s488 = smul.f32 1e-10, %s487
          %p489 = scmp.le.f32.partialorder %s486, %s488
          %p490 = scmp.ge.s32.totalorder %s395, 15
          %p491 = por %p489, %p490
        $region143: #{custom-call.2} parent=139 // loop_header_branch
          %979 = sbr.rel (%p491) target = $region147
        $region144: #{custom-call.2} parent=139 // loop_body
          loop: start=0, step=1, limit=7
          $region148: #{custom-call.2} parent=144 // loop_pre_header
            _
          $region149: #{custom-call.2} parent=144 // loop_header
            %s493 = sphi 0, %s497
            %p494 = scmp.ge.s32.totalorder %s493, 7
          $region150: #{custom-call.2} parent=144 // loop_header_branch
            %496 = sbr.rel (%p494) target = $region154
          $region151: #{custom-call.2} parent=144 // loop_body
            #allocation24 [shape = 'f32[1024]{0}', space=vmem, size = 0x1000, scoped, tag = 'a_tl_diag vmem']
            #allocation25 [shape = 'f32[1024]{0}', space=vmem, size = 0x1000, scoped, tag = 'a_tr_diag vmem']
            #allocation26 [shape = 'f32[1024]{0}', space=vmem, size = 0x1000, scoped, tag = 'a_br_diag vmem']
            #allocation27 [shape = 'f32[1024]{0}', space=vmem, size = 0x1000, scoped, tag = 'rt1 vmem']
            #allocation28 [shape = 'f32[1024]{0}', space=vmem, size = 0x1000, scoped, tag = 'rt2 vmem']
            #allocation29 [shape = 'f32[1024]{0}', space=vmem, size = 0x1000, scoped, tag = 'c vmem']
            #allocation30 [shape = 'f32[1024]{0}', space=vmem, size = 0x1000, scoped, tag = 's vmem']
            #allocation31 [shape = 'f32[4096]{0}', space=vmem, size = 0x4000, scoped, tag = 'c broadcast']
            #allocation32 [shape = 'f32[4096]{0}', space=vmem, size = 0x4000, scoped, tag = 's broadcast']
            %s498 = smov [#allocation20]
            %s499 = smov [#allocation24]
            %v500 = vlaneseq
            %v501 = vand.u32 %v500, 127
            %v502 = vmov %v501
            %v503 = vlaneseq
            %v504 = vshrl.u32 %v503, 7
            %v505 = vmov %v504
            %v506 = vld [vmem:[%s498] sm:$0xf]
            %vm509 = vcmp.eq.s32.totalorder %v505, %v502
            %v510 = vsel %vm509, %v506, 0.0
            %v511 = vrot.slane %v510, 4
            %v512 = vadd.f32 %v510, %v511
            %v513 = vrot.slane %v512, 2
            %v514 = vadd.f32 %v512, %v513
            %v515 = vrot.slane %v514, 1
            %v516 = vadd.f32 %v514, %v515
            %517 = vst [vmem:[%s499] sm:$0x1] %v516
            %s518 = smov [#allocation21]
            %s519 = smov [#allocation25]
            %v520 = vlaneseq
            %v521 = vand.u32 %v520, 127
            %v522 = vmov %v521
            %v523 = vlaneseq
            %v524 = vshrl.u32 %v523, 7
            %v525 = vmov %v524
            %v526 = vld [vmem:[%s518] sm:$0xf]
            %vm529 = vcmp.eq.s32.totalorder %v525, %v522
            %v530 = vsel %vm529, %v526, 0.0
            %v531 = vrot.slane %v530, 4
            %v532 = vadd.f32 %v530, %v531
            %v533 = vrot.slane %v532, 2
            %v534 = vadd.f32 %v532, %v533
            %v535 = vrot.slane %v534, 1
            %v536 = vadd.f32 %v534, %v535
            %537 = vst [vmem:[%s519] sm:$0x1] %v536
            %s538 = smov [#allocation23]
            %s539 = smov [#allocation26]
            %v540 = vlaneseq
            %v541 = vand.u32 %v540, 127
            %v542 = vmov %v541
            %v543 = vlaneseq
            %v544 = vshrl.u32 %v543, 7
            %v545 = vmov %v544
            %v546 = vld [vmem:[%s538] sm:$0xf]
            %vm549 = vcmp.eq.s32.totalorder %v545, %v542
            %v550 = vsel %vm549, %v546, 0.0
            %v551 = vrot.slane %v550, 4
            %v552 = vadd.f32 %v550, %v551
            %v553 = vrot.slane %v552, 2
            %v554 = vadd.f32 %v552, %v553
            %v555 = vrot.slane %v554, 1
            %v556 = vadd.f32 %v554, %v555
            %557 = vst [vmem:[%s539] sm:$0x1] %v556
            %s558 = smov [#allocation29]
            %s559 = smov [#allocation30]
            %s560 = smov [#allocation24]
            %v561 = vld [vmem:[%s560] sm:$0xff]
            %s562 = smov [#allocation25]
            %v563 = vld [vmem:[%s562] sm:$0xff]
            %s564 = smov [#allocation26]
            %v565 = vld [vmem:[%s564] sm:$0xff]
            %v566 = vsub.f32 %v565, %v561
            %v567 = vmul.f32 2.0, %v563
            %v568 = vrcp.pop %v567
            %v569 = vmul.f32 %v567, %v568
            %v570 = vsub.f32 1.0, %v569
            %v571 = vmul.f32 %v568, %v570
            %v572 = vadd.f32 %v568, %v571
            %vm573 = vweird.f32 %v567
            %vm574 = vweird.f32 %v568
            %vm575 = vmor %vm573, %vm574
            %v576 = vsel %vm575, %v568, %v572
            %v577 = vand.u32 2147483647, %v567
            %vm578 = vcmp.eq.f32.partialorder %v577, 8.507059e+37
            %v579 = vand.u32 %v567, 2147483648
            %v580 = vor.u32 1.1754944e-38, %v579
            %v581 = vsel %vm578, %v580, %v576
            %v582 = vmul.f32 %v566, %v581
            %vm583 = vcmp.ge.f32.partialorder %v582, 0.0
            %v584 = vmul.f32 %v582, %v582
            %v585 = vadd.f32 1.0, %v584
            %v586 = vrsqrt.pop %v585
            %v587 = vmul.f32 %v586, %v585
            %v588 = vmul.f32 %v587, %v586
            %v589 = vmul.f32 0.5, %v588
            %v590 = vsub.f32 1.5, %v589
            %v591 = vmul.f32 %v586, %v590
            %v592 = vmul.f32 %v585, %v591
            %vm593 = vcmp.eq.f32.partialorder %v585, inf
            %v594 = vsel %vm593, %v585, %v592
            %vm595 = vcmp.eq.f32.partialorder %v585, 0.0
            %v596 = vand.u32 %v585, 2147483648
            %v597 = vsel %vm595, %v596, %v594
            %v598 = vxor.u32 %v597, 2147483648
            %v599 = vsel %vm583, %v597, %v598
            %v600 = vadd.f32 %v582, %v599
            %v601 = vrcp.pop %v600
            %v602 = vmul.f32 %v600, %v601
            %v603 = vsub.f32 1.0, %v602
            %v604 = vmul.f32 %v601, %v603
            %v605 = vadd.f32 %v601, %v604
            %vm606 = vweird.f32 %v600
            %vm607 = vweird.f32 %v601
            %vm608 = vmor %vm606, %vm607
            %v609 = vsel %vm608, %v601, %v605
            %v610 = vand.u32 2147483647, %v600
            %vm611 = vcmp.eq.f32.partialorder %v610, 8.507059e+37
            %v612 = vand.u32 %v600, 2147483648
            %v613 = vor.u32 1.1754944e-38, %v612
            %v614 = vsel %vm611, %v613, %v609
            %v615 = vand.u32 2147483647, %v561
            %v616 = vand.u32 2147483647, %v563
            %v617 = vand.u32 2147483647, %v565
            %v618 = vmin.f32 %v615, %v617
            %v619 = vmul.f32 1.1920929e-08, %v618
            %vm620 = vcmp.le.f32.partialorder %v616, %v619
            %v621 = vsel %vm620, 0.0, %v614
            %v622 = vmul.f32 %v621, %v621
            %v623 = vadd.f32 1.0, %v622
            %v624 = vrsqrt.pop %v623
            %v625 = vmul.f32 %v624, %v623
            %v626 = vmul.f32 %v625, %v624
            %v627 = vmul.f32 0.5, %v626
            %v628 = vsub.f32 1.5, %v627
            %v629 = vmul.f32 %v624, %v628
            %vm630 = vweird.f32 %v623
            %vm631 = vweird.f32 %v624
            %vm632 = vmor %vm630, %vm631
            %v633 = vsel %vm632, %v624, %v629
            %v634 = vmul.f32 %v621, %v633
            %v635 = vmul.f32 %v621, %v563
            %v636 = vsub.f32 %v561, %v635
            %v637 = vmul.f32 %v621, %v563
            %v638 = vadd.f32 %v565, %v637
            %s639 = smov [#allocation27]
            %640 = vst [vmem:[%s639] sm:$0xff] %v636
            %s641 = smov [#allocation28]
            %642 = vst [vmem:[%s641] sm:$0xff] %v638
            %s643 = smov %s558
            %644 = vst [vmem:[%s643] sm:$0xff] %v633
            %s645 = smov %s559
            %646 = vst [vmem:[%s645] sm:$0xff] %v634
            %s647 = smov [#allocation29]
            %v648 = vld [vmem:[%s647] ss:$0 sm:$0xff]
            %v649 = vlaneseq
            %v650 = vand.u32 %v649, 127
            %v651 = vmov %v650
            %v652 = vlaneseq
            %v653 = vshrl.u32 %v652, 7
            %v654 = vmov %v653
            %vm656 = vcmp.eq.s32.totalorder %v654, %v651
            %v657 = vsel %vm656, %v648, 0.0
            %658 = vadd.xlane.f32.xlu0 %v657
            %v659 = vpop.xlane.xlu0 %658
            %s660 = smov [#allocation31]
            %661 = vst [vmem:[%s660] sm:$0xff] %v659
            %s662 = smov [#allocation30]
            %v663 = vld [vmem:[%s662] ss:$0 sm:$0xff]
            %v664 = vlaneseq
            %v665 = vand.u32 %v664, 127
            %v666 = vmov %v665
            %v667 = vlaneseq
            %v668 = vshrl.u32 %v667, 7
            %v669 = vmov %v668
            %vm671 = vcmp.eq.s32.totalorder %v669, %v666
            %v672 = vsel %vm671, %v663, 0.0
            %673 = vadd.xlane.f32.xlu0 %v672
            %v674 = vpop.xlane.xlu0 %673
            %s675 = smov [#allocation32]
            %676 = vst [vmem:[%s675] sm:$0xff] %v674
            %s677 = smov [#allocation31]
            %v678 = vld [vmem:[%s677] sm:$0xff]
            %s679 = smov [#allocation32]
            %v680 = vld [vmem:[%s679] sm:$0xff]
            %s681 = smov [#allocation20]
            %s682 = smov [#allocation21]
            %s683 = smov [#allocation22]
            %s684 = smov [#allocation23]
            %v685 = vld [vmem:[%s681] sm:$0xf]
            %v686 = vld [vmem:[%s682] sm:$0xf]
            %v687 = vld [vmem:[%s683] sm:$0xf]
            %v688 = vld [vmem:[%s684] sm:$0xf]
            %v689 = vmul.f32 %v678, %v685
            %v690 = vmul.f32 %v680, %v687
            %v691 = vsub.f32 %v689, %v690
            %v692 = vmul.f32 %v678, %v686
            %v693 = vmul.f32 %v680, %v688
            %v694 = vsub.f32 %v692, %v693
            %v695 = vmul.f32 %v680, %v685
            %v696 = vmul.f32 %v678, %v687
            %v697 = vadd.f32 %v695, %v696
            %v698 = vmul.f32 %v680, %v686
            %v699 = vmul.f32 %v678, %v688
            %v700 = vadd.f32 %v698, %v699
            %701 = vst [vmem:[%s681] sm:$0xf] %v691
            %702 = vst [vmem:[%s682] sm:$0xf] %v694
            %703 = vst [vmem:[%s683] sm:$0xf] %v697
            %704 = vst [vmem:[%s684] sm:$0xf] %v700
            %s705 = smov [#allocation29]
            %v706 = vld [vmem:[%s705] ss:$0 sm:$0xff]
            %s707 = smov [#allocation30]
            %v708 = vld [vmem:[%s707] ss:$0 sm:$0xff]
            %s709 = smov [#allocation20]
            %s710 = smov [#allocation21]
            %s711 = smov [#allocation22]
            %s712 = smov [#allocation23]
            %v713 = vld [vmem:[%s709] sm:$0xf]
            %v714 = vld [vmem:[%s710] sm:$0xf]
            %v715 = vld [vmem:[%s711] sm:$0xf]
            %v716 = vld [vmem:[%s712] sm:$0xf]
            %v717 = vmul.f32 %v706, %v713
            %v718 = vmul.f32 %v708, %v714
            %v719 = vsub.f32 %v717, %v718
            %v720 = vmul.f32 %v708, %v713
            %v721 = vmul.f32 %v706, %v714
            %v722 = vadd.f32 %v720, %v721
            %v723 = vmul.f32 %v706, %v715
            %v724 = vmul.f32 %v708, %v716
            %v725 = vsub.f32 %v723, %v724
            %v726 = vmul.f32 %v708, %v715
            %v727 = vmul.f32 %v706, %v716
            %v728 = vadd.f32 %v726, %v727
            %729 = vst [vmem:[%s709] sm:$0xf] %v719
            %730 = vst [vmem:[%s710] sm:$0xf] %v722
            %731 = vst [vmem:[%s711] sm:$0xf] %v725
            %732 = vst [vmem:[%s712] sm:$0xf] %v728
            %s733 = smov [#allocation20]
            %s734 = smov [#allocation27]
            %v735 = vlaneseq
            %v736 = vand.u32 %v735, 127
            %v737 = vmov %v736
            %v738 = vlaneseq
            %v739 = vshrl.u32 %v738, 7
            %v740 = vmov %v739
            %v741 = vld [vmem:[%s734] ss:$0 sm:$0xff]
            %v742 = vld [vmem:[%s733] sm:$0xf]
            %vm745 = vcmp.eq.s32.totalorder %v740, %v737
            %v746 = vsel %vm745, %v741, %v742
            %747 = vst [vmem:[%s733] sm:$0xf] %v746
            %s748 = smov [#allocation21]
            %v749 = vlaneseq
            %v750 = vand.u32 %v749, 127
            %v751 = vmov %v750
            %v752 = vlaneseq
            %v753 = vshrl.u32 %v752, 7
            %v754 = vmov %v753
            %v755 = vld [vmem:[%s748] sm:$0xf]
            %vm758 = vcmp.eq.s32.totalorder %v754, %v751
            %v759 = vsel %vm758, 0.0, %v755
            %760 = vst [vmem:[%s748] sm:$0xf] %v759
            %s761 = smov [#allocation22]
            %v762 = vlaneseq
            %v763 = vand.u32 %v762, 127
            %v764 = vmov %v763
            %v765 = vlaneseq
            %v766 = vshrl.u32 %v765, 7
            %v767 = vmov %v766
            %v768 = vld [vmem:[%s761] sm:$0xf]
            %vm771 = vcmp.eq.s32.totalorder %v767, %v764
            %v772 = vsel %vm771, 0.0, %v768
            %773 = vst [vmem:[%s761] sm:$0xf] %v772
            %s774 = smov [#allocation23]
            %s775 = smov [#allocation28]
            %v776 = vlaneseq
            %v777 = vand.u32 %v776, 127
            %v778 = vmov %v777
            %v779 = vlaneseq
            %v780 = vshrl.u32 %v779, 7
            %v781 = vmov %v780
            %v782 = vld [vmem:[%s775] ss:$0 sm:$0xff]
            %v783 = vld [vmem:[%s774] sm:$0xf]
            %vm786 = vcmp.eq.s32.totalorder %v781, %v778
            %v787 = vsel %vm786, %v782, %v783
            %788 = vst [vmem:[%s774] sm:$0xf] %v787
            %s789 = smov [#allocation20]
            %s790 = smov [#allocation21]
            %v791 = vld [vmem:[%s790] sm:$0xf]
            %792 = vrot.lane.b32.xlu0 %v791, 1
            %v793 = vpop.permute.xlu0 %792
            %v794 = vld [vmem:[%s789] sm:$0xf]
            %v795 = vld [vmem:[%s789] sm:$0xf]
            %796 = vrot.lane.b32.xlu0 %v795, 1
            %v797 = vpop.permute.xlu0 %796
            %v798 = vlaneseq
            %v799 = vand.u32 %v798, 127
            %vm800 = vcmp.eq.s32.totalorder %v799, 0
            %v801 = vsel %vm800, %v795, %v797
            %v802 = vlaneseq
            %v803 = vand.u32 %v802, 127
            %vm804 = vcmp.eq.s32.totalorder %v803, 1
            %v805 = vsel %vm804, %v793, %v801
            %v806 = vlaneseq
            %v807 = vand.u32 %v806, 127
            %vm808 = vcmp.ge.s32.totalorder %v807, 0
            %vm809 = vcmp.lt.s32.totalorder %v807, 4
            %vm810 = vmand %vm808, %vm809
            %v811 = vsel %vm810, %v805, 0.0
            %v812 = vld [vmem:[%s790] sm:$0xf]
            %813 = vrot.lane.b32.xlu0 %v812, 127
            %v814 = vpop.permute.xlu0 %813
            %v815 = vlaneseq
            %v816 = vand.u32 %v815, 127
            %vm817 = vcmp.eq.s32.totalorder %v816, 3
            %v818 = vsel %vm817, %v794, %v814
            %819 = vst [vmem:[%s789] sm:$0xf] %v811
            %820 = vst [vmem:[%s790] sm:$0xf] %v818
            %s821 = smov [#allocation22]
            %s822 = smov [#allocation23]
            %v823 = vld [vmem:[%s822] sm:$0xf]
            %824 = vrot.lane.b32.xlu0 %v823, 1
            %v825 = vpop.permute.xlu0 %824
            %v826 = vld [vmem:[%s821] sm:$0xf]
            %v827 = vld [vmem:[%s821] sm:$0xf]
            %828 = vrot.lane.b32.xlu0 %v827, 1
            %v829 = vpop.permute.xlu0 %828
            %v830 = vlaneseq
            %v831 = vand.u32 %v830, 127
            %vm832 = vcmp.eq.s32.totalorder %v831, 0
            %v833 = vsel %vm832, %v827, %v829
            %v834 = vlaneseq
            %v835 = vand.u32 %v834, 127
            %vm836 = vcmp.eq.s32.totalorder %v835, 1
            %v837 = vsel %vm836, %v825, %v833
            %v838 = vlaneseq
            %v839 = vand.u32 %v838, 127
            %vm840 = vcmp.ge.s32.totalorder %v839, 0
            %vm841 = vcmp.lt.s32.totalorder %v839, 4
            %vm842 = vmand %vm840, %vm841
            %v843 = vsel %vm842, %v837, 0.0
            %v844 = vld [vmem:[%s822] sm:$0xf]
            %845 = vrot.lane.b32.xlu0 %v844, 127
            %v846 = vpop.permute.xlu0 %845
            %v847 = vlaneseq
            %v848 = vand.u32 %v847, 127
            %vm849 = vcmp.eq.s32.totalorder %v848, 3
            %v850 = vsel %vm849, %v826, %v846
            %851 = vst [vmem:[%s821] sm:$0xf] %v843
            %852 = vst [vmem:[%s822] sm:$0xf] %v850
            %s853 = smov [#allocation20]
            %s854 = smov [#allocation22]
            %v855 = vld [vmem:[%s853] ss:$0 sm:$0xff]
            %s857 = scalar_lea.vmem %s853, 4294967295
            %v858 = vld [vmem:[%s857] sm:$0xe]
            %v859 = vlaneseq
            %v860 = vshrl.u32 %v859, 7
            %vm861 = vcmp.eq.s32.totalorder %v860, 0
            %v862 = vsel %vm861, %v855, %v858
            %s863 = scalar_lea.vmem %s853, 3
            %v864 = vld [vmem:[%s863] ss:$0 sm:$0xff]
            %865 = vst [vmem:[%s853] sm:$0xf] %v862
            %v866 = vld [vmem:[%s854] ss:$0 sm:$0xff]
            %s867 = scalar_lea.vmem %s853, 1
            %868 = vst [vmem:[%s867] sm:$0x1] %v866
            %s869 = scalar_lea.vmem %s854, 1
            %v870 = vld [vmem:[%s869] sm:$0x7]
            %v871 = vlaneseq
            %v872 = vshrl.u32 %v871, 7
            %vm873 = vcmp.eq.s32.totalorder %v872, 3
            %v874 = vsel %vm873, %v864, %v870
            %v875 = vld [vmem:[%s854] ss:$0 sm:$0xff]
            %876 = vst [vmem:[%s854] sm:$0xf] %v874
            %s877 = smov [#allocation21]
            %s878 = smov [#allocation23]
            %v879 = vld [vmem:[%s877] ss:$0 sm:$0xff]
            %s881 = scalar_lea.vmem %s877, 4294967295
            %v882 = vld [vmem:[%s881] sm:$0xe]
            %v883 = vlaneseq
            %v884 = vshrl.u32 %v883, 7
            %vm885 = vcmp.eq.s32.totalorder %v884, 0
            %v886 = vsel %vm885, %v879, %v882
            %s887 = scalar_lea.vmem %s877, 3
            %v888 = vld [vmem:[%s887] ss:$0 sm:$0xff]
            %889 = vst [vmem:[%s877] sm:$0xf] %v886
            %v890 = vld [vmem:[%s878] ss:$0 sm:$0xff]
            %s891 = scalar_lea.vmem %s877, 1
            %892 = vst [vmem:[%s891] sm:$0x1] %v890
            %s893 = scalar_lea.vmem %s878, 1
            %v894 = vld [vmem:[%s893] sm:$0x7]
            %v895 = vlaneseq
            %v896 = vshrl.u32 %v895, 7
            %vm897 = vcmp.eq.s32.totalorder %v896, 3
            %v898 = vsel %vm897, %v888, %v894
            %v899 = vld [vmem:[%s878] ss:$0 sm:$0xff]
            %900 = vst [vmem:[%s878] sm:$0xf] %v898
            %s901 = smov [#allocation31]
            %v902 = vld [vmem:[%s901] sm:$0xff]
            %s903 = smov [#allocation32]
            %v904 = vld [vmem:[%s903] sm:$0xff]
            %s905 = smov [#allocation12]
            %s906 = smov [#allocation14]
            %s907 = smov [#allocation16]
            %s908 = smov [#allocation18]
            %v909 = vld [vmem:[%s905] sm:$0xf]
            %v910 = vld [vmem:[%s906] sm:$0xf]
            %v911 = vld [vmem:[%s907] sm:$0xf]
            %v912 = vld [vmem:[%s908] sm:$0xf]
            %v913 = vmul.f32 %v902, %v909
            %v914 = vmul.f32 %v904, %v911
            %v915 = vsub.f32 %v913, %v914
            %v916 = vmul.f32 %v902, %v910
            %v917 = vmul.f32 %v904, %v912
            %v918 = vsub.f32 %v916, %v917
            %v919 = vmul.f32 %v904, %v909
            %v920 = vmul.f32 %v902, %v911
            %v921 = vadd.f32 %v919, %v920
            %v922 = vmul.f32 %v904, %v910
            %v923 = vmul.f32 %v902, %v912
            %v924 = vadd.f32 %v922, %v923
            %925 = vst [vmem:[%s905] sm:$0xf] %v915
            %926 = vst [vmem:[%s906] sm:$0xf] %v918
            %927 = vst [vmem:[%s907] sm:$0xf] %v921
            %928 = vst [vmem:[%s908] sm:$0xf] %v924
            %s929 = smov [#allocation12]
            %s930 = smov [#allocation16]
            %v931 = vld [vmem:[%s929] ss:$0 sm:$0xff]
            %s933 = scalar_lea.vmem %s929, 4294967295
            %v934 = vld [vmem:[%s933] sm:$0xe]
            %v935 = vlaneseq
            %v936 = vshrl.u32 %v935, 7
            %vm937 = vcmp.eq.s32.totalorder %v936, 0
            %v938 = vsel %vm937, %v931, %v934
            %s939 = scalar_lea.vmem %s929, 3
            %v940 = vld [vmem:[%s939] ss:$0 sm:$0xff]
            %941 = vst [vmem:[%s929] sm:$0xf] %v938
            %v942 = vld [vmem:[%s930] ss:$0 sm:$0xff]
            %s943 = scalar_lea.vmem %s929, 1
            %944 = vst [vmem:[%s943] sm:$0x1] %v942
            %s945 = scalar_lea.vmem %s930, 1
            %v946 = vld [vmem:[%s945] sm:$0x7]
            %v947 = vlaneseq
            %v948 = vshrl.u32 %v947, 7
            %vm949 = vcmp.eq.s32.totalorder %v948, 3
            %v950 = vsel %vm949, %v940, %v946
            %v951 = vld [vmem:[%s930] ss:$0 sm:$0xff]
            %952 = vst [vmem:[%s930] sm:$0xf] %v950
            %s953 = smov [#allocation14]
            %s954 = smov [#allocation18]
            %v955 = vld [vmem:[%s953] ss:$0 sm:$0xff]
            %s957 = scalar_lea.vmem %s953, 4294967295
            %v958 = vld [vmem:[%s957] sm:$0xe]
            %v959 = vlaneseq
            %v960 = vshrl.u32 %v959, 7
            %vm961 = vcmp.eq.s32.totalorder %v960, 0
            %v962 = vsel %vm961, %v955, %v958
            %s963 = scalar_lea.vmem %s953, 3
            %v964 = vld [vmem:[%s963] ss:$0 sm:$0xff]
            %965 = vst [vmem:[%s953] sm:$0xf] %v962
            %v966 = vld [vmem:[%s954] ss:$0 sm:$0xff]
            %s967 = scalar_lea.vmem %s953, 1
            %968 = vst [vmem:[%s967] sm:$0x1] %v966
            %s969 = scalar_lea.vmem %s954, 1
            %v970 = vld [vmem:[%s969] sm:$0x7]
            %v971 = vlaneseq
            %v972 = vshrl.u32 %v971, 7
            %vm973 = vcmp.eq.s32.totalorder %v972, 3
            %v974 = vsel %vm973, %v964, %v970
            %v975 = vld [vmem:[%s954] ss:$0 sm:$0xff]
            %976 = vst [vmem:[%s954] sm:$0xf] %v974
          $region152: #{custom-call.2} parent=144 // loop_footer
            %s497 = sadd.s32 1, %s493
          $region153: #{custom-call.2} parent=144 // loop_footer_branch
            %492 = sbr.rel target = $region149
          $region154: #{custom-call.2} parent=144 // loop_exit
            _
          %s977 = sadd.s32 %s395, 1
        $region145: #{custom-call.2} parent=139 // loop_footer
          _
        $region146: #{custom-call.2} parent=139 // loop_footer_branch
          %394 = sbr.rel target = $region142
        $region147: #{custom-call.2} parent=139 // loop_exit
          _
        %s980 = sand.u32 %s22, 7
        %s981 = scalar_lea.vmem [#allocation8], %s980
        %s982 = sand.u32 %s22, 7
        %s983 = scalar_lea.vmem [#allocation10], %s982
        %s984 = smov [#allocation20]
        %s985 = smov %s981
        %v986 = vlaneseq
        %v987 = vand.u32 %v986, 127
        %v988 = vmov %v987
        %v989 = vlaneseq
        %v990 = vshrl.u32 %v989, 7
        %v991 = vmov %v990
        %v992 = vld [vmem:[%s984] sm:$0xf]
        %vm995 = vcmp.eq.s32.totalorder %v991, %v988
        %v996 = vsel %vm995, %v992, 0.0
        %v997 = vrot.slane %v996, 4
        %v998 = vadd.f32 %v996, %v997
        %v999 = vrot.slane %v998, 2
        %v1000 = vadd.f32 %v998, %v999
        %v1001 = vrot.slane %v1000, 1
        %v1002 = vadd.f32 %v1000, %v1001
        %1003 = vst [vmem:[%s985] sm:$0x1] %v1002
        %s1004 = smov [#allocation23]
        %s1005 = smov %s983
        %v1006 = vlaneseq
        %v1007 = vand.u32 %v1006, 127
        %v1008 = vmov %v1007
        %v1009 = vlaneseq
        %v1010 = vshrl.u32 %v1009, 7
        %v1011 = vmov %v1010
        %v1012 = vld [vmem:[%s1004] sm:$0xf]
        %vm1015 = vcmp.eq.s32.totalorder %v1011, %v1008
        %v1016 = vsel %vm1015, %v1012, 0.0
        %v1017 = vrot.slane %v1016, 4
        %v1018 = vadd.f32 %v1016, %v1017
        %v1019 = vrot.slane %v1018, 2
        %v1020 = vadd.f32 %v1018, %v1019
        %v1021 = vrot.slane %v1020, 1
        %v1022 = vadd.f32 %v1020, %v1021
        %1023 = vst [vmem:[%s1005] sm:$0x1] %v1022
        %s1025 = ssub.s32 16, 1
        %v1026 = vld [vmem:[#allocation8] sm:%s1025]
        %s1028 = ssub.s32 16, 1
        %1029 = vst [vmem:[%s311] sm:%s1028] %v1026
        %s1031 = ssub.s32 16, 1
        %v1032 = vld [vmem:[#allocation10] sm:%s1031]
        %s1034 = ssub.s32 16, 1
        %1035 = vst [vmem:[%s317] sm:%s1034] %v1032
        %s1037 = ssub.s32 16, 1
        %v1038 = vld [vmem:[#allocation12] sm:%s1037]
        %s1040 = ssub.s32 16, 1
        %1041 = vst [vmem:[%s321] sm:%s1040] %v1038
        %s1043 = ssub.s32 16, 1
        %v1044 = vld [vmem:[#allocation14] sm:%s1043]
        %s1046 = ssub.s32 16, 1
        %1047 = vst [vmem:[%s325] sm:%s1046] %v1044
        %s1049 = ssub.s32 16, 1
        %v1050 = vld [vmem:[#allocation16] sm:%s1049]
        %s1052 = ssub.s32 16, 1
        %1053 = vst [vmem:[%s329] sm:%s1052] %v1050
        %s1055 = ssub.s32 16, 1
        %v1056 = vld [vmem:[#allocation18] sm:%s1055]
        %s1058 = ssub.s32 16, 1
        %1059 = vst [vmem:[%s333] sm:%s1058] %v1056
        %s1060 = sand.u32 %s41, 1
        %s1061 = sand.u32 %s41, 1
        %s1062 = smul.addr %s1061, 4
        %s1063 = scalar_lea.vmem [#allocation9], %s1062
        %s1064 = sand.u32 %s71, 1
        %s1065 = sand.u32 %s71, 1
        %s1066 = smul.addr %s1065, 4
        %s1067 = scalar_lea.vmem [#allocation11], %s1066
        %s1068 = sand.u32 %s17, 1
        %s1069 = sand.u32 %s17, 1
        %s1070 = smul.addr %s1069, 4
        %s1071 = scalar_lea.vmem [#allocation13], %s1070
        %s1072 = sand.u32 %s17, 1
        %s1073 = sand.u32 %s17, 1
        %s1074 = smul.addr %s1073, 4
        %s1075 = scalar_lea.vmem [#allocation15], %s1074
        %s1076 = sand.u32 %s17, 1
        %s1077 = sand.u32 %s17, 1
        %s1078 = smul.addr %s1077, 4
        %s1079 = scalar_lea.vmem [#allocation17], %s1078
        %s1080 = sand.u32 %s17, 1
        %s1081 = sand.u32 %s17, 1
        %s1082 = smul.addr %s1081, 4
        %s1083 = scalar_lea.vmem [#allocation19], %s1082
        // Predicated region
        $region155: #{custom-call.2} parent=139 // pred_check
          %p1084 = pneg %p51
        $region156: #{custom-call.2} parent=139 // pred_check_branch
          %1086 = sbr.rel (%p1084) target = $region158
        $region157: #{custom-call.2} parent=139 // pred_region
          %s1087 = sshrl.u32 %s22, 3
          %s1088 = sadd.s32 %s1087, %s21
          %s1089 = smul.addr %s1088, 4
          %s1090 = scalar_lea.vmem %s4, %s1089
          // Predicated region
          $region159: #{custom-call.2} parent=157 // pred_check
            _
          $region160: #{custom-call.2} parent=157 // pred_check_branch
            %1092 = sbr.rel (0) target = $region162
          $region161: #{custom-call.2} parent=157 // pred_region
            // Predicated region
            $region163: #{custom-call.2} parent=161 // pred_check
              _
            $region164: #{custom-call.2} parent=161 // pred_check_branch
              %1094 = sbr.rel target = $region166
            $region165: #{custom-call.2} parent=161 // pred_region
              // Predicated region
              $region178: #{custom-call.2} parent=165 // pred_check
                _
              $region179: #{custom-call.2} parent=165 // pred_check_branch
                %1110 = sbr.rel (0) target = $region181
              $region180: #{custom-call.2} parent=165 // pred_region
                %s1112 = ssub.s32 16, 1
                loop: start=0, step=1, limit=1
                $region182: #{custom-call.2} parent=180 // loop_pre_header
                  _
                $region183: #{custom-call.2} parent=180 // loop_header
                  %s1114 = sphi 0, %s1118
                  %p1115 = scmp.ge.s32.totalorder %s1114, 1
                  %s1119 = sphi %s1063, %s1063
                  %s1120 = sphi %s1090, %s1090
                $region184: #{custom-call.2} parent=180 // loop_header_branch
                  %1117 = sbr.rel (%p1115) target = $region188
                $region185: #{custom-call.2} parent=180 // loop_body
                  %v1121 = vld [vmem:[%s1119] sm:%s1112]
                  %1122 = vst [vmem:[%s1120] sm:%s1112] %v1121
                $region186: #{custom-call.2} parent=180 // loop_footer
                  %s1118 = sadd.s32 1, %s1114
                $region187: #{custom-call.2} parent=180 // loop_footer_branch
                  %1113 = sbr.rel target = $region183
                $region188: #{custom-call.2} parent=180 // loop_exit
                  _
              $region181: #{custom-call.2} parent=165 // pred_fallthru
                _
            $region166: #{custom-call.2} parent=161 // pred_fallthru
              _
            // Predicated region
            $region167: #{custom-call.2} parent=161 // pred_check
              _
            $region168: #{custom-call.2} parent=161 // pred_check_branch
              %1096 = sbr.rel (0) target = $region170
            $region169: #{custom-call.2} parent=161 // pred_region
              %s1098 = ssub.s32 16, 1
              loop: start=0, step=1, limit=1
              $region171: #{custom-call.2} parent=169 // loop_pre_header
                _
              $region172: #{custom-call.2} parent=169 // loop_header
                %s1100 = sphi 0, %s1104
                %p1101 = scmp.ge.s32.totalorder %s1100, 1
                %s1105 = sphi %s1063, %s1063
                %s1106 = sphi %s1090, %s1090
              $region173: #{custom-call.2} parent=169 // loop_header_branch
                %1103 = sbr.rel (%p1101) target = $region177
              $region174: #{custom-call.2} parent=169 // loop_body
                %v1107 = vld [vmem:[%s1105] sm:%s1098]
                %1108 = vst [vmem:[%s1106] sm:%s1098] %v1107
              $region175: #{custom-call.2} parent=169 // loop_footer
                %s1104 = sadd.s32 1, %s1100
              $region176: #{custom-call.2} parent=169 // loop_footer_branch
                %1099 = sbr.rel target = $region172
              $region177: #{custom-call.2} parent=169 // loop_exit
                _
            $region170: #{custom-call.2} parent=161 // pred_fallthru
              _
          $region162: #{custom-call.2} parent=157 // pred_fallthru
            _
          %1123 = vnop
        $region158: #{custom-call.2} parent=139 // pred_fallthru
          _
        // Predicated region
        $region189: #{custom-call.2} parent=139 // pred_check
          %p1124 = pneg %p81
        $region190: #{custom-call.2} parent=139 // pred_check_branch
          %1126 = sbr.rel (%p1124) target = $region192
        $region191: #{custom-call.2} parent=139 // pred_region
          %s1127 = sshrl.u32 %s22, 3
          %s1128 = sadd.s32 %s1127, %s21
          %s1129 = smul.addr %s1128, 4
          %s1130 = scalar_lea.vmem %s5, %s1129
          // Predicated region
          $region193: #{custom-call.2} parent=191 // pred_check
            _
          $region194: #{custom-call.2} parent=191 // pred_check_branch
            %1132 = sbr.rel (0) target = $region196
          $region195: #{custom-call.2} parent=191 // pred_region
            // Predicated region
            $region197: #{custom-call.2} parent=195 // pred_check
              _
            $region198: #{custom-call.2} parent=195 // pred_check_branch
              %1134 = sbr.rel target = $region200
            $region199: #{custom-call.2} parent=195 // pred_region
              // Predicated region
              $region212: #{custom-call.2} parent=199 // pred_check
                _
              $region213: #{custom-call.2} parent=199 // pred_check_branch
                %1150 = sbr.rel (0) target = $region215
              $region214: #{custom-call.2} parent=199 // pred_region
                %s1152 = ssub.s32 16, 1
                loop: start=0, step=1, limit=1
                $region216: #{custom-call.2} parent=214 // loop_pre_header
                  _
                $region217: #{custom-call.2} parent=214 // loop_header
                  %s1154 = sphi 0, %s1158
                  %p1155 = scmp.ge.s32.totalorder %s1154, 1
                  %s1159 = sphi %s1067, %s1067
                  %s1160 = sphi %s1130, %s1130
                $region218: #{custom-call.2} parent=214 // loop_header_branch
                  %1157 = sbr.rel (%p1155) target = $region222
                $region219: #{custom-call.2} parent=214 // loop_body
                  %v1161 = vld [vmem:[%s1159] sm:%s1152]
                  %1162 = vst [vmem:[%s1160] sm:%s1152] %v1161
                $region220: #{custom-call.2} parent=214 // loop_footer
                  %s1158 = sadd.s32 1, %s1154
                $region221: #{custom-call.2} parent=214 // loop_footer_branch
                  %1153 = sbr.rel target = $region217
                $region222: #{custom-call.2} parent=214 // loop_exit
                  _
              $region215: #{custom-call.2} parent=199 // pred_fallthru
                _
            $region200: #{custom-call.2} parent=195 // pred_fallthru
              _
            // Predicated region
            $region201: #{custom-call.2} parent=195 // pred_check
              _
            $region202: #{custom-call.2} parent=195 // pred_check_branch
              %1136 = sbr.rel (0) target = $region204
            $region203: #{custom-call.2} parent=195 // pred_region
              %s1138 = ssub.s32 16, 1
              loop: start=0, step=1, limit=1
              $region205: #{custom-call.2} parent=203 // loop_pre_header
                _
              $region206: #{custom-call.2} parent=203 // loop_header
                %s1140 = sphi 0, %s1144
                %p1141 = scmp.ge.s32.totalorder %s1140, 1
                %s1145 = sphi %s1067, %s1067
                %s1146 = sphi %s1130, %s1130
              $region207: #{custom-call.2} parent=203 // loop_header_branch
                %1143 = sbr.rel (%p1141) target = $region211
              $region208: #{custom-call.2} parent=203 // loop_body
                %v1147 = vld [vmem:[%s1145] sm:%s1138]
                %1148 = vst [vmem:[%s1146] sm:%s1138] %v1147
              $region209: #{custom-call.2} parent=203 // loop_footer
                %s1144 = sadd.s32 1, %s1140
              $region210: #{custom-call.2} parent=203 // loop_footer_branch
                %1139 = sbr.rel target = $region206
              $region211: #{custom-call.2} parent=203 // loop_exit
                _
            $region204: #{custom-call.2} parent=195 // pred_fallthru
              _
          $region196: #{custom-call.2} parent=191 // pred_fallthru
            _
          %1163 = vnop
        $region192: #{custom-call.2} parent=139 // pred_fallthru
          _
        %s1164 = smul.addr %s21, 4
        %s1165 = sadd.s32 %s22, %s1164
        %s1166 = smul.addr %s1165, 4
        %s1167 = scalar_lea.vmem %s6, %s1166
        // Predicated region
        $region223: #{custom-call.2} parent=139 // pred_check
          _
        $region224: #{custom-call.2} parent=139 // pred_check_branch
          %1169 = sbr.rel (0) target = $region226
        $region225: #{custom-call.2} parent=139 // pred_region
          // Predicated region
          $region227: #{custom-call.2} parent=225 // pred_check
            _
          $region228: #{custom-call.2} parent=225 // pred_check_branch
            %1171 = sbr.rel target = $region230
          $region229: #{custom-call.2} parent=225 // pred_region
            // Predicated region
            $region242: #{custom-call.2} parent=229 // pred_check
              _
            $region243: #{custom-call.2} parent=229 // pred_check_branch
              %1187 = sbr.rel (0) target = $region245
            $region244: #{custom-call.2} parent=229 // pred_region
              %s1189 = ssub.s32 16, 1
              loop: start=0, step=1, limit=1
              $region246: #{custom-call.2} parent=244 // loop_pre_header
                _
              $region247: #{custom-call.2} parent=244 // loop_header
                %s1191 = sphi 0, %s1195
                %p1192 = scmp.ge.s32.totalorder %s1191, 1
                %s1196 = sphi %s1071, %s1071
                %s1197 = sphi %s1167, %s1167
              $region248: #{custom-call.2} parent=244 // loop_header_branch
                %1194 = sbr.rel (%p1192) target = $region252
              $region249: #{custom-call.2} parent=244 // loop_body
                %v1198 = vld [vmem:[%s1196] sm:%s1189]
                %1199 = vst [vmem:[%s1197] sm:%s1189] %v1198
              $region250: #{custom-call.2} parent=244 // loop_footer
                %s1195 = sadd.s32 1, %s1191
              $region251: #{custom-call.2} parent=244 // loop_footer_branch
                %1190 = sbr.rel target = $region247
              $region252: #{custom-call.2} parent=244 // loop_exit
                _
            $region245: #{custom-call.2} parent=229 // pred_fallthru
              _
          $region230: #{custom-call.2} parent=225 // pred_fallthru
            _
          // Predicated region
          $region231: #{custom-call.2} parent=225 // pred_check
            _
          $region232: #{custom-call.2} parent=225 // pred_check_branch
            %1173 = sbr.rel (0) target = $region234
          $region233: #{custom-call.2} parent=225 // pred_region
            %s1175 = ssub.s32 16, 1
            loop: start=0, step=1, limit=1
            $region235: #{custom-call.2} parent=233 // loop_pre_header
              _
            $region236: #{custom-call.2} parent=233 // loop_header
              %s1177 = sphi 0, %s1181
              %p1178 = scmp.ge.s32.totalorder %s1177, 1
              %s1182 = sphi %s1071, %s1071
              %s1183 = sphi %s1167, %s1167
            $region237: #{custom-call.2} parent=233 // loop_header_branch
              %1180 = sbr.rel (%p1178) target = $region241
            $region238: #{custom-call.2} parent=233 // loop_body
              %v1184 = vld [vmem:[%s1182] sm:%s1175]
              %1185 = vst [vmem:[%s1183] sm:%s1175] %v1184
            $region239: #{custom-call.2} parent=233 // loop_footer
              %s1181 = sadd.s32 1, %s1177
            $region240: #{custom-call.2} parent=233 // loop_footer_branch
              %1176 = sbr.rel target = $region236
            $region241: #{custom-call.2} parent=233 // loop_exit
              _
          $region234: #{custom-call.2} parent=225 // pred_fallthru
            _
        $region226: #{custom-call.2} parent=139 // pred_fallthru
          _
        %1200 = vnop
        %s1201 = smul.addr %s21, 4
        %s1202 = sadd.s32 %s22, %s1201
        %s1203 = smul.addr %s1202, 4
        %s1204 = scalar_lea.vmem %s7, %s1203
        // Predicated region
        $region253: #{custom-call.2} parent=139 // pred_check
          _
        $region254: #{custom-call.2} parent=139 // pred_check_branch
          %1206 = sbr.rel (0) target = $region256
        $region255: #{custom-call.2} parent=139 // pred_region
          // Predicated region
          $region257: #{custom-call.2} parent=255 // pred_check
            _
          $region258: #{custom-call.2} parent=255 // pred_check_branch
            %1208 = sbr.rel target = $region260
          $region259: #{custom-call.2} parent=255 // pred_region
            // Predicated region
            $region272: #{custom-call.2} parent=259 // pred_check
              _
            $region273: #{custom-call.2} parent=259 // pred_check_branch
              %1224 = sbr.rel (0) target = $region275
            $region274: #{custom-call.2} parent=259 // pred_region
              %s1226 = ssub.s32 16, 1
              loop: start=0, step=1, limit=1
              $region276: #{custom-call.2} parent=274 // loop_pre_header
                _
              $region277: #{custom-call.2} parent=274 // loop_header
                %s1228 = sphi 0, %s1232
                %p1229 = scmp.ge.s32.totalorder %s1228, 1
                %s1233 = sphi %s1075, %s1075
                %s1234 = sphi %s1204, %s1204
              $region278: #{custom-call.2} parent=274 // loop_header_branch
                %1231 = sbr.rel (%p1229) target = $region282
              $region279: #{custom-call.2} parent=274 // loop_body
                %v1235 = vld [vmem:[%s1233] sm:%s1226]
                %1236 = vst [vmem:[%s1234] sm:%s1226] %v1235
              $region280: #{custom-call.2} parent=274 // loop_footer
                %s1232 = sadd.s32 1, %s1228
              $region281: #{custom-call.2} parent=274 // loop_footer_branch
                %1227 = sbr.rel target = $region277
              $region282: #{custom-call.2} parent=274 // loop_exit
                _
            $region275: #{custom-call.2} parent=259 // pred_fallthru
              _
          $region260: #{custom-call.2} parent=255 // pred_fallthru
            _
          // Predicated region
          $region261: #{custom-call.2} parent=255 // pred_check
            _
          $region262: #{custom-call.2} parent=255 // pred_check_branch
            %1210 = sbr.rel (0) target = $region264
          $region263: #{custom-call.2} parent=255 // pred_region
            %s1212 = ssub.s32 16, 1
            loop: start=0, step=1, limit=1
            $region265: #{custom-call.2} parent=263 // loop_pre_header
              _
            $region266: #{custom-call.2} parent=263 // loop_header
              %s1214 = sphi 0, %s1218
              %p1215 = scmp.ge.s32.totalorder %s1214, 1
              %s1219 = sphi %s1075, %s1075
              %s1220 = sphi %s1204, %s1204
            $region267: #{custom-call.2} parent=263 // loop_header_branch
              %1217 = sbr.rel (%p1215) target = $region271
            $region268: #{custom-call.2} parent=263 // loop_body
              %v1221 = vld [vmem:[%s1219] sm:%s1212]
              %1222 = vst [vmem:[%s1220] sm:%s1212] %v1221
            $region269: #{custom-call.2} parent=263 // loop_footer
              %s1218 = sadd.s32 1, %s1214
            $region270: #{custom-call.2} parent=263 // loop_footer_branch
              %1213 = sbr.rel target = $region266
            $region271: #{custom-call.2} parent=263 // loop_exit
              _
          $region264: #{custom-call.2} parent=255 // pred_fallthru
            _
        $region256: #{custom-call.2} parent=139 // pred_fallthru
          _
        %1237 = vnop
        %s1238 = smul.addr %s21, 4
        %s1239 = sadd.s32 %s22, %s1238
        %s1240 = smul.addr %s1239, 4
        %s1241 = scalar_lea.vmem %s8, %s1240
        // Predicated region
        $region283: #{custom-call.2} parent=139 // pred_check
          _
        $region284: #{custom-call.2} parent=139 // pred_check_branch
          %1243 = sbr.rel (0) target = $region286
        $region285: #{custom-call.2} parent=139 // pred_region
          // Predicated region
          $region287: #{custom-call.2} parent=285 // pred_check
            _
          $region288: #{custom-call.2} parent=285 // pred_check_branch
            %1245 = sbr.rel target = $region290
          $region289: #{custom-call.2} parent=285 // pred_region
            // Predicated region
            $region302: #{custom-call.2} parent=289 // pred_check
              _
            $region303: #{custom-call.2} parent=289 // pred_check_branch
              %1261 = sbr.rel (0) target = $region305
            $region304: #{custom-call.2} parent=289 // pred_region
              %s1263 = ssub.s32 16, 1
              loop: start=0, step=1, limit=1
              $region306: #{custom-call.2} parent=304 // loop_pre_header
                _
              $region307: #{custom-call.2} parent=304 // loop_header
                %s1265 = sphi 0, %s1269
                %p1266 = scmp.ge.s32.totalorder %s1265, 1
                %s1270 = sphi %s1079, %s1079
                %s1271 = sphi %s1241, %s1241
              $region308: #{custom-call.2} parent=304 // loop_header_branch
                %1268 = sbr.rel (%p1266) target = $region312
              $region309: #{custom-call.2} parent=304 // loop_body
                %v1272 = vld [vmem:[%s1270] sm:%s1263]
                %1273 = vst [vmem:[%s1271] sm:%s1263] %v1272
              $region310: #{custom-call.2} parent=304 // loop_footer
                %s1269 = sadd.s32 1, %s1265
              $region311: #{custom-call.2} parent=304 // loop_footer_branch
                %1264 = sbr.rel target = $region307
              $region312: #{custom-call.2} parent=304 // loop_exit
                _
            $region305: #{custom-call.2} parent=289 // pred_fallthru
              _
          $region290: #{custom-call.2} parent=285 // pred_fallthru
            _
          // Predicated region
          $region291: #{custom-call.2} parent=285 // pred_check
            _
          $region292: #{custom-call.2} parent=285 // pred_check_branch
            %1247 = sbr.rel (0) target = $region294
          $region293: #{custom-call.2} parent=285 // pred_region
            %s1249 = ssub.s32 16, 1
            loop: start=0, step=1, limit=1
            $region295: #{custom-call.2} parent=293 // loop_pre_header
              _
            $region296: #{custom-call.2} parent=293 // loop_header
              %s1251 = sphi 0, %s1255
              %p1252 = scmp.ge.s32.totalorder %s1251, 1
              %s1256 = sphi %s1079, %s1079
              %s1257 = sphi %s1241, %s1241
            $region297: #{custom-call.2} parent=293 // loop_header_branch
              %1254 = sbr.rel (%p1252) target = $region301
            $region298: #{custom-call.2} parent=293 // loop_body
              %v1258 = vld [vmem:[%s1256] sm:%s1249]
              %1259 = vst [vmem:[%s1257] sm:%s1249] %v1258
            $region299: #{custom-call.2} parent=293 // loop_footer
              %s1255 = sadd.s32 1, %s1251
            $region300: #{custom-call.2} parent=293 // loop_footer_branch
              %1250 = sbr.rel target = $region296
            $region301: #{custom-call.2} parent=293 // loop_exit
              _
          $region294: #{custom-call.2} parent=285 // pred_fallthru
            _
        $region286: #{custom-call.2} parent=139 // pred_fallthru
          _
        %1274 = vnop
        %s1275 = smul.addr %s21, 4
        %s1276 = sadd.s32 %s22, %s1275
        %s1277 = smul.addr %s1276, 4
        %s1278 = scalar_lea.vmem %s9, %s1277
        // Predicated region
        $region313: #{custom-call.2} parent=139 // pred_check
          _
        $region314: #{custom-call.2} parent=139 // pred_check_branch
          %1280 = sbr.rel (0) target = $region316
        $region315: #{custom-call.2} parent=139 // pred_region
          // Predicated region
          $region317: #{custom-call.2} parent=315 // pred_check
            _
          $region318: #{custom-call.2} parent=315 // pred_check_branch
            %1282 = sbr.rel target = $region320
          $region319: #{custom-call.2} parent=315 // pred_region
            // Predicated region
            $region332: #{custom-call.2} parent=319 // pred_check
              _
            $region333: #{custom-call.2} parent=319 // pred_check_branch
              %1298 = sbr.rel (0) target = $region335
            $region334: #{custom-call.2} parent=319 // pred_region
              %s1300 = ssub.s32 16, 1
              loop: start=0, step=1, limit=1
              $region336: #{custom-call.2} parent=334 // loop_pre_header
                _
              $region337: #{custom-call.2} parent=334 // loop_header
                %s1302 = sphi 0, %s1306
                %p1303 = scmp.ge.s32.totalorder %s1302, 1
                %s1307 = sphi %s1083, %s1083
                %s1308 = sphi %s1278, %s1278
              $region338: #{custom-call.2} parent=334 // loop_header_branch
                %1305 = sbr.rel (%p1303) target = $region342
              $region339: #{custom-call.2} parent=334 // loop_body
                %v1309 = vld [vmem:[%s1307] sm:%s1300]
                %1310 = vst [vmem:[%s1308] sm:%s1300] %v1309
              $region340: #{custom-call.2} parent=334 // loop_footer
                %s1306 = sadd.s32 1, %s1302
              $region341: #{custom-call.2} parent=334 // loop_footer_branch
                %1301 = sbr.rel target = $region337
              $region342: #{custom-call.2} parent=334 // loop_exit
                _
            $region335: #{custom-call.2} parent=319 // pred_fallthru
              _
          $region320: #{custom-call.2} parent=315 // pred_fallthru
            _
          // Predicated region
          $region321: #{custom-call.2} parent=315 // pred_check
            _
          $region322: #{custom-call.2} parent=315 // pred_check_branch
            %1284 = sbr.rel (0) target = $region324
          $region323: #{custom-call.2} parent=315 // pred_region
            %s1286 = ssub.s32 16, 1
            loop: start=0, step=1, limit=1
            $region325: #{custom-call.2} parent=323 // loop_pre_header
              _
            $region326: #{custom-call.2} parent=323 // loop_header
              %s1288 = sphi 0, %s1292
              %p1289 = scmp.ge.s32.totalorder %s1288, 1
              %s1293 = sphi %s1083, %s1083
              %s1294 = sphi %s1278, %s1278
            $region327: #{custom-call.2} parent=323 // loop_header_branch
              %1291 = sbr.rel (%p1289) target = $region331
            $region328: #{custom-call.2} parent=323 // loop_body
              %v1295 = vld [vmem:[%s1293] sm:%s1286]
              %1296 = vst [vmem:[%s1294] sm:%s1286] %v1295
            $region329: #{custom-call.2} parent=323 // loop_footer
              %s1292 = sadd.s32 1, %s1288
            $region330: #{custom-call.2} parent=323 // loop_footer_branch
              %1287 = sbr.rel target = $region326
            $region331: #{custom-call.2} parent=323 // loop_exit
              _
          $region324: #{custom-call.2} parent=315 // pred_fallthru
            _
        $region316: #{custom-call.2} parent=139 // pred_fallthru
          _
        %1311 = vnop
      $region140: #{custom-call.2} parent=5 // pred_fallthru
        _
      %p1312 = scmp.le.s32.totalorder 2, %s12
      // Predicated region
      $region343: #{custom-call.2} parent=5 // pred_check
        %p1313 = pneg %p1312
      $region344: #{custom-call.2} parent=5 // pred_check_branch
        %1315 = sbr.rel (%p1313) target = $region346
      $region345: #{custom-call.2} parent=5 // pred_region
        %s1316 = ssub.s32 %s12, 2
        // Predicated region
        $region347: #{custom-call.2} parent=345 // pred_check
          %p1317 = pneg %p57
        $region348: #{custom-call.2} parent=345 // pred_check_branch
          %1319 = sbr.rel (%p1317) target = $region350
        $region349: #{custom-call.2} parent=345 // pred_region
          %s1320 = sand.u32 %s42, 1
          %s1321 = sand.u32 %s42, 1
          %s1322 = smul.addr %s1321, 4
          %s1323 = scalar_lea.vmem [#allocation9], %s1322
        $region350: #{custom-call.2} parent=345 // pred_fallthru
          _
        // Predicated region
        $region351: #{custom-call.2} parent=345 // pred_check
          %p1324 = pneg %p87
        $region352: #{custom-call.2} parent=345 // pred_check_branch
          %1326 = sbr.rel (%p1324) target = $region354
        $region353: #{custom-call.2} parent=345 // pred_region
          %s1327 = sand.u32 %s72, 1
          %s1328 = sand.u32 %s72, 1
          %s1329 = smul.addr %s1328, 4
          %s1330 = scalar_lea.vmem [#allocation11], %s1329
        $region354: #{custom-call.2} parent=345 // pred_fallthru
          _
        %s1331 = sand.u32 %s18, 1
        %s1332 = sand.u32 %s18, 1
        %s1333 = smul.addr %s1332, 4
        %s1334 = scalar_lea.vmem [#allocation13], %s1333
        %s1335 = sand.u32 %s18, 1
        %s1336 = sand.u32 %s18, 1
        %s1337 = smul.addr %s1336, 4
        %s1338 = scalar_lea.vmem [#allocation15], %s1337
        %s1339 = sand.u32 %s18, 1
        %s1340 = sand.u32 %s18, 1
        %s1341 = smul.addr %s1340, 4
        %s1342 = scalar_lea.vmem [#allocation17], %s1341
        %s1343 = sand.u32 %s18, 1
        %s1344 = sand.u32 %s18, 1
        %s1345 = smul.addr %s1344, 4
        %s1346 = scalar_lea.vmem [#allocation19], %s1345
      $region346: #{custom-call.2} parent=5 // pred_fallthru
        _
    $region6: #{custom-call.2} parent=1 // loop_footer
      %s16 = sadd.s32 1, %s12
    $region7: #{custom-call.2} parent=1 // loop_footer_branch
      %11 = sbr.rel target = $region3
    $region8: #{custom-call.2} parent=1 // loop_exit
      _

// kernel: graphconv_pny_forward.11
$region0: #{graphconv_pny_forward.11}
  #allocation0 [shape = 'u32[]', space=smem, size = 0x4, offset = 0x4, fixed_abs, tag = 'smem constant byte address 0x4 - core index']
  #allocation1 [shape = 'u32[72,128]{1,0:T(1,128)}', space=vmem, size = 0x9000, scoped, tag = 'internal scratch']
  %s0 = inlined_call_operand.vmem [shape: f32[32,128], index: 0, kind: input, shape index: {}]
  %s1 = inlined_call_operand.vmem [shape: f32[128,128], index: 1, kind: input, shape index: {}]
  %s2 = inlined_call_operand.vmem [shape: f32[1,128], index: 2, kind: input, shape index: {}]
  %s3 = inlined_call_operand.vmem [shape: f32[32,128], index: 3, kind: output, shape index: {}]
  %s4 = sld [smem:[#allocation0]]
  $region22: #{graphconv_pny_forward.11} parent=0
    _
  %s6 = ssub.s32 1, %s4
  %s7 = scalar_select 0, %s6, %s4
  // Predicated region
  $region2: #{graphconv_pny_forward.11} parent=0 // pred_check
    _
  $region3: #{graphconv_pny_forward.11} parent=0 // pred_check_branch
    %9 = sbr.rel (0) target = $region5
  $region4: #{graphconv_pny_forward.11} parent=0 // pred_region
    _
  $region5: #{graphconv_pny_forward.11} parent=0 // pred_fallthru
    _
  // Predicated region
  $region6: #{graphconv_pny_forward.11} parent=0 // pred_check
    _
  $region7: #{graphconv_pny_forward.11} parent=0 // pred_check_branch
    %11 = sbr.rel (0) target = $region9
  $region8: #{graphconv_pny_forward.11} parent=0 // pred_region
    _
  $region9: #{graphconv_pny_forward.11} parent=0 // pred_fallthru
    _
  // Predicated region
  $region10: #{graphconv_pny_forward.11} parent=0 // pred_check
    _
  $region11: #{graphconv_pny_forward.11} parent=0 // pred_check_branch
    %13 = sbr.rel (0) target = $region13
  $region12: #{graphconv_pny_forward.11} parent=0 // pred_region
    _
  $region13: #{graphconv_pny_forward.11} parent=0 // pred_fallthru
    _
  %v14 = vld [vmem:[%s0] sm:$0xff]
  %v15 = vld [vmem:[%s0 + $0x8] sm:$0xff]
  %v16 = vld [vmem:[%s0 + $0x10] sm:$0xff]
  %v17 = vld [vmem:[%s0 + $0x18] sm:$0xff]
  %v18 = vld [vmem:[%s1] sm:$0xff]
  %v19 = vld [vmem:[%s1 + $0x8] sm:$0xff]
  %v20 = vld [vmem:[%s1 + $0x10] sm:$0xff]
  %v21 = vld [vmem:[%s1 + $0x18] sm:$0xff]
  %v22 = vld [vmem:[%s1 + $0x20] sm:$0xff]
  %v23 = vld [vmem:[%s1 + $0x28] sm:$0xff]
  %v24 = vld [vmem:[%s1 + $0x30] sm:$0xff]
  %v25 = vld [vmem:[%s1 + $0x38] sm:$0xff]
  %v26 = vld [vmem:[%s1 + $0x40] sm:$0xff]
  %v27 = vld [vmem:[%s1 + $0x48] sm:$0xff]
  %v28 = vld [vmem:[%s1 + $0x50] sm:$0xff]
  %v29 = vld [vmem:[%s1 + $0x58] sm:$0xff]
  %v30 = vld [vmem:[%s1 + $0x60] sm:$0xff]
  %v31 = vld [vmem:[%s1 + $0x68] sm:$0xff]
  %v32 = vld [vmem:[%s1 + $0x70] sm:$0xff]
  %v33 = vld [vmem:[%s1 + $0x78] sm:$0xff]
  %v34 = vld [vmem:[%s2] sm:$0x1]
  %v36 = vperm.slane %v34, 0
  %38 = vmatpush.msra.mxu0 %v33
  %39 = vmatpush.msra.mxu0 %v32
  %40 = vmatpush.msra.mxu0 %v31
  %41 = vmatpush.msra.mxu0 %v30
  %42 = vmatpush.msra.mxu0 %v29
  %43 = vmatpush.msra.mxu0 %v28
  %44 = vmatpush.msra.mxu0 %v27
  %45 = vmatpush.msra.mxu0 %v26
  %46 = vmatpush.msra.mxu0 %v25
  %47 = vmatpush.msra.mxu0 %v24
  %48 = vmatpush.msra.mxu0 %v23
  %49 = vmatpush.msra.mxu0 %v22
  %50 = vmatpush.msra.mxu0 %v21
  %51 = vmatpush.msra.mxu0 %v20
  %52 = vmatpush.msra.mxu0 %v19
  %53 = vmatpush.msra.mxu0 %v18
  %54 = vmatmul.f32.gmra.mxu0 %v14
  %v55 = vpop.f32.mrf.mxu0
  %v56 = vadd.f32 %v36, %v55
  %57 = vmatmul.f32.gmra.mxu0 %v15
  %v58 = vpop.f32.mrf.mxu0
  %v59 = vadd.f32 %v36, %v58
  %60 = vmatmul.f32.gmra.mxu0 %v16
  %v61 = vpop.f32.mrf.mxu0
  %v62 = vadd.f32 %v36, %v61
  %63 = vmatmul.f32.gmra.mxu0 %v17
  %v64 = vpop.f32.mrf.mxu0
  %v65 = vadd.f32 %v36, %v64
  %66 = vdwg.mxu0
  %67 = vst [vmem:[%s3] sm:$0xff] %v56
  %68 = vst [vmem:[%s3 + $0x8] sm:$0xff] %v59
  %69 = vst [vmem:[%s3 + $0x10] sm:$0xff] %v62
  %70 = vst [vmem:[%s3 + $0x18] sm:$0xff] %v65
  // Predicated region
  $region14: #{graphconv_pny_forward.11} parent=0 // pred_check
    _
  $region15: #{graphconv_pny_forward.11} parent=0 // pred_check_branch
    %72 = sbr.rel (0) target = $region17
  $region16: #{graphconv_pny_forward.11} parent=0 // pred_region
    _
  $region17: #{graphconv_pny_forward.11} parent=0 // pred_fallthru
    _
  // Predicated region
  $region18: #{graphconv_pny_forward.11} parent=0 // pred_check
    _
  $region19: #{graphconv_pny_forward.11} parent=0 // pred_check_branch
    %74 = sbr.rel (0) target = $region21
  $region20: #{graphconv_pny_forward.11} parent=0 // pred_region
    _
  $region21: #{graphconv_pny_forward.11} parent=0 // pred_fallthru
    _

// kernel: graphconv_pny_forward.10
$region0: #{graphconv_pny_forward.10}
  #allocation0 [shape = 'u32[]', space=smem, size = 0x4, offset = 0x4, fixed_abs, tag = 'smem constant byte address 0x4 - core index']
  #allocation1 [shape = 'u32[72,128]{1,0:T(1,128)}', space=vmem, size = 0x9000, scoped, tag = 'internal scratch']
  %s0 = inlined_call_operand.vmem [shape: f32[32,128], index: 0, kind: input, shape index: {}]
  %s1 = inlined_call_operand.vmem [shape: f32[4,128,128], index: 1, kind: input, shape index: {}]
  %s2 = inlined_call_operand.vmem [shape: f32[4,1,128], index: 2, kind: input, shape index: {}]
  %s3 = inlined_call_operand.vmem [shape: f32[4,32,1], index: 3, kind: input, shape index: {}]
  %s4 = inlined_call_operand.vmem [shape: f32[32,128], index: 4, kind: output, shape index: {}]
  %s5 = sld [smem:[#allocation0]]
  $region26: #{graphconv_pny_forward.10} parent=0
    _
  %s7 = ssub.s32 1, %s5
  %s8 = scalar_select 0, %s7, %s5
  // Predicated region
  $region2: #{graphconv_pny_forward.10} parent=0 // pred_check
    _
  $region3: #{graphconv_pny_forward.10} parent=0 // pred_check_branch
    %10 = sbr.rel (0) target = $region5
  $region4: #{graphconv_pny_forward.10} parent=0 // pred_region
    _
  $region5: #{graphconv_pny_forward.10} parent=0 // pred_fallthru
    _
  // Predicated region
  $region6: #{graphconv_pny_forward.10} parent=0 // pred_check
    _
  $region7: #{graphconv_pny_forward.10} parent=0 // pred_check_branch
    %12 = sbr.rel (0) target = $region9
  $region8: #{graphconv_pny_forward.10} parent=0 // pred_region
    _
  $region9: #{graphconv_pny_forward.10} parent=0 // pred_fallthru
    _
  // Predicated region
  $region10: #{graphconv_pny_forward.10} parent=0 // pred_check
    _
  $region11: #{graphconv_pny_forward.10} parent=0 // pred_check_branch
    %14 = sbr.rel (0) target = $region13
  $region12: #{graphconv_pny_forward.10} parent=0 // pred_region
    _
  $region13: #{graphconv_pny_forward.10} parent=0 // pred_fallthru
    _
  // Predicated region
  $region14: #{graphconv_pny_forward.10} parent=0 // pred_check
    _
  $region15: #{graphconv_pny_forward.10} parent=0 // pred_check_branch
    %16 = sbr.rel (0) target = $region17
  $region16: #{graphconv_pny_forward.10} parent=0 // pred_region
    _
  $region17: #{graphconv_pny_forward.10} parent=0 // pred_fallthru
    _
  %v17 = vld [vmem:[%s0] sm:$0xff]
  %v18 = vld [vmem:[%s0 + $0x8] sm:$0xff]
  %v19 = vld [vmem:[%s0 + $0x10] sm:$0xff]
  %v20 = vld [vmem:[%s0 + $0x18] sm:$0xff]
  %v21 = vld [vmem:[%s2] sm:$0x1]
  %v23 = vperm.slane %v21, 0
  %v25 = vsub.f32 %v17, %v23
  %v26 = vsub.f32 %v18, %v23
  %v27 = vsub.f32 %v19, %v23
  %v28 = vsub.f32 %v20, %v23
  %v29 = vld [vmem:[%s1] sm:$0xff]
  %v30 = vld [vmem:[%s1 + $0x8] sm:$0xff]
  %v31 = vld [vmem:[%s1 + $0x10] sm:$0xff]
  %v32 = vld [vmem:[%s1 + $0x18] sm:$0xff]
  %v33 = vld [vmem:[%s1 + $0x20] sm:$0xff]
  %v34 = vld [vmem:[%s1 + $0x28] sm:$0xff]
  %v35 = vld [vmem:[%s1 + $0x30] sm:$0xff]
  %v36 = vld [vmem:[%s1 + $0x38] sm:$0xff]
  %v37 = vld [vmem:[%s1 + $0x40] sm:$0xff]
  %v38 = vld [vmem:[%s1 + $0x48] sm:$0xff]
  %v39 = vld [vmem:[%s1 + $0x50] sm:$0xff]
  %v40 = vld [vmem:[%s1 + $0x58] sm:$0xff]
  %v41 = vld [vmem:[%s1 + $0x60] sm:$0xff]
  %v42 = vld [vmem:[%s1 + $0x68] sm:$0xff]
  %v43 = vld [vmem:[%s1 + $0x70] sm:$0xff]
  %v44 = vld [vmem:[%s1 + $0x78] sm:$0xff]
  %45 = vmatpush.msra.mxu0 %v44
  %46 = vmatpush.msra.mxu0 %v43
  %47 = vmatpush.msra.mxu0 %v42
  %48 = vmatpush.msra.mxu0 %v41
  %49 = vmatpush.msra.mxu0 %v40
  %50 = vmatpush.msra.mxu0 %v39
  %51 = vmatpush.msra.mxu0 %v38
  %52 = vmatpush.msra.mxu0 %v37
  %53 = vmatpush.msra.mxu0 %v36
  %54 = vmatpush.msra.mxu0 %v35
  %55 = vmatpush.msra.mxu0 %v34
  %56 = vmatpush.msra.mxu0 %v33
  %57 = vmatpush.msra.mxu0 %v32
  %58 = vmatpush.msra.mxu0 %v31
  %59 = vmatpush.msra.mxu0 %v30
  %60 = vmatpush.msra.mxu0 %v29
  %61 = vmatmul.f32.gmra.mxu0 %v25
  %v62 = vpop.f32.mrf.mxu0
  %v63 = vadd.f32 %v23, %v62
  %64 = vmatmul.f32.gmra.mxu0 %v26
  %v65 = vpop.f32.mrf.mxu0
  %v66 = vadd.f32 %v23, %v65
  %67 = vmatmul.f32.gmra.mxu0 %v27
  %v68 = vpop.f32.mrf.mxu0
  %v69 = vadd.f32 %v23, %v68
  %70 = vmatmul.f32.gmra.mxu0 %v28
  %v71 = vpop.f32.mrf.mxu0
  %v72 = vadd.f32 %v23, %v71
  %73 = vdwg.mxu0
  %v74 = vld [vmem:[%s3] sm:$0xff]
  %v75 = vld [vmem:[%s3 + $0x8] sm:$0xff]
  %v76 = vld [vmem:[%s3 + $0x10] sm:$0xff]
  %v77 = vld [vmem:[%s3 + $0x18] sm:$0xff]
  %v78 = vsub.f32 %v63, %v17
  %v79 = vsub.f32 %v66, %v18
  %v80 = vsub.f32 %v69, %v19
  %v81 = vsub.f32 %v72, %v20
  %83 = vset.pattern.permute.xlu0 0
  %84 = vperm.xlu0 %83, %v74
  %v85 = vpop.permute.xlu0 %84
  %88 = vset.pattern.permute.xlu0 0
  %89 = vperm.xlu0 %88, %v75
  %v90 = vpop.permute.xlu0 %89
  %93 = vset.pattern.permute.xlu0 0
  %94 = vperm.xlu0 %93, %v76
  %v95 = vpop.permute.xlu0 %94
  %98 = vset.pattern.permute.xlu0 0
  %99 = vperm.xlu0 %98, %v77
  %v100 = vpop.permute.xlu0 %99
  %v102 = vmul.f32 %v85, %v78
  %v103 = vmul.f32 %v90, %v79
  %v104 = vmul.f32 %v95, %v80
  %v105 = vmul.f32 %v100, %v81
  %v106 = vadd.f32 %v17, %v102
  %v107 = vadd.f32 %v18, %v103
  %v108 = vadd.f32 %v19, %v104
  %v109 = vadd.f32 %v20, %v105
  %s110 = scalar_lea.vmem %s2, 1
  %v111 = vld [vmem:[%s110] sm:$0x1]
  %v113 = vperm.slane %v111, 0
  %v115 = vsub.f32 %v17, %v113
  %v116 = vsub.f32 %v18, %v113
  %v117 = vsub.f32 %v19, %v113
  %v118 = vsub.f32 %v20, %v113
  %s119 = scalar_lea.vmem %s1, 128
  %v120 = vld [vmem:[%s119] sm:$0xff]
  %v121 = vld [vmem:[%s119 + $0x8] sm:$0xff]
  %v122 = vld [vmem:[%s119 + $0x10] sm:$0xff]
  %v123 = vld [vmem:[%s119 + $0x18] sm:$0xff]
  %v124 = vld [vmem:[%s119 + $0x20] sm:$0xff]
  %v125 = vld [vmem:[%s119 + $0x28] sm:$0xff]
  %v126 = vld [vmem:[%s119 + $0x30] sm:$0xff]
  %v127 = vld [vmem:[%s119 + $0x38] sm:$0xff]
  %v128 = vld [vmem:[%s119 + $0x40] sm:$0xff]
  %v129 = vld [vmem:[%s119 + $0x48] sm:$0xff]
  %v130 = vld [vmem:[%s119 + $0x50] sm:$0xff]
  %v131 = vld [vmem:[%s119 + $0x58] sm:$0xff]
  %v132 = vld [vmem:[%s119 + $0x60] sm:$0xff]
  %v133 = vld [vmem:[%s119 + $0x68] sm:$0xff]
  %v134 = vld [vmem:[%s119 + $0x70] sm:$0xff]
  %v135 = vld [vmem:[%s119 + $0x78] sm:$0xff]
  %136 = vmatpush.msra.mxu0 %v135
  %137 = vmatpush.msra.mxu0 %v134
  %138 = vmatpush.msra.mxu0 %v133
  %139 = vmatpush.msra.mxu0 %v132
  %140 = vmatpush.msra.mxu0 %v131
  %141 = vmatpush.msra.mxu0 %v130
  %142 = vmatpush.msra.mxu0 %v129
  %143 = vmatpush.msra.mxu0 %v128
  %144 = vmatpush.msra.mxu0 %v127
  %145 = vmatpush.msra.mxu0 %v126
  %146 = vmatpush.msra.mxu0 %v125
  %147 = vmatpush.msra.mxu0 %v124
  %148 = vmatpush.msra.mxu0 %v123
  %149 = vmatpush.msra.mxu0 %v122
  %150 = vmatpush.msra.mxu0 %v121
  %151 = vmatpush.msra.mxu0 %v120
  %152 = vmatmul.f32.gmra.mxu0 %v115
  %v153 = vpop.f32.mrf.mxu0
  %v154 = vadd.f32 %v113, %v153
  %155 = vmatmul.f32.gmra.mxu0 %v116
  %v156 = vpop.f32.mrf.mxu0
  %v157 = vadd.f32 %v113, %v156
  %158 = vmatmul.f32.gmra.mxu0 %v117
  %v159 = vpop.f32.mrf.mxu0
  %v160 = vadd.f32 %v113, %v159
  %161 = vmatmul.f32.gmra.mxu0 %v118
  %v162 = vpop.f32.mrf.mxu0
  %v163 = vadd.f32 %v113, %v162
  %164 = vdwg.mxu0
  %s165 = scalar_lea.vmem %s3, 32
  %v166 = vld [vmem:[%s165] sm:$0xff]
  %v167 = vld [vmem:[%s165 + $0x8] sm:$0xff]
  %v168 = vld [vmem:[%s165 + $0x10] sm:$0xff]
  %v169 = vld [vmem:[%s165 + $0x18] sm:$0xff]
  %v170 = vsub.f32 %v154, %v17
  %v171 = vsub.f32 %v157, %v18
  %v172 = vsub.f32 %v160, %v19
  %v173 = vsub.f32 %v163, %v20
  %175 = vset.pattern.permute.xlu0 0
  %176 = vperm.xlu0 %175, %v166
  %v177 = vpop.permute.xlu0 %176
  %180 = vset.pattern.permute.xlu0 0
  %181 = vperm.xlu0 %180, %v167
  %v182 = vpop.permute.xlu0 %181
  %185 = vset.pattern.permute.xlu0 0
  %186 = vperm.xlu0 %185, %v168
  %v187 = vpop.permute.xlu0 %186
  %190 = vset.pattern.permute.xlu0 0
  %191 = vperm.xlu0 %190, %v169
  %v192 = vpop.permute.xlu0 %191
  %v194 = vmul.f32 %v177, %v170
  %v195 = vmul.f32 %v182, %v171
  %v196 = vmul.f32 %v187, %v172
  %v197 = vmul.f32 %v192, %v173
  %v198 = vadd.f32 %v106, %v194
  %v199 = vadd.f32 %v107, %v195
  %v200 = vadd.f32 %v108, %v196
  %v201 = vadd.f32 %v109, %v197
  %s202 = scalar_lea.vmem %s2, 2
  %v203 = vld [vmem:[%s202] sm:$0x1]
  %v205 = vperm.slane %v203, 0
  %v207 = vsub.f32 %v17, %v205
  %v208 = vsub.f32 %v18, %v205
  %v209 = vsub.f32 %v19, %v205
  %v210 = vsub.f32 %v20, %v205
  %s211 = scalar_lea.vmem %s1, 256
  %v212 = vld [vmem:[%s211] sm:$0xff]
  %v213 = vld [vmem:[%s211 + $0x8] sm:$0xff]
  %v214 = vld [vmem:[%s211 + $0x10] sm:$0xff]
  %v215 = vld [vmem:[%s211 + $0x18] sm:$0xff]
  %v216 = vld [vmem:[%s211 + $0x20] sm:$0xff]
  %v217 = vld [vmem:[%s211 + $0x28] sm:$0xff]
  %v218 = vld [vmem:[%s211 + $0x30] sm:$0xff]
  %v219 = vld [vmem:[%s211 + $0x38] sm:$0xff]
  %v220 = vld [vmem:[%s211 + $0x40] sm:$0xff]
  %v221 = vld [vmem:[%s211 + $0x48] sm:$0xff]
  %v222 = vld [vmem:[%s211 + $0x50] sm:$0xff]
  %v223 = vld [vmem:[%s211 + $0x58] sm:$0xff]
  %v224 = vld [vmem:[%s211 + $0x60] sm:$0xff]
  %v225 = vld [vmem:[%s211 + $0x68] sm:$0xff]
  %v226 = vld [vmem:[%s211 + $0x70] sm:$0xff]
  %v227 = vld [vmem:[%s211 + $0x78] sm:$0xff]
  %228 = vmatpush.msra.mxu0 %v227
  %229 = vmatpush.msra.mxu0 %v226
  %230 = vmatpush.msra.mxu0 %v225
  %231 = vmatpush.msra.mxu0 %v224
  %232 = vmatpush.msra.mxu0 %v223
  %233 = vmatpush.msra.mxu0 %v222
  %234 = vmatpush.msra.mxu0 %v221
  %235 = vmatpush.msra.mxu0 %v220
  %236 = vmatpush.msra.mxu0 %v219
  %237 = vmatpush.msra.mxu0 %v218
  %238 = vmatpush.msra.mxu0 %v217
  %239 = vmatpush.msra.mxu0 %v216
  %240 = vmatpush.msra.mxu0 %v215
  %241 = vmatpush.msra.mxu0 %v214
  %242 = vmatpush.msra.mxu0 %v213
  %243 = vmatpush.msra.mxu0 %v212
  %244 = vmatmul.f32.gmra.mxu0 %v207
  %v245 = vpop.f32.mrf.mxu0
  %v246 = vadd.f32 %v205, %v245
  %247 = vmatmul.f32.gmra.mxu0 %v208
  %v248 = vpop.f32.mrf.mxu0
  %v249 = vadd.f32 %v205, %v248
  %250 = vmatmul.f32.gmra.mxu0 %v209
  %v251 = vpop.f32.mrf.mxu0
  %v252 = vadd.f32 %v205, %v251
  %253 = vmatmul.f32.gmra.mxu0 %v210
  %v254 = vpop.f32.mrf.mxu0
  %v255 = vadd.f32 %v205, %v254
  %256 = vdwg.mxu0
  %s257 = scalar_lea.vmem %s3, 64
  %v258 = vld [vmem:[%s257] sm:$0xff]
  %v259 = vld [vmem:[%s257 + $0x8] sm:$0xff]
  %v260 = vld [vmem:[%s257 + $0x10] sm:$0xff]
  %v261 = vld [vmem:[%s257 + $0x18] sm:$0xff]
  %v262 = vsub.f32 %v246, %v17
  %v263 = vsub.f32 %v249, %v18
  %v264 = vsub.f32 %v252, %v19
  %v265 = vsub.f32 %v255, %v20
  %267 = vset.pattern.permute.xlu0 0
  %268 = vperm.xlu0 %267, %v258
  %v269 = vpop.permute.xlu0 %268
  %272 = vset.pattern.permute.xlu0 0
  %273 = vperm.xlu0 %272, %v259
  %v274 = vpop.permute.xlu0 %273
  %277 = vset.pattern.permute.xlu0 0
  %278 = vperm.xlu0 %277, %v260
  %v279 = vpop.permute.xlu0 %278
  %282 = vset.pattern.permute.xlu0 0
  %283 = vperm.xlu0 %282, %v261
  %v284 = vpop.permute.xlu0 %283
  %v286 = vmul.f32 %v269, %v262
  %v287 = vmul.f32 %v274, %v263
  %v288 = vmul.f32 %v279, %v264
  %v289 = vmul.f32 %v284, %v265
  %v290 = vadd.f32 %v198, %v286
  %v291 = vadd.f32 %v199, %v287
  %v292 = vadd.f32 %v200, %v288
  %v293 = vadd.f32 %v201, %v289
  %s294 = scalar_lea.vmem %s2, 3
  %v295 = vld [vmem:[%s294] sm:$0x1]
  %v297 = vperm.slane %v295, 0
  %v299 = vsub.f32 %v17, %v297
  %v300 = vsub.f32 %v18, %v297
  %v301 = vsub.f32 %v19, %v297
  %v302 = vsub.f32 %v20, %v297
  %s303 = scalar_lea.vmem %s1, 384
  %v304 = vld [vmem:[%s303] sm:$0xff]
  %v305 = vld [vmem:[%s303 + $0x8] sm:$0xff]
  %v306 = vld [vmem:[%s303 + $0x10] sm:$0xff]
  %v307 = vld [vmem:[%s303 + $0x18] sm:$0xff]
  %v308 = vld [vmem:[%s303 + $0x20] sm:$0xff]
  %v309 = vld [vmem:[%s303 + $0x28] sm:$0xff]
  %v310 = vld [vmem:[%s303 + $0x30] sm:$0xff]
  %v311 = vld [vmem:[%s303 + $0x38] sm:$0xff]
  %v312 = vld [vmem:[%s303 + $0x40] sm:$0xff]
  %v313 = vld [vmem:[%s303 + $0x48] sm:$0xff]
  %v314 = vld [vmem:[%s303 + $0x50] sm:$0xff]
  %v315 = vld [vmem:[%s303 + $0x58] sm:$0xff]
  %v316 = vld [vmem:[%s303 + $0x60] sm:$0xff]
  %v317 = vld [vmem:[%s303 + $0x68] sm:$0xff]
  %v318 = vld [vmem:[%s303 + $0x70] sm:$0xff]
  %v319 = vld [vmem:[%s303 + $0x78] sm:$0xff]
  %320 = vmatpush.msra.mxu0 %v319
  %321 = vmatpush.msra.mxu0 %v318
  %322 = vmatpush.msra.mxu0 %v317
  %323 = vmatpush.msra.mxu0 %v316
  %324 = vmatpush.msra.mxu0 %v315
  %325 = vmatpush.msra.mxu0 %v314
  %326 = vmatpush.msra.mxu0 %v313
  %327 = vmatpush.msra.mxu0 %v312
  %328 = vmatpush.msra.mxu0 %v311
  %329 = vmatpush.msra.mxu0 %v310
  %330 = vmatpush.msra.mxu0 %v309
  %331 = vmatpush.msra.mxu0 %v308
  %332 = vmatpush.msra.mxu0 %v307
  %333 = vmatpush.msra.mxu0 %v306
  %334 = vmatpush.msra.mxu0 %v305
  %335 = vmatpush.msra.mxu0 %v304
  %336 = vmatmul.f32.gmra.mxu0 %v299
  %v337 = vpop.f32.mrf.mxu0
  %v338 = vadd.f32 %v297, %v337
  %339 = vmatmul.f32.gmra.mxu0 %v300
  %v340 = vpop.f32.mrf.mxu0
  %v341 = vadd.f32 %v297, %v340
  %342 = vmatmul.f32.gmra.mxu0 %v301
  %v343 = vpop.f32.mrf.mxu0
  %v344 = vadd.f32 %v297, %v343
  %345 = vmatmul.f32.gmra.mxu0 %v302
  %v346 = vpop.f32.mrf.mxu0
  %v347 = vadd.f32 %v297, %v346
  %348 = vdwg.mxu0
  %s349 = scalar_lea.vmem %s3, 96
  %v350 = vld [vmem:[%s349] sm:$0xff]
  %v351 = vld [vmem:[%s349 + $0x8] sm:$0xff]
  %v352 = vld [vmem:[%s349 + $0x10] sm:$0xff]
  %v353 = vld [vmem:[%s349 + $0x18] sm:$0xff]
  %v354 = vsub.f32 %v338, %v17
  %v355 = vsub.f32 %v341, %v18
  %v356 = vsub.f32 %v344, %v19
  %v357 = vsub.f32 %v347, %v20
  %359 = vset.pattern.permute.xlu0 0
  %360 = vperm.xlu0 %359, %v350
  %v361 = vpop.permute.xlu0 %360
  %364 = vset.pattern.permute.xlu0 0
  %365 = vperm.xlu0 %364, %v351
  %v366 = vpop.permute.xlu0 %365
  %369 = vset.pattern.permute.xlu0 0
  %370 = vperm.xlu0 %369, %v352
  %v371 = vpop.permute.xlu0 %370
  %374 = vset.pattern.permute.xlu0 0
  %375 = vperm.xlu0 %374, %v353
  %v376 = vpop.permute.xlu0 %375
  %v378 = vmul.f32 %v361, %v354
  %v379 = vmul.f32 %v366, %v355
  %v380 = vmul.f32 %v371, %v356
  %v381 = vmul.f32 %v376, %v357
  %v382 = vadd.f32 %v290, %v378
  %v383 = vadd.f32 %v291, %v379
  %v384 = vadd.f32 %v292, %v380
  %v385 = vadd.f32 %v293, %v381
  %386 = vst [vmem:[%s4] sm:$0xff] %v382
  %387 = vst [vmem:[%s4 + $0x8] sm:$0xff] %v383
  %388 = vst [vmem:[%s4 + $0x10] sm:$0xff] %v384
  %389 = vst [vmem:[%s4 + $0x18] sm:$0xff] %v385
  // Predicated region
  $region18: #{graphconv_pny_forward.10} parent=0 // pred_check
    _
  $region19: #{graphconv_pny_forward.10} parent=0 // pred_check_branch
    %391 = sbr.rel (0) target = $region21
  $region20: #{graphconv_pny_forward.10} parent=0 // pred_region
    _
  $region21: #{graphconv_pny_forward.10} parent=0 // pred_fallthru
    _
  // Predicated region
  $region22: #{graphconv_pny_forward.10} parent=0 // pred_check
    _
  $region23: #{graphconv_pny_forward.10} parent=0 // pred_check_branch
    %393 = sbr.rel (0) target = $region25
  $region24: #{graphconv_pny_forward.10} parent=0 // pred_region
    _
  $region25: #{graphconv_pny_forward.10} parent=0 // pred_fallthru
    _

</llo_original>
